<compile_context>
chip_gen: v7x
topology: tpu7x:2x2x1
jax: 0.10.0
libtpu: 0.0.40
codegen_flags: <defaults>
</compile_context>

<pallas_src>
import functools
import math

import jax
import jax.numpy as jnp
from jax.experimental import pallas as pl
from jax.experimental.pallas import tpu as pltpu

# ----------------------------- model config ---------------------------------
B = 2            # batch
C = 4            # image channels
H = W = 16       # image spatial
PATCH = 4        # patch size -> N = (16/4)^2 = 16 tokens
N_TOK = (H // PATCH) * (W // PATCH)
P_DIM = C * PATCH * PATCH      # 64 patch feature size
D_MODEL = 32
NH = 4
DH = D_MODEL // NH
D_FF = 64
VOCAB = 32
MAX_SEQ = 64
PAD_IDX = 0
T_TGT = 8
INIT_STD = 0.02
LN_EPS = 1e-5


# ------------------------- in-kernel helpers (values) ------------------------
def _ln(z, g, b, eps=LN_EPS):
    mean = jnp.mean(z, axis=-1, keepdims=True)
    var = jnp.mean((z - mean) ** 2, axis=-1, keepdims=True)
    return (z - mean) * jax.lax.rsqrt(var + eps) * g + b


def _matmul(x, w, b):
    return jnp.dot(x, w, preferred_element_type=jnp.float32) + b


def _softmax_rows(s):
    m = jnp.max(s, axis=-1, keepdims=True)
    p = jnp.exp(s - m)
    return p * pl.reciprocal(jnp.sum(p, axis=-1, keepdims=True), approx=True)


def _mha(q, k, v, n_batch, tq, tk):
    """All-head attention fully in VMEM values (no per-head grid, no transposes).

    q: [n_batch*tq, D_MODEL], k/v: [n_batch*tk, D_MODEL] -> [n_batch*tq, D_MODEL]
    """
    scale = 1.0 / math.sqrt(DH)
    out_rows = []
    for bi in range(n_batch):
        qb = q[bi * tq:(bi + 1) * tq]
        kb = k[bi * tk:(bi + 1) * tk]
        vb = v[bi * tk:(bi + 1) * tk]
        heads = []
        for h in range(NH):
            qh = qb[:, h * DH:(h + 1) * DH]
            kh = kb[:, h * DH:(h + 1) * DH]
            vh = vb[:, h * DH:(h + 1) * DH]
            s = jax.lax.dot_general(qh, kh, (((1,), (1,)), ((), ())),
                                    preferred_element_type=jnp.float32) * scale
            p = _softmax_rows(s)
            heads.append(jnp.dot(p, vh, preferred_element_type=jnp.float32))
        out_rows.append(jnp.concatenate(heads, axis=-1))
    return jnp.concatenate(out_rows, axis=0)


# ----------------------------- fused kernels ---------------------------------
def _encode_kernel(
    patch_ref, pw_ref, pb_ref, pos_ref,
    wqkv_ref, bqkv_ref, wo_ref, bo_ref,
    ln1g_ref, ln1b_ref,
    w1_ref, b1_ref, w2_ref, b2_ref,
    ln2g_ref, ln2b_ref,
    ng_ref, nb_ref,
    mem_ref,
    *, n_batch, n_tok,
):
    # patch projection (backbone) + learned position embedding (dropout = 0)
    x = _matmul(patch_ref[...], pw_ref[...], pb_ref[...]) + pos_ref[...]

    # --- encoder self-attention (fused QKV) ---
    qkv = _matmul(x, wqkv_ref[...], bqkv_ref[...])
    q = qkv[:, :D_MODEL]
    k = qkv[:, D_MODEL:2 * D_MODEL]
    v = qkv[:, 2 * D_MODEL:]
    attn = _mha(q, k, v, n_batch, n_tok, n_tok)
    o = _matmul(attn, wo_ref[...], bo_ref[...])
    x = _ln(x + o, ln1g_ref[...], ln1b_ref[...])

    # --- feed forward ---
    hdd = jnp.maximum(_matmul(x, w1_ref[...], b1_ref[...]), 0.0)
    y = _matmul(hdd, w2_ref[...], b2_ref[...])
    x = _ln(x + y, ln2g_ref[...], ln2b_ref[...])

    # --- final encoder norm (self.norm) ---
    mem_ref[...] = _ln(x, ng_ref[...], nb_ref[...]).astype(mem_ref.dtype)


def _decode_kernel(
    emb_ref, dpos_ref, mem_ref,
    sa_wqkv_ref, sa_bqkv_ref, sa_wo_ref, sa_bo_ref,
    ln1g_ref, ln1b_ref,
    ca_wq_ref, ca_bq_ref, ca_wkv_ref, ca_bkv_ref, ca_wo_ref, ca_bo_ref,
    ln2g_ref, ln2b_ref,
    w1_ref, b1_ref, w2_ref, b2_ref,
    ln3g_ref, ln3b_ref,
    gw_ref, gb_ref,
    out_ref,
    *, n_batch, n_mem,
):
    # TokenEmbedding scale + position embedding at input_pos (dropout = 0)
    x = emb_ref[...] * jnp.float32(math.sqrt(D_MODEL)) + dpos_ref[...]
    mem = mem_ref[...]

    # --- decoder self-attention over the single current token ---
    # TODO(synk): the reference decoder keeps a KV cache keyed by input_pos; with
    # only the current step present, softmax over one key is identically 1, so the
    # attention output equals the V projection (computed exactly below).
    qkv = _matmul(x, sa_wqkv_ref[...], sa_bqkv_ref[...])
    attn = qkv[:, 2 * D_MODEL:]
    o = _matmul(attn, sa_wo_ref[...], sa_bo_ref[...])
    x = _ln(x + o, ln1g_ref[...], ln1b_ref[...])

    # --- cross attention to encoder memory (fused K/V) ---
    q = _matmul(x, ca_wq_ref[...], ca_bq_ref[...])
    kv = _matmul(mem, ca_wkv_ref[...], ca_bkv_ref[...])
    k = kv[:, :D_MODEL]
    v = kv[:, D_MODEL:]
    attn = _mha(q, k, v, n_batch, 1, n_mem)
    o = _matmul(attn, ca_wo_ref[...], ca_bo_ref[...])
    x = _ln(x + o, ln2g_ref[...], ln2b_ref[...])

    # --- feed forward ---
    hdd = jnp.maximum(_matmul(x, w1_ref[...], b1_ref[...]), 0.0)
    y = _matmul(hdd, w2_ref[...], b2_ref[...])
    x = _ln(x + y, ln3g_ref[...], ln3b_ref[...])

    # --- generator ---
    out_ref[...] = _matmul(x, gw_ref[...], gb_ref[...]).astype(out_ref.dtype)


# ----------------------------- pallas_call glue -------------------------------
def _full_spec(arr):
    nd = arr.ndim
    return pl.BlockSpec(arr.shape, lambda i, n=nd: (0,) * n)


_COMPILER_PARAMS = pltpu.CompilerParams(dimension_semantics=("arbitrary",))


def encode(params, src):
    b, c, h, w = src.shape
    p = PATCH
    n = (h // p) * (w // p)
    # patchify (glue): NCHW -> [B*N, C*p*p]
    patches = src.reshape(b, c, h // p, p, w // p, p)
    patches = patches.transpose(0, 2, 4, 1, 3, 5).reshape(b * n, c * p * p)
    # position embedding broadcast over batch (glue; added inside the kernel)
    pos = jnp.broadcast_to(params["pos_embed"][:n][None], (b, n, D_MODEL))
    pos = pos.reshape(b * n, D_MODEL)
    e = params["enc"]
    args = (
        patches, params["patch_w"], params["patch_b"], pos,
        e["sa_wqkv"], e["sa_bqkv"], e["sa_wo"], e["sa_bo"],
        e["ln1_g"], e["ln1_b"],
        e["w1"], e["b1"], e["w2"], e["b2"],
        e["ln2_g"], e["ln2_b"],
        params["norm_g"], params["norm_b"],
    )
    return pl.pallas_call(
        functools.partial(_encode_kernel, n_batch=b, n_tok=n),
        out_shape=jax.ShapeDtypeStruct((b * n, D_MODEL), jnp.float32),
        grid=(1,),
        in_specs=[_full_spec(a) for a in args],
        out_specs=pl.BlockSpec((b * n, D_MODEL), lambda i: (0, 0)),
        compiler_params=_COMPILER_PARAMS,
    )(*args)                                   # memory: [B*N, D]


def decode_and_generate(params, memory, tgt, n_batch):
    n = memory.shape[0] // n_batch
    t = tgt.shape[1]
    # token-embedding gather for the last target token (glue)
    emb = jnp.take(params["tok_embed"], tgt[:, -1], axis=0)          # [B, D]
    # position row at input_pos = t-1 (static slice)
    dpos = jax.lax.slice(params["pos_embed"], (t - 1, 0), (t, D_MODEL))  # [1, D]
    d = params["dec"]
    args = (
        emb, dpos, memory,
        d["sa_wqkv"], d["sa_bqkv"], d["sa_wo"], d["sa_bo"],
        d["ln1_g"], d["ln1_b"],
        d["ca_wq"], d["ca_bq"], d["ca_wkv"], d["ca_bkv"], d["ca_wo"], d["ca_bo"],
        d["ln2_g"], d["ln2_b"],
        d["w1"], d["b1"], d["w2"], d["b2"],
        d["ln3_g"], d["ln3_b"],
        params["gen_w"], params["gen_b"],
    )
    logits = pl.pallas_call(
        functools.partial(_decode_kernel, n_batch=n_batch, n_mem=n),
        out_shape=jax.ShapeDtypeStruct((n_batch, VOCAB), jnp.float32),
        grid=(1,),
        in_specs=[_full_spec(a) for a in args],
        out_specs=pl.BlockSpec((n_batch, VOCAB), lambda i: (0, 0)),
        compiler_params=_COMPILER_PARAMS,
    )(*args)
    return logits.reshape(n_batch, 1, VOCAB)


def encoder_decoder_forward(params, src, tgt, tgt_mask, tgt_padding_mask):
    del tgt_mask, tgt_padding_mask   # unused by the reference decode()
    b = src.shape[0]
    memory = encode(params, src)                       # [B*N, D]
    return decode_and_generate(params, memory, tgt, b)  # [B, 1, VOCAB]


# ----------------------------- parameters -----------------------------------
def init_params(key):
    keys = iter(jax.random.split(key, 64))

    def nrm(shape):
        return (INIT_STD * jax.random.normal(next(keys), shape)).astype(jnp.float32)

    def zeros(shape):
        return jnp.zeros(shape, jnp.float32)

    def ones(shape):
        return jnp.ones(shape, jnp.float32)

    params = {
        # linear-projection backbone
        "patch_w": nrm((P_DIM, D_MODEL)), "patch_b": zeros((1, D_MODEL)),
        # shared learned position embedding
        "pos_embed": nrm((MAX_SEQ, D_MODEL)),
        # token embedding (padding_idx row zeroed)
        "tok_embed": nrm((VOCAB, D_MODEL)).at[PAD_IDX].set(0.0),
        # final encoder norm (self.norm)
        "norm_g": ones((1, D_MODEL)), "norm_b": zeros((1, D_MODEL)),
        # generator
        "gen_w": nrm((D_MODEL, VOCAB)), "gen_b": zeros((1, VOCAB)),
        # encoder layer (QKV fused)
        "enc": {
            "sa_wqkv": nrm((D_MODEL, 3 * D_MODEL)), "sa_bqkv": zeros((1, 3 * D_MODEL)),
            "sa_wo": nrm((D_MODEL, D_MODEL)), "sa_bo": zeros((1, D_MODEL)),
            "ln1_g": ones((1, D_MODEL)), "ln1_b": zeros((1, D_MODEL)),
            "w1": nrm((D_MODEL, D_FF)), "b1": zeros((1, D_FF)),
            "w2": nrm((D_FF, D_MODEL)), "b2": zeros((1, D_MODEL)),
            "ln2_g": ones((1, D_MODEL)), "ln2_b": zeros((1, D_MODEL)),
        },
        # decoder layer (self-attn QKV fused, cross-attn K/V fused)
        "dec": {
            "sa_wqkv": nrm((D_MODEL, 3 * D_MODEL)), "sa_bqkv": zeros((1, 3 * D_MODEL)),
            "sa_wo": nrm((D_MODEL, D_MODEL)), "sa_bo": zeros((1, D_MODEL)),
            "ln1_g": ones((1, D_MODEL)), "ln1_b": zeros((1, D_MODEL)),
            "ca_wq": nrm((D_MODEL, D_MODEL)), "ca_bq": zeros((1, D_MODEL)),
            "ca_wkv": nrm((D_MODEL, 2 * D_MODEL)), "ca_bkv": zeros((1, 2 * D_MODEL)),
            "ca_wo": nrm((D_MODEL, D_MODEL)), "ca_bo": zeros((1, D_MODEL)),
            "ln2_g": ones((1, D_MODEL)), "ln2_b": zeros((1, D_MODEL)),
            "w1": nrm((D_MODEL, D_FF)), "b1": zeros((1, D_FF)),
            "w2": nrm((D_FF, D_MODEL)), "b2": zeros((1, D_MODEL)),
            "ln3_g": ones((1, D_MODEL)), "ln3_b": zeros((1, D_MODEL)),
        },
    }
    return params


# ----------------------------- main ------------------------------------------
if __name__ == "__main__":
    root = jax.random.PRNGKey(0)
    k_param, k_src, k_tgt = jax.random.split(root, 3)

    params = init_params(k_param)
    src = jax.random.normal(k_src, (B, C, H, W), jnp.float32)          # NCHW
    tgt = jax.random.randint(k_tgt, (B, T_TGT), 1, VOCAB).astype(jnp.int32)
    tgt_mask = jnp.zeros((T_TGT, T_TGT), jnp.float32)                  # unused
    tgt_padding_mask = jnp.zeros((B, T_TGT), jnp.bool_)                # unused

    fwd = jax.jit(encoder_decoder_forward)
    out = jax.block_until_ready(fwd(params, src, tgt, tgt_mask, tgt_padding_mask))

    assert out.shape == (B, 1, VOCAB), out.shape
    assert bool(jnp.all(jnp.isfinite(out)))
    print("KERNEL_OK")
</pallas_src>

<mosaic_0001>
module attributes {stable_mosaic.version = 11 : i64} {
  func.func @_encode_kernel(%arg0: i32, %arg1: memref<32x64xf32, #tpu.memory_space<vmem>>, %arg2: memref<64x32xf32, #tpu.memory_space<vmem>>, %arg3: memref<1x32xf32, #tpu.memory_space<vmem>>, %arg4: memref<32x32xf32, #tpu.memory_space<vmem>>, %arg5: memref<32x96xf32, #tpu.memory_space<vmem>>, %arg6: memref<1x96xf32, #tpu.memory_space<vmem>>, %arg7: memref<32x32xf32, #tpu.memory_space<vmem>>, %arg8: memref<1x32xf32, #tpu.memory_space<vmem>>, %arg9: memref<1x32xf32, #tpu.memory_space<vmem>>, %arg10: memref<1x32xf32, #tpu.memory_space<vmem>>, %arg11: memref<32x64xf32, #tpu.memory_space<vmem>>, %arg12: memref<1x64xf32, #tpu.memory_space<vmem>>, %arg13: memref<64x32xf32, #tpu.memory_space<vmem>>, %arg14: memref<1x32xf32, #tpu.memory_space<vmem>>, %arg15: memref<1x32xf32, #tpu.memory_space<vmem>>, %arg16: memref<1x32xf32, #tpu.memory_space<vmem>>, %arg17: memref<1x32xf32, #tpu.memory_space<vmem>>, %arg18: memref<1x32xf32, #tpu.memory_space<vmem>>, %arg19: memref<32x32xf32, #tpu.memory_space<vmem>>) attributes {dimension_semantics = [#tpu.dimension_semantics<arbitrary>], iteration_bounds = array<i64: 1>, scalar_prefetch = 0 : i64, scratch_operands = 0 : i64, tpu.core_type = #tpu.core_type<tc>, window_params = [{pipeline_mode = #tpu.pipeline_mode<synchronous>, transform_indices = @transform_0, window_bounds = array<i64: 32, 64>}, {pipeline_mode = #tpu.pipeline_mode<synchronous>, transform_indices = @transform_1, window_bounds = array<i64: 64, 32>}, {pipeline_mode = #tpu.pipeline_mode<synchronous>, transform_indices = @transform_2, window_bounds = array<i64: 1, 32>}, {pipeline_mode = #tpu.pipeline_mode<synchronous>, transform_indices = @transform_3, window_bounds = array<i64: 32, 32>}, {pipeline_mode = #tpu.pipeline_mode<synchronous>, transform_indices = @transform_4, window_bounds = array<i64: 32, 96>}, {pipeline_mode = #tpu.pipeline_mode<synchronous>, transform_indices = @transform_5, window_bounds = array<i64: 1, 96>}, {pipeline_mode = #tpu.pipeline_mode<synchronous>, transform_indices = @transform_6, window_bounds = array<i64: 32, 32>}, {pipeline_mode = #tpu.pipeline_mode<synchronous>, transform_indices = @transform_7, window_bounds = array<i64: 1, 32>}, {pipeline_mode = #tpu.pipeline_mode<synchronous>, transform_indices = @transform_8, window_bounds = array<i64: 1, 32>}, {pipeline_mode = #tpu.pipeline_mode<synchronous>, transform_indices = @transform_9, window_bounds = array<i64: 1, 32>}, {pipeline_mode = #tpu.pipeline_mode<synchronous>, transform_indices = @transform_10, window_bounds = array<i64: 32, 64>}, {pipeline_mode = #tpu.pipeline_mode<synchronous>, transform_indices = @transform_11, window_bounds = array<i64: 1, 64>}, {pipeline_mode = #tpu.pipeline_mode<synchronous>, transform_indices = @transform_12, window_bounds = array<i64: 64, 32>}, {pipeline_mode = #tpu.pipeline_mode<synchronous>, transform_indices = @transform_13, window_bounds = array<i64: 1, 32>}, {pipeline_mode = #tpu.pipeline_mode<synchronous>, transform_indices = @transform_14, window_bounds = array<i64: 1, 32>}, {pipeline_mode = #tpu.pipeline_mode<synchronous>, transform_indices = @transform_15, window_bounds = array<i64: 1, 32>}, {pipeline_mode = #tpu.pipeline_mode<synchronous>, transform_indices = @transform_16, window_bounds = array<i64: 1, 32>}, {pipeline_mode = #tpu.pipeline_mode<synchronous>, transform_indices = @transform_17, window_bounds = array<i64: 1, 32>}, {pipeline_mode = #tpu.pipeline_mode<synchronous>, transform_indices = @transform_18, window_bounds = array<i64: 32, 32>}]} {
    %c0 = arith.constant 0 : index
    %c0_0 = arith.constant 0 : index
    %0 = vector.load %arg1[%c0, %c0_0] : memref<32x64xf32, #tpu.memory_space<vmem>>, vector<32x64xf32>
    %c0_1 = arith.constant 0 : index
    %c0_2 = arith.constant 0 : index
    %1 = vector.load %arg2[%c0_1, %c0_2] : memref<64x32xf32, #tpu.memory_space<vmem>>, vector<64x32xf32>
    %c0_3 = arith.constant 0 : index
    %c0_4 = arith.constant 0 : index
    %2 = vector.load %arg3[%c0_3, %c0_4] : memref<1x32xf32, #tpu.memory_space<vmem>>, vector<1x32xf32>
    %cst = arith.constant dense<0.000000e+00> : vector<32x32xf32>
    %3 = tpu.matmul %0, %1, %cst {dimension_numbers = #tpu.dot_dimension_numbers<[1], [0], [0], [1], [0, 0, 1, 1], [], []>} : vector<32x64xf32>, vector<64x32xf32>, vector<32x32xf32> -> vector<32x32xf32>
    %4 = vector.broadcast %2 : vector<1x32xf32> to vector<32x32xf32>
    %5 = arith.addf %3, %4 : vector<32x32xf32>
    %c0_5 = arith.constant 0 : index
    %c0_6 = arith.constant 0 : index
    %6 = vector.load %arg4[%c0_5, %c0_6] : memref<32x32xf32, #tpu.memory_space<vmem>>, vector<32x32xf32>
    %7 = arith.addf %5, %6 : vector<32x32xf32>
    %c0_7 = arith.constant 0 : index
    %c0_8 = arith.constant 0 : index
    %8 = vector.load %arg5[%c0_7, %c0_8] : memref<32x96xf32, #tpu.memory_space<vmem>>, vector<32x96xf32>
    %c0_9 = arith.constant 0 : index
    %c0_10 = arith.constant 0 : index
    %9 = vector.load %arg6[%c0_9, %c0_10] : memref<1x96xf32, #tpu.memory_space<vmem>>, vector<1x96xf32>
    %cst_11 = arith.constant dense<0.000000e+00> : vector<32x96xf32>
    %10 = tpu.matmul %7, %8, %cst_11 {dimension_numbers = #tpu.dot_dimension_numbers<[1], [0], [0], [1], [0, 0, 1, 1], [], []>} : vector<32x32xf32>, vector<32x96xf32>, vector<32x96xf32> -> vector<32x96xf32>
    %11 = vector.broadcast %9 : vector<1x96xf32> to vector<32x96xf32>
    %12 = arith.addf %10, %11 : vector<32x96xf32>
    %13 = vector.extract_strided_slice %12 {offsets = [0, 0], sizes = [32, 32], strides = [1, 1]} : vector<32x96xf32> to vector<32x32xf32>
    %14 = vector.extract_strided_slice %12 {offsets = [0, 32], sizes = [32, 32], strides = [1, 1]} : vector<32x96xf32> to vector<32x32xf32>
    %15 = vector.extract_strided_slice %12 {offsets = [0, 64], sizes = [32, 32], strides = [1, 1]} : vector<32x96xf32> to vector<32x32xf32>
    %16 = vector.extract_strided_slice %13 {offsets = [0, 0], sizes = [16, 32], strides = [1, 1]} : vector<32x32xf32> to vector<16x32xf32>
    %17 = vector.extract_strided_slice %14 {offsets = [0, 0], sizes = [16, 32], strides = [1, 1]} : vector<32x32xf32> to vector<16x32xf32>
    %18 = vector.extract_strided_slice %15 {offsets = [0, 0], sizes = [16, 32], strides = [1, 1]} : vector<32x32xf32> to vector<16x32xf32>
    %19 = vector.extract_strided_slice %16 {offsets = [0, 0], sizes = [16, 8], strides = [1, 1]} : vector<16x32xf32> to vector<16x8xf32>
    %20 = vector.extract_strided_slice %17 {offsets = [0, 0], sizes = [16, 8], strides = [1, 1]} : vector<16x32xf32> to vector<16x8xf32>
    %21 = vector.extract_strided_slice %18 {offsets = [0, 0], sizes = [16, 8], strides = [1, 1]} : vector<16x32xf32> to vector<16x8xf32>
    %cst_12 = arith.constant dense<0.000000e+00> : vector<16x16xf32>
    %22 = tpu.matmul %19, %20, %cst_12 {dimension_numbers = #tpu.dot_dimension_numbers<[1], [1], [0], [0], [0, 0, 1, 0], [], []>} : vector<16x8xf32>, vector<16x8xf32>, vector<16x16xf32> -> vector<16x16xf32>
    %cst_13 = arith.constant 0.353553385 : f32
    %23 = vector.broadcast %cst_13 : f32 to vector<16x16xf32>
    %24 = arith.mulf %22, %23 : vector<16x16xf32>
    %cst_14 = arith.constant dense<0xFF800000> : vector<16xf32>
    %25 = vector.multi_reduction <maximumf>, %24, %cst_14 [1] : vector<16x16xf32> to vector<16xf32>
    %26 = vector.shape_cast %25 : vector<16xf32> to vector<16x1xf32>
    %27 = vector.broadcast %26 : vector<16x1xf32> to vector<16x16xf32>
    %28 = arith.subf %24, %27 : vector<16x16xf32>
    %29 = math.exp %28 : vector<16x16xf32>
    %cst_15 = arith.constant dense<0.000000e+00> : vector<16xf32>
    %30 = vector.multi_reduction <add>, %29, %cst_15 [1] : vector<16x16xf32> to vector<16xf32>
    %31 = vector.shape_cast %30 : vector<16xf32> to vector<16x1xf32>
    %32 = tpu.reciprocal %31 {approx = true} : vector<16x1xf32> -> vector<16x1xf32>
    %33 = vector.broadcast %32 : vector<16x1xf32> to vector<16x16xf32>
    %34 = arith.mulf %29, %33 : vector<16x16xf32>
    %cst_16 = arith.constant dense<0.000000e+00> : vector<16x8xf32>
    %35 = tpu.matmul %34, %21, %cst_16 {dimension_numbers = #tpu.dot_dimension_numbers<[1], [0], [0], [1], [0, 0, 1, 1], [], []>} : vector<16x16xf32>, vector<16x8xf32>, vector<16x8xf32> -> vector<16x8xf32>
    %36 = vector.extract_strided_slice %16 {offsets = [0, 8], sizes = [16, 8], strides = [1, 1]} : vector<16x32xf32> to vector<16x8xf32>
    %37 = vector.extract_strided_slice %17 {offsets = [0, 8], sizes = [16, 8], strides = [1, 1]} : vector<16x32xf32> to vector<16x8xf32>
    %38 = vector.extract_strided_slice %18 {offsets = [0, 8], sizes = [16, 8], strides = [1, 1]} : vector<16x32xf32> to vector<16x8xf32>
    %cst_17 = arith.constant dense<0.000000e+00> : vector<16x16xf32>
    %39 = tpu.matmul %36, %37, %cst_17 {dimension_numbers = #tpu.dot_dimension_numbers<[1], [1], [0], [0], [0, 0, 1, 0], [], []>} : vector<16x8xf32>, vector<16x8xf32>, vector<16x16xf32> -> vector<16x16xf32>
    %cst_18 = arith.constant 0.353553385 : f32
    %40 = vector.broadcast %cst_18 : f32 to vector<16x16xf32>
    %41 = arith.mulf %39, %40 : vector<16x16xf32>
    %cst_19 = arith.constant dense<0xFF800000> : vector<16xf32>
    %42 = vector.multi_reduction <maximumf>, %41, %cst_19 [1] : vector<16x16xf32> to vector<16xf32>
    %43 = vector.shape_cast %42 : vector<16xf32> to vector<16x1xf32>
    %44 = vector.broadcast %43 : vector<16x1xf32> to vector<16x16xf32>
    %45 = arith.subf %41, %44 : vector<16x16xf32>
    %46 = math.exp %45 : vector<16x16xf32>
    %cst_20 = arith.constant dense<0.000000e+00> : vector<16xf32>
    %47 = vector.multi_reduction <add>, %46, %cst_20 [1] : vector<16x16xf32> to vector<16xf32>
    %48 = vector.shape_cast %47 : vector<16xf32> to vector<16x1xf32>
    %49 = tpu.reciprocal %48 {approx = true} : vector<16x1xf32> -> vector<16x1xf32>
    %50 = vector.broadcast %49 : vector<16x1xf32> to vector<16x16xf32>
    %51 = arith.mulf %46, %50 : vector<16x16xf32>
    %cst_21 = arith.constant dense<0.000000e+00> : vector<16x8xf32>
    %52 = tpu.matmul %51, %38, %cst_21 {dimension_numbers = #tpu.dot_dimension_numbers<[1], [0], [0], [1], [0, 0, 1, 1], [], []>} : vector<16x16xf32>, vector<16x8xf32>, vector<16x8xf32> -> vector<16x8xf32>
    %53 = vector.extract_strided_slice %16 {offsets = [0, 16], sizes = [16, 8], strides = [1, 1]} : vector<16x32xf32> to vector<16x8xf32>
    %54 = vector.extract_strided_slice %17 {offsets = [0, 16], sizes = [16, 8], strides = [1, 1]} : vector<16x32xf32> to vector<16x8xf32>
    %55 = vector.extract_strided_slice %18 {offsets = [0, 16], sizes = [16, 8], strides = [1, 1]} : vector<16x32xf32> to vector<16x8xf32>
    %cst_22 = arith.constant dense<0.000000e+00> : vector<16x16xf32>
    %56 = tpu.matmul %53, %54, %cst_22 {dimension_numbers = #tpu.dot_dimension_numbers<[1], [1], [0], [0], [0, 0, 1, 0], [], []>} : vector<16x8xf32>, vector<16x8xf32>, vector<16x16xf32> -> vector<16x16xf32>
    %cst_23 = arith.constant 0.353553385 : f32
    %57 = vector.broadcast %cst_23 : f32 to vector<16x16xf32>
    %58 = arith.mulf %56, %57 : vector<16x16xf32>
    %cst_24 = arith.constant dense<0xFF800000> : vector<16xf32>
    %59 = vector.multi_reduction <maximumf>, %58, %cst_24 [1] : vector<16x16xf32> to vector<16xf32>
    %60 = vector.shape_cast %59 : vector<16xf32> to vector<16x1xf32>
    %61 = vector.broadcast %60 : vector<16x1xf32> to vector<16x16xf32>
    %62 = arith.subf %58, %61 : vector<16x16xf32>
    %63 = math.exp %62 : vector<16x16xf32>
    %cst_25 = arith.constant dense<0.000000e+00> : vector<16xf32>
    %64 = vector.multi_reduction <add>, %63, %cst_25 [1] : vector<16x16xf32> to vector<16xf32>
    %65 = vector.shape_cast %64 : vector<16xf32> to vector<16x1xf32>
    %66 = tpu.reciprocal %65 {approx = true} : vector<16x1xf32> -> vector<16x1xf32>
    %67 = vector.broadcast %66 : vector<16x1xf32> to vector<16x16xf32>
    %68 = arith.mulf %63, %67 : vector<16x16xf32>
    %cst_26 = arith.constant dense<0.000000e+00> : vector<16x8xf32>
    %69 = tpu.matmul %68, %55, %cst_26 {dimension_numbers = #tpu.dot_dimension_numbers<[1], [0], [0], [1], [0, 0, 1, 1], [], []>} : vector<16x16xf32>, vector<16x8xf32>, vector<16x8xf32> -> vector<16x8xf32>
    %70 = vector.extract_strided_slice %16 {offsets = [0, 24], sizes = [16, 8], strides = [1, 1]} : vector<16x32xf32> to vector<16x8xf32>
    %71 = vector.extract_strided_slice %17 {offsets = [0, 24], sizes = [16, 8], strides = [1, 1]} : vector<16x32xf32> to vector<16x8xf32>
    %72 = vector.extract_strided_slice %18 {offsets = [0, 24], sizes = [16, 8], strides = [1, 1]} : vector<16x32xf32> to vector<16x8xf32>
    %cst_27 = arith.constant dense<0.000000e+00> : vector<16x16xf32>
    %73 = tpu.matmul %70, %71, %cst_27 {dimension_numbers = #tpu.dot_dimension_numbers<[1], [1], [0], [0], [0, 0, 1, 0], [], []>} : vector<16x8xf32>, vector<16x8xf32>, vector<16x16xf32> -> vector<16x16xf32>
    %cst_28 = arith.constant 0.353553385 : f32
    %74 = vector.broadcast %cst_28 : f32 to vector<16x16xf32>
    %75 = arith.mulf %73, %74 : vector<16x16xf32>
    %cst_29 = arith.constant dense<0xFF800000> : vector<16xf32>
    %76 = vector.multi_reduction <maximumf>, %75, %cst_29 [1] : vector<16x16xf32> to vector<16xf32>
    %77 = vector.shape_cast %76 : vector<16xf32> to vector<16x1xf32>
    %78 = vector.broadcast %77 : vector<16x1xf32> to vector<16x16xf32>
    %79 = arith.subf %75, %78 : vector<16x16xf32>
    %80 = math.exp %79 : vector<16x16xf32>
    %cst_30 = arith.constant dense<0.000000e+00> : vector<16xf32>
    %81 = vector.multi_reduction <add>, %80, %cst_30 [1] : vector<16x16xf32> to vector<16xf32>
    %82 = vector.shape_cast %81 : vector<16xf32> to vector<16x1xf32>
    %83 = tpu.reciprocal %82 {approx = true} : vector<16x1xf32> -> vector<16x1xf32>
    %84 = vector.broadcast %83 : vector<16x1xf32> to vector<16x16xf32>
    %85 = arith.mulf %80, %84 : vector<16x16xf32>
    %cst_31 = arith.constant dense<0.000000e+00> : vector<16x8xf32>
    %86 = tpu.matmul %85, %72, %cst_31 {dimension_numbers = #tpu.dot_dimension_numbers<[1], [0], [0], [1], [0, 0, 1, 1], [], []>} : vector<16x16xf32>, vector<16x8xf32>, vector<16x8xf32> -> vector<16x8xf32>
    %87 = tpu.concatenate %35, %52, %69, %86 in 1 : vector<16x8xf32>, vector<16x8xf32>, vector<16x8xf32>, vector<16x8xf32> -> vector<16x32xf32>
    %88 = vector.extract_strided_slice %13 {offsets = [16, 0], sizes = [16, 32], strides = [1, 1]} : vector<32x32xf32> to vector<16x32xf32>
    %89 = vector.extract_strided_slice %14 {offsets = [16, 0], sizes = [16, 32], strides = [1, 1]} : vector<32x32xf32> to vector<16x32xf32>
    %90 = vector.extract_strided_slice %15 {offsets = [16, 0], sizes = [16, 32], strides = [1, 1]} : vector<32x32xf32> to vector<16x32xf32>
    %91 = vector.extract_strided_slice %88 {offsets = [0, 0], sizes = [16, 8], strides = [1, 1]} : vector<16x32xf32> to vector<16x8xf32>
    %92 = vector.extract_strided_slice %89 {offsets = [0, 0], sizes = [16, 8], strides = [1, 1]} : vector<16x32xf32> to vector<16x8xf32>
    %93 = vector.extract_strided_slice %90 {offsets = [0, 0], sizes = [16, 8], strides = [1, 1]} : vector<16x32xf32> to vector<16x8xf32>
    %cst_32 = arith.constant dense<0.000000e+00> : vector<16x16xf32>
    %94 = tpu.matmul %91, %92, %cst_32 {dimension_numbers = #tpu.dot_dimension_numbers<[1], [1], [0], [0], [0, 0, 1, 0], [], []>} : vector<16x8xf32>, vector<16x8xf32>, vector<16x16xf32> -> vector<16x16xf32>
    %cst_33 = arith.constant 0.353553385 : f32
    %95 = vector.broadcast %cst_33 : f32 to vector<16x16xf32>
    %96 = arith.mulf %94, %95 : vector<16x16xf32>
    %cst_34 = arith.constant dense<0xFF800000> : vector<16xf32>
    %97 = vector.multi_reduction <maximumf>, %96, %cst_34 [1] : vector<16x16xf32> to vector<16xf32>
    %98 = vector.shape_cast %97 : vector<16xf32> to vector<16x1xf32>
    %99 = vector.broadcast %98 : vector<16x1xf32> to vector<16x16xf32>
    %100 = arith.subf %96, %99 : vector<16x16xf32>
    %101 = math.exp %100 : vector<16x16xf32>
    %cst_35 = arith.constant dense<0.000000e+00> : vector<16xf32>
    %102 = vector.multi_reduction <add>, %101, %cst_35 [1] : vector<16x16xf32> to vector<16xf32>
    %103 = vector.shape_cast %102 : vector<16xf32> to vector<16x1xf32>
    %104 = tpu.reciprocal %103 {approx = true} : vector<16x1xf32> -> vector<16x1xf32>
    %105 = vector.broadcast %104 : vector<16x1xf32> to vector<16x16xf32>
    %106 = arith.mulf %101, %105 : vector<16x16xf32>
    %cst_36 = arith.constant dense<0.000000e+00> : vector<16x8xf32>
    %107 = tpu.matmul %106, %93, %cst_36 {dimension_numbers = #tpu.dot_dimension_numbers<[1], [0], [0], [1], [0, 0, 1, 1], [], []>} : vector<16x16xf32>, vector<16x8xf32>, vector<16x8xf32> -> vector<16x8xf32>
    %108 = vector.extract_strided_slice %88 {offsets = [0, 8], sizes = [16, 8], strides = [1, 1]} : vector<16x32xf32> to vector<16x8xf32>
    %109 = vector.extract_strided_slice %89 {offsets = [0, 8], sizes = [16, 8], strides = [1, 1]} : vector<16x32xf32> to vector<16x8xf32>
    %110 = vector.extract_strided_slice %90 {offsets = [0, 8], sizes = [16, 8], strides = [1, 1]} : vector<16x32xf32> to vector<16x8xf32>
    %cst_37 = arith.constant dense<0.000000e+00> : vector<16x16xf32>
    %111 = tpu.matmul %108, %109, %cst_37 {dimension_numbers = #tpu.dot_dimension_numbers<[1], [1], [0], [0], [0, 0, 1, 0], [], []>} : vector<16x8xf32>, vector<16x8xf32>, vector<16x16xf32> -> vector<16x16xf32>
    %cst_38 = arith.constant 0.353553385 : f32
    %112 = vector.broadcast %cst_38 : f32 to vector<16x16xf32>
    %113 = arith.mulf %111, %112 : vector<16x16xf32>
    %cst_39 = arith.constant dense<0xFF800000> : vector<16xf32>
    %114 = vector.multi_reduction <maximumf>, %113, %cst_39 [1] : vector<16x16xf32> to vector<16xf32>
    %115 = vector.shape_cast %114 : vector<16xf32> to vector<16x1xf32>
    %116 = vector.broadcast %115 : vector<16x1xf32> to vector<16x16xf32>
    %117 = arith.subf %113, %116 : vector<16x16xf32>
    %118 = math.exp %117 : vector<16x16xf32>
    %cst_40 = arith.constant dense<0.000000e+00> : vector<16xf32>
    %119 = vector.multi_reduction <add>, %118, %cst_40 [1] : vector<16x16xf32> to vector<16xf32>
    %120 = vector.shape_cast %119 : vector<16xf32> to vector<16x1xf32>
    %121 = tpu.reciprocal %120 {approx = true} : vector<16x1xf32> -> vector<16x1xf32>
    %122 = vector.broadcast %121 : vector<16x1xf32> to vector<16x16xf32>
    %123 = arith.mulf %118, %122 : vector<16x16xf32>
    %cst_41 = arith.constant dense<0.000000e+00> : vector<16x8xf32>
    %124 = tpu.matmul %123, %110, %cst_41 {dimension_numbers = #tpu.dot_dimension_numbers<[1], [0], [0], [1], [0, 0, 1, 1], [], []>} : vector<16x16xf32>, vector<16x8xf32>, vector<16x8xf32> -> vector<16x8xf32>
    %125 = vector.extract_strided_slice %88 {offsets = [0, 16], sizes = [16, 8], strides = [1, 1]} : vector<16x32xf32> to vector<16x8xf32>
    %126 = vector.extract_strided_slice %89 {offsets = [0, 16], sizes = [16, 8], strides = [1, 1]} : vector<16x32xf32> to vector<16x8xf32>
    %127 = vector.extract_strided_slice %90 {offsets = [0, 16], sizes = [16, 8], strides = [1, 1]} : vector<16x32xf32> to vector<16x8xf32>
    %cst_42 = arith.constant dense<0.000000e+00> : vector<16x16xf32>
    %128 = tpu.matmul %125, %126, %cst_42 {dimension_numbers = #tpu.dot_dimension_numbers<[1], [1], [0], [0], [0, 0, 1, 0], [], []>} : vector<16x8xf32>, vector<16x8xf32>, vector<16x16xf32> -> vector<16x16xf32>
    %cst_43 = arith.constant 0.353553385 : f32
    %129 = vector.broadcast %cst_43 : f32 to vector<16x16xf32>
    %130 = arith.mulf %128, %129 : vector<16x16xf32>
    %cst_44 = arith.constant dense<0xFF800000> : vector<16xf32>
    %131 = vector.multi_reduction <maximumf>, %130, %cst_44 [1] : vector<16x16xf32> to vector<16xf32>
    %132 = vector.shape_cast %131 : vector<16xf32> to vector<16x1xf32>
    %133 = vector.broadcast %132 : vector<16x1xf32> to vector<16x16xf32>
    %134 = arith.subf %130, %133 : vector<16x16xf32>
    %135 = math.exp %134 : vector<16x16xf32>
    %cst_45 = arith.constant dense<0.000000e+00> : vector<16xf32>
    %136 = vector.multi_reduction <add>, %135, %cst_45 [1] : vector<16x16xf32> to vector<16xf32>
    %137 = vector.shape_cast %136 : vector<16xf32> to vector<16x1xf32>
    %138 = tpu.reciprocal %137 {approx = true} : vector<16x1xf32> -> vector<16x1xf32>
    %139 = vector.broadcast %138 : vector<16x1xf32> to vector<16x16xf32>
    %140 = arith.mulf %135, %139 : vector<16x16xf32>
    %cst_46 = arith.constant dense<0.000000e+00> : vector<16x8xf32>
    %141 = tpu.matmul %140, %127, %cst_46 {dimension_numbers = #tpu.dot_dimension_numbers<[1], [0], [0], [1], [0, 0, 1, 1], [], []>} : vector<16x16xf32>, vector<16x8xf32>, vector<16x8xf32> -> vector<16x8xf32>
    %142 = vector.extract_strided_slice %88 {offsets = [0, 24], sizes = [16, 8], strides = [1, 1]} : vector<16x32xf32> to vector<16x8xf32>
    %143 = vector.extract_strided_slice %89 {offsets = [0, 24], sizes = [16, 8], strides = [1, 1]} : vector<16x32xf32> to vector<16x8xf32>
    %144 = vector.extract_strided_slice %90 {offsets = [0, 24], sizes = [16, 8], strides = [1, 1]} : vector<16x32xf32> to vector<16x8xf32>
    %cst_47 = arith.constant dense<0.000000e+00> : vector<16x16xf32>
    %145 = tpu.matmul %142, %143, %cst_47 {dimension_numbers = #tpu.dot_dimension_numbers<[1], [1], [0], [0], [0, 0, 1, 0], [], []>} : vector<16x8xf32>, vector<16x8xf32>, vector<16x16xf32> -> vector<16x16xf32>
    %cst_48 = arith.constant 0.353553385 : f32
    %146 = vector.broadcast %cst_48 : f32 to vector<16x16xf32>
    %147 = arith.mulf %145, %146 : vector<16x16xf32>
    %cst_49 = arith.constant dense<0xFF800000> : vector<16xf32>
    %148 = vector.multi_reduction <maximumf>, %147, %cst_49 [1] : vector<16x16xf32> to vector<16xf32>
    %149 = vector.shape_cast %148 : vector<16xf32> to vector<16x1xf32>
    %150 = vector.broadcast %149 : vector<16x1xf32> to vector<16x16xf32>
    %151 = arith.subf %147, %150 : vector<16x16xf32>
    %152 = math.exp %151 : vector<16x16xf32>
    %cst_50 = arith.constant dense<0.000000e+00> : vector<16xf32>
    %153 = vector.multi_reduction <add>, %152, %cst_50 [1] : vector<16x16xf32> to vector<16xf32>
    %154 = vector.shape_cast %153 : vector<16xf32> to vector<16x1xf32>
    %155 = tpu.reciprocal %154 {approx = true} : vector<16x1xf32> -> vector<16x1xf32>
    %156 = vector.broadcast %155 : vector<16x1xf32> to vector<16x16xf32>
    %157 = arith.mulf %152, %156 : vector<16x16xf32>
    %cst_51 = arith.constant dense<0.000000e+00> : vector<16x8xf32>
    %158 = tpu.matmul %157, %144, %cst_51 {dimension_numbers = #tpu.dot_dimension_numbers<[1], [0], [0], [1], [0, 0, 1, 1], [], []>} : vector<16x16xf32>, vector<16x8xf32>, vector<16x8xf32> -> vector<16x8xf32>
    %159 = tpu.concatenate %107, %124, %141, %158 in 1 : vector<16x8xf32>, vector<16x8xf32>, vector<16x8xf32>, vector<16x8xf32> -> vector<16x32xf32>
    %160 = tpu.concatenate %87, %159 in 0 : vector<16x32xf32>, vector<16x32xf32> -> vector<32x32xf32>
    %c0_52 = arith.constant 0 : index
    %c0_53 = arith.constant 0 : index
    %161 = vector.load %arg7[%c0_52, %c0_53] : memref<32x32xf32, #tpu.memory_space<vmem>>, vector<32x32xf32>
    %c0_54 = arith.constant 0 : index
    %c0_55 = arith.constant 0 : index
    %162 = vector.load %arg8[%c0_54, %c0_55] : memref<1x32xf32, #tpu.memory_space<vmem>>, vector<1x32xf32>
    %cst_56 = arith.constant dense<0.000000e+00> : vector<32x32xf32>
    %163 = tpu.matmul %160, %161, %cst_56 {dimension_numbers = #tpu.dot_dimension_numbers<[1], [0], [0], [1], [0, 0, 1, 1], [], []>} : vector<32x32xf32>, vector<32x32xf32>, vector<32x32xf32> -> vector<32x32xf32>
    %164 = vector.broadcast %162 : vector<1x32xf32> to vector<32x32xf32>
    %165 = arith.addf %163, %164 : vector<32x32xf32>
    %166 = arith.addf %7, %165 : vector<32x32xf32>
    %c0_57 = arith.constant 0 : index
    %c0_58 = arith.constant 0 : index
    %167 = vector.load %arg9[%c0_57, %c0_58] : memref<1x32xf32, #tpu.memory_space<vmem>>, vector<1x32xf32>
    %c0_59 = arith.constant 0 : index
    %c0_60 = arith.constant 0 : index
    %168 = vector.load %arg10[%c0_59, %c0_60] : memref<1x32xf32, #tpu.memory_space<vmem>>, vector<1x32xf32>
    %cst_61 = arith.constant dense<0.000000e+00> : vector<32xf32>
    %169 = vector.multi_reduction <add>, %166, %cst_61 [1] : vector<32x32xf32> to vector<32xf32>
    %170 = vector.shape_cast %169 : vector<32xf32> to vector<32x1xf32>
    %cst_62 = arith.constant 3.200000e+01 : f32
    %171 = vector.broadcast %cst_62 : f32 to vector<32x1xf32>
    %172 = arith.divf %170, %171 : vector<32x1xf32>
    %173 = vector.broadcast %172 : vector<32x1xf32> to vector<32x32xf32>
    %174 = arith.subf %166, %173 : vector<32x32xf32>
    %175 = arith.mulf %174, %174 : vector<32x32xf32>
    %cst_63 = arith.constant dense<0.000000e+00> : vector<32xf32>
    %176 = vector.multi_reduction <add>, %175, %cst_63 [1] : vector<32x32xf32> to vector<32xf32>
    %177 = vector.shape_cast %176 : vector<32xf32> to vector<32x1xf32>
    %cst_64 = arith.constant 3.200000e+01 : f32
    %178 = vector.broadcast %cst_64 : f32 to vector<32x1xf32>
    %179 = arith.divf %177, %178 : vector<32x1xf32>
    %180 = vector.broadcast %172 : vector<32x1xf32> to vector<32x32xf32>
    %181 = arith.subf %166, %180 : vector<32x32xf32>
    %cst_65 = arith.constant 9.99999974E-6 : f32
    %182 = vector.broadcast %cst_65 : f32 to vector<32x1xf32>
    %183 = arith.addf %179, %182 : vector<32x1xf32>
    %184 = math.rsqrt %183 : vector<32x1xf32>
    %185 = vector.broadcast %184 : vector<32x1xf32> to vector<32x32xf32>
    %186 = arith.mulf %181, %185 : vector<32x32xf32>
    %187 = vector.broadcast %167 : vector<1x32xf32> to vector<32x32xf32>
    %188 = arith.mulf %186, %187 : vector<32x32xf32>
    %189 = vector.broadcast %168 : vector<1x32xf32> to vector<32x32xf32>
    %190 = arith.addf %188, %189 : vector<32x32xf32>
    %c0_66 = arith.constant 0 : index
    %c0_67 = arith.constant 0 : index
    %191 = vector.load %arg11[%c0_66, %c0_67] : memref<32x64xf32, #tpu.memory_space<vmem>>, vector<32x64xf32>
    %c0_68 = arith.constant 0 : index
    %c0_69 = arith.constant 0 : index
    %192 = vector.load %arg12[%c0_68, %c0_69] : memref<1x64xf32, #tpu.memory_space<vmem>>, vector<1x64xf32>
    %cst_70 = arith.constant dense<0.000000e+00> : vector<32x64xf32>
    %193 = tpu.matmul %190, %191, %cst_70 {dimension_numbers = #tpu.dot_dimension_numbers<[1], [0], [0], [1], [0, 0, 1, 1], [], []>} : vector<32x32xf32>, vector<32x64xf32>, vector<32x64xf32> -> vector<32x64xf32>
    %194 = vector.broadcast %192 : vector<1x64xf32> to vector<32x64xf32>
    %195 = arith.addf %193, %194 : vector<32x64xf32>
    %cst_71 = arith.constant 0.000000e+00 : f32
    %196 = vector.broadcast %cst_71 : f32 to vector<32x64xf32>
    %197 = arith.maximumf %195, %196 : vector<32x64xf32>
    %c0_72 = arith.constant 0 : index
    %c0_73 = arith.constant 0 : index
    %198 = vector.load %arg13[%c0_72, %c0_73] : memref<64x32xf32, #tpu.memory_space<vmem>>, vector<64x32xf32>
    %c0_74 = arith.constant 0 : index
    %c0_75 = arith.constant 0 : index
    %199 = vector.load %arg14[%c0_74, %c0_75] : memref<1x32xf32, #tpu.memory_space<vmem>>, vector<1x32xf32>
    %cst_76 = arith.constant dense<0.000000e+00> : vector<32x32xf32>
    %200 = tpu.matmul %197, %198, %cst_76 {dimension_numbers = #tpu.dot_dimension_numbers<[1], [0], [0], [1], [0, 0, 1, 1], [], []>} : vector<32x64xf32>, vector<64x32xf32>, vector<32x32xf32> -> vector<32x32xf32>
    %201 = vector.broadcast %199 : vector<1x32xf32> to vector<32x32xf32>
    %202 = arith.addf %200, %201 : vector<32x32xf32>
    %203 = arith.addf %190, %202 : vector<32x32xf32>
    %c0_77 = arith.constant 0 : index
    %c0_78 = arith.constant 0 : index
    %204 = vector.load %arg15[%c0_77, %c0_78] : memref<1x32xf32, #tpu.memory_space<vmem>>, vector<1x32xf32>
    %c0_79 = arith.constant 0 : index
    %c0_80 = arith.constant 0 : index
    %205 = vector.load %arg16[%c0_79, %c0_80] : memref<1x32xf32, #tpu.memory_space<vmem>>, vector<1x32xf32>
    %cst_81 = arith.constant dense<0.000000e+00> : vector<32xf32>
    %206 = vector.multi_reduction <add>, %203, %cst_81 [1] : vector<32x32xf32> to vector<32xf32>
    %207 = vector.shape_cast %206 : vector<32xf32> to vector<32x1xf32>
    %cst_82 = arith.constant 3.200000e+01 : f32
    %208 = vector.broadcast %cst_82 : f32 to vector<32x1xf32>
    %209 = arith.divf %207, %208 : vector<32x1xf32>
    %210 = vector.broadcast %209 : vector<32x1xf32> to vector<32x32xf32>
    %211 = arith.subf %203, %210 : vector<32x32xf32>
    %212 = arith.mulf %211, %211 : vector<32x32xf32>
    %cst_83 = arith.constant dense<0.000000e+00> : vector<32xf32>
    %213 = vector.multi_reduction <add>, %212, %cst_83 [1] : vector<32x32xf32> to vector<32xf32>
    %214 = vector.shape_cast %213 : vector<32xf32> to vector<32x1xf32>
    %cst_84 = arith.constant 3.200000e+01 : f32
    %215 = vector.broadcast %cst_84 : f32 to vector<32x1xf32>
    %216 = arith.divf %214, %215 : vector<32x1xf32>
    %217 = vector.broadcast %209 : vector<32x1xf32> to vector<32x32xf32>
    %218 = arith.subf %203, %217 : vector<32x32xf32>
    %cst_85 = arith.constant 9.99999974E-6 : f32
    %219 = vector.broadcast %cst_85 : f32 to vector<32x1xf32>
    %220 = arith.addf %216, %219 : vector<32x1xf32>
    %221 = math.rsqrt %220 : vector<32x1xf32>
    %222 = vector.broadcast %221 : vector<32x1xf32> to vector<32x32xf32>
    %223 = arith.mulf %218, %222 : vector<32x32xf32>
    %224 = vector.broadcast %204 : vector<1x32xf32> to vector<32x32xf32>
    %225 = arith.mulf %223, %224 : vector<32x32xf32>
    %226 = vector.broadcast %205 : vector<1x32xf32> to vector<32x32xf32>
    %227 = arith.addf %225, %226 : vector<32x32xf32>
    %c0_86 = arith.constant 0 : index
    %c0_87 = arith.constant 0 : index
    %228 = vector.load %arg17[%c0_86, %c0_87] : memref<1x32xf32, #tpu.memory_space<vmem>>, vector<1x32xf32>
    %c0_88 = arith.constant 0 : index
    %c0_89 = arith.constant 0 : index
    %229 = vector.load %arg18[%c0_88, %c0_89] : memref<1x32xf32, #tpu.memory_space<vmem>>, vector<1x32xf32>
    %cst_90 = arith.constant dense<0.000000e+00> : vector<32xf32>
    %230 = vector.multi_reduction <add>, %227, %cst_90 [1] : vector<32x32xf32> to vector<32xf32>
    %231 = vector.shape_cast %230 : vector<32xf32> to vector<32x1xf32>
    %cst_91 = arith.constant 3.200000e+01 : f32
    %232 = vector.broadcast %cst_91 : f32 to vector<32x1xf32>
    %233 = arith.divf %231, %232 : vector<32x1xf32>
    %234 = vector.broadcast %233 : vector<32x1xf32> to vector<32x32xf32>
    %235 = arith.subf %227, %234 : vector<32x32xf32>
    %236 = arith.mulf %235, %235 : vector<32x32xf32>
    %cst_92 = arith.constant dense<0.000000e+00> : vector<32xf32>
    %237 = vector.multi_reduction <add>, %236, %cst_92 [1] : vector<32x32xf32> to vector<32xf32>
    %238 = vector.shape_cast %237 : vector<32xf32> to vector<32x1xf32>
    %cst_93 = arith.constant 3.200000e+01 : f32
    %239 = vector.broadcast %cst_93 : f32 to vector<32x1xf32>
    %240 = arith.divf %238, %239 : vector<32x1xf32>
    %241 = vector.broadcast %233 : vector<32x1xf32> to vector<32x32xf32>
    %242 = arith.subf %227, %241 : vector<32x32xf32>
    %cst_94 = arith.constant 9.99999974E-6 : f32
    %243 = vector.broadcast %cst_94 : f32 to vector<32x1xf32>
    %244 = arith.addf %240, %243 : vector<32x1xf32>
    %245 = math.rsqrt %244 : vector<32x1xf32>
    %246 = vector.broadcast %245 : vector<32x1xf32> to vector<32x32xf32>
    %247 = arith.mulf %242, %246 : vector<32x32xf32>
    %248 = vector.broadcast %228 : vector<1x32xf32> to vector<32x32xf32>
    %249 = arith.mulf %247, %248 : vector<32x32xf32>
    %250 = vector.broadcast %229 : vector<1x32xf32> to vector<32x32xf32>
    %251 = arith.addf %249, %250 : vector<32x32xf32>
    %c0_95 = arith.constant 0 : index
    %c0_96 = arith.constant 0 : index
    %252 = vector.load %arg19[%c0_95, %c0_96] : memref<32x32xf32, #tpu.memory_space<vmem>>, vector<32x32xf32>
    tpu.vector_store %arg19[%c0_95, %c0_96], %251 {strides = array<i32>} : memref<32x32xf32, #tpu.memory_space<vmem>>, vector<32x32xf32>,
    return
  }
  func.func @transform_0(%arg0: i32) -> (i32, i32) {
    %c0_i32 = arith.constant 0 : i32
    %c0_i32_0 = arith.constant 0 : i32
    %c0_i32_1 = arith.constant 0 : i32
    return %c0_i32, %c0_i32_0 : i32, i32
  }
  func.func @transform_1(%arg0: i32) -> (i32, i32) {
    %c0_i32 = arith.constant 0 : i32
    %c0_i32_0 = arith.constant 0 : i32
    %c0_i32_1 = arith.constant 0 : i32
    return %c0_i32, %c0_i32_0 : i32, i32
  }
  func.func @transform_2(%arg0: i32) -> (i32, i32) {
    %c0_i32 = arith.constant 0 : i32
    %c0_i32_0 = arith.constant 0 : i32
    %c0_i32_1 = arith.constant 0 : i32
    return %c0_i32, %c0_i32_0 : i32, i32
  }
  func.func @transform_3(%arg0: i32) -> (i32, i32) {
    %c0_i32 = arith.constant 0 : i32
    %c0_i32_0 = arith.constant 0 : i32
    %c0_i32_1 = arith.constant 0 : i32
    return %c0_i32, %c0_i32_0 : i32, i32
  }
  func.func @transform_4(%arg0: i32) -> (i32, i32) {
    %c0_i32 = arith.constant 0 : i32
    %c0_i32_0 = arith.constant 0 : i32
    %c0_i32_1 = arith.constant 0 : i32
    return %c0_i32, %c0_i32_0 : i32, i32
  }
  func.func @transform_5(%arg0: i32) -> (i32, i32) {
    %c0_i32 = arith.constant 0 : i32
    %c0_i32_0 = arith.constant 0 : i32
    %c0_i32_1 = arith.constant 0 : i32
    return %c0_i32, %c0_i32_0 : i32, i32
  }
  func.func @transform_6(%arg0: i32) -> (i32, i32) {
    %c0_i32 = arith.constant 0 : i32
    %c0_i32_0 = arith.constant 0 : i32
    %c0_i32_1 = arith.constant 0 : i32
    return %c0_i32, %c0_i32_0 : i32, i32
  }
  func.func @transform_7(%arg0: i32) -> (i32, i32) {
    %c0_i32 = arith.constant 0 : i32
    %c0_i32_0 = arith.constant 0 : i32
    %c0_i32_1 = arith.constant 0 : i32
    return %c0_i32, %c0_i32_0 : i32, i32
  }
  func.func @transform_8(%arg0: i32) -> (i32, i32) {
    %c0_i32 = arith.constant 0 : i32
    %c0_i32_0 = arith.constant 0 : i32
    %c0_i32_1 = arith.constant 0 : i32
    return %c0_i32, %c0_i32_0 : i32, i32
  }
  func.func @transform_9(%arg0: i32) -> (i32, i32) {
    %c0_i32 = arith.constant 0 : i32
    %c0_i32_0 = arith.constant 0 : i32
    %c0_i32_1 = arith.constant 0 : i32
    return %c0_i32, %c0_i32_0 : i32, i32
  }
  func.func @transform_10(%arg0: i32) -> (i32, i32) {
    %c0_i32 = arith.constant 0 : i32
    %c0_i32_0 = arith.constant 0 : i32
    %c0_i32_1 = arith.constant 0 : i32
    return %c0_i32, %c0_i32_0 : i32, i32
  }
  func.func @transform_11(%arg0: i32) -> (i32, i32) {
    %c0_i32 = arith.constant 0 : i32
    %c0_i32_0 = arith.constant 0 : i32
    %c0_i32_1 = arith.constant 0 : i32
    return %c0_i32, %c0_i32_0 : i32, i32
  }
  func.func @transform_12(%arg0: i32) -> (i32, i32) {
    %c0_i32 = arith.constant 0 : i32
    %c0_i32_0 = arith.constant 0 : i32
    %c0_i32_1 = arith.constant 0 : i32
    return %c0_i32, %c0_i32_0 : i32, i32
  }
  func.func @transform_13(%arg0: i32) -> (i32, i32) {
    %c0_i32 = arith.constant 0 : i32
    %c0_i32_0 = arith.constant 0 : i32
    %c0_i32_1 = arith.constant 0 : i32
    return %c0_i32, %c0_i32_0 : i32, i32
  }
  func.func @transform_14(%arg0: i32) -> (i32, i32) {
    %c0_i32 = arith.constant 0 : i32
    %c0_i32_0 = arith.constant 0 : i32
    %c0_i32_1 = arith.constant 0 : i32
    return %c0_i32, %c0_i32_0 : i32, i32
  }
  func.func @transform_15(%arg0: i32) -> (i32, i32) {
    %c0_i32 = arith.constant 0 : i32
    %c0_i32_0 = arith.constant 0 : i32
    %c0_i32_1 = arith.constant 0 : i32
    return %c0_i32, %c0_i32_0 : i32, i32
  }
  func.func @transform_16(%arg0: i32) -> (i32, i32) {
    %c0_i32 = arith.constant 0 : i32
    %c0_i32_0 = arith.constant 0 : i32
    %c0_i32_1 = arith.constant 0 : i32
    return %c0_i32, %c0_i32_0 : i32, i32
  }
  func.func @transform_17(%arg0: i32) -> (i32, i32) {
    %c0_i32 = arith.constant 0 : i32
    %c0_i32_0 = arith.constant 0 : i32
    %c0_i32_1 = arith.constant 0 : i32
    return %c0_i32, %c0_i32_0 : i32, i32
  }
  func.func @transform_18(%arg0: i32) -> (i32, i32) {
    %c0_i32 = arith.constant 0 : i32
    %c0_i32_0 = arith.constant 0 : i32
    %c0_i32_1 = arith.constant 0 : i32
    return %c0_i32, %c0_i32_0 : i32, i32
  }
}

module attributes {stable_mosaic.version = 11 : i64} {
  func.func @_decode_kernel(%arg0: i32, %arg1: memref<2x32xf32, #tpu.memory_space<vmem>>, %arg2: memref<1x32xf32, #tpu.memory_space<vmem>>, %arg3: memref<32x32xf32, #tpu.memory_space<vmem>>, %arg4: memref<32x96xf32, #tpu.memory_space<vmem>>, %arg5: memref<1x96xf32, #tpu.memory_space<vmem>>, %arg6: memref<32x32xf32, #tpu.memory_space<vmem>>, %arg7: memref<1x32xf32, #tpu.memory_space<vmem>>, %arg8: memref<1x32xf32, #tpu.memory_space<vmem>>, %arg9: memref<1x32xf32, #tpu.memory_space<vmem>>, %arg10: memref<32x32xf32, #tpu.memory_space<vmem>>, %arg11: memref<1x32xf32, #tpu.memory_space<vmem>>, %arg12: memref<32x64xf32, #tpu.memory_space<vmem>>, %arg13: memref<1x64xf32, #tpu.memory_space<vmem>>, %arg14: memref<32x32xf32, #tpu.memory_space<vmem>>, %arg15: memref<1x32xf32, #tpu.memory_space<vmem>>, %arg16: memref<1x32xf32, #tpu.memory_space<vmem>>, %arg17: memref<1x32xf32, #tpu.memory_space<vmem>>, %arg18: memref<32x64xf32, #tpu.memory_space<vmem>>, %arg19: memref<1x64xf32, #tpu.memory_space<vmem>>, %arg20: memref<64x32xf32, #tpu.memory_space<vmem>>, %arg21: memref<1x32xf32, #tpu.memory_space<vmem>>, %arg22: memref<1x32xf32, #tpu.memory_space<vmem>>, %arg23: memref<1x32xf32, #tpu.memory_space<vmem>>, %arg24: memref<32x32xf32, #tpu.memory_space<vmem>>, %arg25: memref<1x32xf32, #tpu.memory_space<vmem>>, %arg26: memref<2x32xf32, #tpu.memory_space<vmem>>) attributes {dimension_semantics = [#tpu.dimension_semantics<arbitrary>], iteration_bounds = array<i64: 1>, scalar_prefetch = 0 : i64, scratch_operands = 0 : i64, tpu.core_type = #tpu.core_type<tc>, window_params = [{pipeline_mode = #tpu.pipeline_mode<synchronous>, transform_indices = @transform_0, window_bounds = array<i64: 2, 32>}, {pipeline_mode = #tpu.pipeline_mode<synchronous>, transform_indices = @transform_1, window_bounds = array<i64: 1, 32>}, {pipeline_mode = #tpu.pipeline_mode<synchronous>, transform_indices = @transform_2, window_bounds = array<i64: 32, 32>}, {pipeline_mode = #tpu.pipeline_mode<synchronous>, transform_indices = @transform_3, window_bounds = array<i64: 32, 96>}, {pipeline_mode = #tpu.pipeline_mode<synchronous>, transform_indices = @transform_4, window_bounds = array<i64: 1, 96>}, {pipeline_mode = #tpu.pipeline_mode<synchronous>, transform_indices = @transform_5, window_bounds = array<i64: 32, 32>}, {pipeline_mode = #tpu.pipeline_mode<synchronous>, transform_indices = @transform_6, window_bounds = array<i64: 1, 32>}, {pipeline_mode = #tpu.pipeline_mode<synchronous>, transform_indices = @transform_7, window_bounds = array<i64: 1, 32>}, {pipeline_mode = #tpu.pipeline_mode<synchronous>, transform_indices = @transform_8, window_bounds = array<i64: 1, 32>}, {pipeline_mode = #tpu.pipeline_mode<synchronous>, transform_indices = @transform_9, window_bounds = array<i64: 32, 32>}, {pipeline_mode = #tpu.pipeline_mode<synchronous>, transform_indices = @transform_10, window_bounds = array<i64: 1, 32>}, {pipeline_mode = #tpu.pipeline_mode<synchronous>, transform_indices = @transform_11, window_bounds = array<i64: 32, 64>}, {pipeline_mode = #tpu.pipeline_mode<synchronous>, transform_indices = @transform_12, window_bounds = array<i64: 1, 64>}, {pipeline_mode = #tpu.pipeline_mode<synchronous>, transform_indices = @transform_13, window_bounds = array<i64: 32, 32>}, {pipeline_mode = #tpu.pipeline_mode<synchronous>, transform_indices = @transform_14, window_bounds = array<i64: 1, 32>}, {pipeline_mode = #tpu.pipeline_mode<synchronous>, transform_indices = @transform_15, window_bounds = array<i64: 1, 32>}, {pipeline_mode = #tpu.pipeline_mode<synchronous>, transform_indices = @transform_16, window_bounds = array<i64: 1, 32>}, {pipeline_mode = #tpu.pipeline_mode<synchronous>, transform_indices = @transform_17, window_bounds = array<i64: 32, 64>}, {pipeline_mode = #tpu.pipeline_mode<synchronous>, transform_indices = @transform_18, window_bounds = array<i64: 1, 64>}, {pipeline_mode = #tpu.pipeline_mode<synchronous>, transform_indices = @transform_19, window_bounds = array<i64: 64, 32>}, {pipeline_mode = #tpu.pipeline_mode<synchronous>, transform_indices = @transform_20, window_bounds = array<i64: 1, 32>}, {pipeline_mode = #tpu.pipeline_mode<synchronous>, transform_indices = @transform_21, window_bounds = array<i64: 1, 32>}, {pipeline_mode = #tpu.pipeline_mode<synchronous>, transform_indices = @transform_22, window_bounds = array<i64: 1, 32>}, {pipeline_mode = #tpu.pipeline_mode<synchronous>, transform_indices = @transform_23, window_bounds = array<i64: 32, 32>}, {pipeline_mode = #tpu.pipeline_mode<synchronous>, transform_indices = @transform_24, window_bounds = array<i64: 1, 32>}, {pipeline_mode = #tpu.pipeline_mode<synchronous>, transform_indices = @transform_25, window_bounds = array<i64: 2, 32>}]} {
    %c0 = arith.constant 0 : index
    %c0_0 = arith.constant 0 : index
    %0 = vector.load %arg1[%c0, %c0_0] : memref<2x32xf32, #tpu.memory_space<vmem>>, vector<2x32xf32>
    %cst = arith.constant 5.65685415 : f32
    %1 = vector.broadcast %cst : f32 to vector<2x32xf32>
    %2 = arith.mulf %0, %1 : vector<2x32xf32>
    %c0_1 = arith.constant 0 : index
    %c0_2 = arith.constant 0 : index
    %3 = vector.load %arg2[%c0_1, %c0_2] : memref<1x32xf32, #tpu.memory_space<vmem>>, vector<1x32xf32>
    %4 = vector.broadcast %3 : vector<1x32xf32> to vector<2x32xf32>
    %5 = arith.addf %2, %4 : vector<2x32xf32>
    %c0_3 = arith.constant 0 : index
    %c0_4 = arith.constant 0 : index
    %6 = vector.load %arg3[%c0_3, %c0_4] : memref<32x32xf32, #tpu.memory_space<vmem>>, vector<32x32xf32>
    %c0_5 = arith.constant 0 : index
    %c0_6 = arith.constant 0 : index
    %7 = vector.load %arg4[%c0_5, %c0_6] : memref<32x96xf32, #tpu.memory_space<vmem>>, vector<32x96xf32>
    %c0_7 = arith.constant 0 : index
    %c0_8 = arith.constant 0 : index
    %8 = vector.load %arg5[%c0_7, %c0_8] : memref<1x96xf32, #tpu.memory_space<vmem>>, vector<1x96xf32>
    %cst_9 = arith.constant dense<0.000000e+00> : vector<2x96xf32>
    %9 = tpu.matmul %5, %7, %cst_9 {dimension_numbers = #tpu.dot_dimension_numbers<[1], [0], [0], [1], [0, 0, 1, 1], [], []>} : vector<2x32xf32>, vector<32x96xf32>, vector<2x96xf32> -> vector<2x96xf32>
    %10 = vector.broadcast %8 : vector<1x96xf32> to vector<2x96xf32>
    %11 = arith.addf %9, %10 : vector<2x96xf32>
    %12 = vector.extract_strided_slice %11 {offsets = [0, 64], sizes = [2, 32], strides = [1, 1]} : vector<2x96xf32> to vector<2x32xf32>
    %c0_10 = arith.constant 0 : index
    %c0_11 = arith.constant 0 : index
    %13 = vector.load %arg6[%c0_10, %c0_11] : memref<32x32xf32, #tpu.memory_space<vmem>>, vector<32x32xf32>
    %c0_12 = arith.constant 0 : index
    %c0_13 = arith.constant 0 : index
    %14 = vector.load %arg7[%c0_12, %c0_13] : memref<1x32xf32, #tpu.memory_space<vmem>>, vector<1x32xf32>
    %cst_14 = arith.constant dense<0.000000e+00> : vector<2x32xf32>
    %15 = tpu.matmul %12, %13, %cst_14 {dimension_numbers = #tpu.dot_dimension_numbers<[1], [0], [0], [1], [0, 0, 1, 1], [], []>} : vector<2x32xf32>, vector<32x32xf32>, vector<2x32xf32> -> vector<2x32xf32>
    %16 = vector.broadcast %14 : vector<1x32xf32> to vector<2x32xf32>
    %17 = arith.addf %15, %16 : vector<2x32xf32>
    %18 = arith.addf %5, %17 : vector<2x32xf32>
    %c0_15 = arith.constant 0 : index
    %c0_16 = arith.constant 0 : index
    %19 = vector.load %arg8[%c0_15, %c0_16] : memref<1x32xf32, #tpu.memory_space<vmem>>, vector<1x32xf32>
    %c0_17 = arith.constant 0 : index
    %c0_18 = arith.constant 0 : index
    %20 = vector.load %arg9[%c0_17, %c0_18] : memref<1x32xf32, #tpu.memory_space<vmem>>, vector<1x32xf32>
    %cst_19 = arith.constant dense<0.000000e+00> : vector<2xf32>
    %21 = vector.multi_reduction <add>, %18, %cst_19 [1] : vector<2x32xf32> to vector<2xf32>
    %22 = vector.shape_cast %21 : vector<2xf32> to vector<2x1xf32>
    %cst_20 = arith.constant 3.200000e+01 : f32
    %23 = vector.broadcast %cst_20 : f32 to vector<2x1xf32>
    %24 = arith.divf %22, %23 : vector<2x1xf32>
    %25 = vector.broadcast %24 : vector<2x1xf32> to vector<2x32xf32>
    %26 = arith.subf %18, %25 : vector<2x32xf32>
    %27 = arith.mulf %26, %26 : vector<2x32xf32>
    %cst_21 = arith.constant dense<0.000000e+00> : vector<2xf32>
    %28 = vector.multi_reduction <add>, %27, %cst_21 [1] : vector<2x32xf32> to vector<2xf32>
    %29 = vector.shape_cast %28 : vector<2xf32> to vector<2x1xf32>
    %cst_22 = arith.constant 3.200000e+01 : f32
    %30 = vector.broadcast %cst_22 : f32 to vector<2x1xf32>
    %31 = arith.divf %29, %30 : vector<2x1xf32>
    %32 = vector.broadcast %24 : vector<2x1xf32> to vector<2x32xf32>
    %33 = arith.subf %18, %32 : vector<2x32xf32>
    %cst_23 = arith.constant 9.99999974E-6 : f32
    %34 = vector.broadcast %cst_23 : f32 to vector<2x1xf32>
    %35 = arith.addf %31, %34 : vector<2x1xf32>
    %36 = math.rsqrt %35 : vector<2x1xf32>
    %37 = vector.broadcast %36 : vector<2x1xf32> to vector<2x32xf32>
    %38 = arith.mulf %33, %37 : vector<2x32xf32>
    %39 = vector.broadcast %19 : vector<1x32xf32> to vector<2x32xf32>
    %40 = arith.mulf %38, %39 : vector<2x32xf32>
    %41 = vector.broadcast %20 : vector<1x32xf32> to vector<2x32xf32>
    %42 = arith.addf %40, %41 : vector<2x32xf32>
    %c0_24 = arith.constant 0 : index
    %c0_25 = arith.constant 0 : index
    %43 = vector.load %arg10[%c0_24, %c0_25] : memref<32x32xf32, #tpu.memory_space<vmem>>, vector<32x32xf32>
    %c0_26 = arith.constant 0 : index
    %c0_27 = arith.constant 0 : index
    %44 = vector.load %arg11[%c0_26, %c0_27] : memref<1x32xf32, #tpu.memory_space<vmem>>, vector<1x32xf32>
    %cst_28 = arith.constant dense<0.000000e+00> : vector<2x32xf32>
    %45 = tpu.matmul %42, %43, %cst_28 {dimension_numbers = #tpu.dot_dimension_numbers<[1], [0], [0], [1], [0, 0, 1, 1], [], []>} : vector<2x32xf32>, vector<32x32xf32>, vector<2x32xf32> -> vector<2x32xf32>
    %46 = vector.broadcast %44 : vector<1x32xf32> to vector<2x32xf32>
    %47 = arith.addf %45, %46 : vector<2x32xf32>
    %c0_29 = arith.constant 0 : index
    %c0_30 = arith.constant 0 : index
    %48 = vector.load %arg12[%c0_29, %c0_30] : memref<32x64xf32, #tpu.memory_space<vmem>>, vector<32x64xf32>
    %c0_31 = arith.constant 0 : index
    %c0_32 = arith.constant 0 : index
    %49 = vector.load %arg13[%c0_31, %c0_32] : memref<1x64xf32, #tpu.memory_space<vmem>>, vector<1x64xf32>
    %cst_33 = arith.constant dense<0.000000e+00> : vector<32x64xf32>
    %50 = tpu.matmul %6, %48, %cst_33 {dimension_numbers = #tpu.dot_dimension_numbers<[1], [0], [0], [1], [0, 0, 1, 1], [], []>} : vector<32x32xf32>, vector<32x64xf32>, vector<32x64xf32> -> vector<32x64xf32>
    %51 = vector.broadcast %49 : vector<1x64xf32> to vector<32x64xf32>
    %52 = arith.addf %50, %51 : vector<32x64xf32>
    %53 = vector.extract_strided_slice %52 {offsets = [0, 0], sizes = [32, 32], strides = [1, 1]} : vector<32x64xf32> to vector<32x32xf32>
    %54 = vector.extract_strided_slice %52 {offsets = [0, 32], sizes = [32, 32], strides = [1, 1]} : vector<32x64xf32> to vector<32x32xf32>
    %55 = vector.extract_strided_slice %47 {offsets = [0, 0], sizes = [1, 32], strides = [1, 1]} : vector<2x32xf32> to vector<1x32xf32>
    %56 = vector.extract_strided_slice %53 {offsets = [0, 0], sizes = [16, 32], strides = [1, 1]} : vector<32x32xf32> to vector<16x32xf32>
    %57 = vector.extract_strided_slice %54 {offsets = [0, 0], sizes = [16, 32], strides = [1, 1]} : vector<32x32xf32> to vector<16x32xf32>
    %58 = vector.extract_strided_slice %55 {offsets = [0, 0], sizes = [1, 8], strides = [1, 1]} : vector<1x32xf32> to vector<1x8xf32>
    %59 = vector.extract_strided_slice %56 {offsets = [0, 0], sizes = [16, 8], strides = [1, 1]} : vector<16x32xf32> to vector<16x8xf32>
    %60 = vector.extract_strided_slice %57 {offsets = [0, 0], sizes = [16, 8], strides = [1, 1]} : vector<16x32xf32> to vector<16x8xf32>
    %cst_34 = arith.constant dense<0.000000e+00> : vector<1x16xf32>
    %61 = tpu.matmul %58, %59, %cst_34 {dimension_numbers = #tpu.dot_dimension_numbers<[1], [1], [0], [0], [0, 0, 1, 0], [], []>} : vector<1x8xf32>, vector<16x8xf32>, vector<1x16xf32> -> vector<1x16xf32>
    %cst_35 = arith.constant 0.353553385 : f32
    %62 = vector.broadcast %cst_35 : f32 to vector<1x16xf32>
    %63 = arith.mulf %61, %62 : vector<1x16xf32>
    %cst_36 = arith.constant dense<0xFF800000> : vector<1xf32>
    %64 = vector.multi_reduction <maximumf>, %63, %cst_36 [1] : vector<1x16xf32> to vector<1xf32>
    %65 = vector.shape_cast %64 : vector<1xf32> to vector<1x1xf32>
    %66 = vector.broadcast %65 : vector<1x1xf32> to vector<1x16xf32>
    %67 = arith.subf %63, %66 : vector<1x16xf32>
    %68 = math.exp %67 : vector<1x16xf32>
    %cst_37 = arith.constant dense<0.000000e+00> : vector<1xf32>
    %69 = vector.multi_reduction <add>, %68, %cst_37 [1] : vector<1x16xf32> to vector<1xf32>
    %70 = vector.shape_cast %69 : vector<1xf32> to vector<1x1xf32>
    %71 = tpu.reciprocal %70 {approx = true} : vector<1x1xf32> -> vector<1x1xf32>
    %72 = vector.broadcast %71 : vector<1x1xf32> to vector<1x16xf32>
    %73 = arith.mulf %68, %72 : vector<1x16xf32>
    %cst_38 = arith.constant dense<0.000000e+00> : vector<1x8xf32>
    %74 = tpu.matmul %73, %60, %cst_38 {dimension_numbers = #tpu.dot_dimension_numbers<[1], [0], [0], [1], [0, 0, 1, 1], [], []>} : vector<1x16xf32>, vector<16x8xf32>, vector<1x8xf32> -> vector<1x8xf32>
    %75 = vector.extract_strided_slice %55 {offsets = [0, 8], sizes = [1, 8], strides = [1, 1]} : vector<1x32xf32> to vector<1x8xf32>
    %76 = vector.extract_strided_slice %56 {offsets = [0, 8], sizes = [16, 8], strides = [1, 1]} : vector<16x32xf32> to vector<16x8xf32>
    %77 = vector.extract_strided_slice %57 {offsets = [0, 8], sizes = [16, 8], strides = [1, 1]} : vector<16x32xf32> to vector<16x8xf32>
    %cst_39 = arith.constant dense<0.000000e+00> : vector<1x16xf32>
    %78 = tpu.matmul %75, %76, %cst_39 {dimension_numbers = #tpu.dot_dimension_numbers<[1], [1], [0], [0], [0, 0, 1, 0], [], []>} : vector<1x8xf32>, vector<16x8xf32>, vector<1x16xf32> -> vector<1x16xf32>
    %cst_40 = arith.constant 0.353553385 : f32
    %79 = vector.broadcast %cst_40 : f32 to vector<1x16xf32>
    %80 = arith.mulf %78, %79 : vector<1x16xf32>
    %cst_41 = arith.constant dense<0xFF800000> : vector<1xf32>
    %81 = vector.multi_reduction <maximumf>, %80, %cst_41 [1] : vector<1x16xf32> to vector<1xf32>
    %82 = vector.shape_cast %81 : vector<1xf32> to vector<1x1xf32>
    %83 = vector.broadcast %82 : vector<1x1xf32> to vector<1x16xf32>
    %84 = arith.subf %80, %83 : vector<1x16xf32>
    %85 = math.exp %84 : vector<1x16xf32>
    %cst_42 = arith.constant dense<0.000000e+00> : vector<1xf32>
    %86 = vector.multi_reduction <add>, %85, %cst_42 [1] : vector<1x16xf32> to vector<1xf32>
    %87 = vector.shape_cast %86 : vector<1xf32> to vector<1x1xf32>
    %88 = tpu.reciprocal %87 {approx = true} : vector<1x1xf32> -> vector<1x1xf32>
    %89 = vector.broadcast %88 : vector<1x1xf32> to vector<1x16xf32>
    %90 = arith.mulf %85, %89 : vector<1x16xf32>
    %cst_43 = arith.constant dense<0.000000e+00> : vector<1x8xf32>
    %91 = tpu.matmul %90, %77, %cst_43 {dimension_numbers = #tpu.dot_dimension_numbers<[1], [0], [0], [1], [0, 0, 1, 1], [], []>} : vector<1x16xf32>, vector<16x8xf32>, vector<1x8xf32> -> vector<1x8xf32>
    %92 = vector.extract_strided_slice %55 {offsets = [0, 16], sizes = [1, 8], strides = [1, 1]} : vector<1x32xf32> to vector<1x8xf32>
    %93 = vector.extract_strided_slice %56 {offsets = [0, 16], sizes = [16, 8], strides = [1, 1]} : vector<16x32xf32> to vector<16x8xf32>
    %94 = vector.extract_strided_slice %57 {offsets = [0, 16], sizes = [16, 8], strides = [1, 1]} : vector<16x32xf32> to vector<16x8xf32>
    %cst_44 = arith.constant dense<0.000000e+00> : vector<1x16xf32>
    %95 = tpu.matmul %92, %93, %cst_44 {dimension_numbers = #tpu.dot_dimension_numbers<[1], [1], [0], [0], [0, 0, 1, 0], [], []>} : vector<1x8xf32>, vector<16x8xf32>, vector<1x16xf32> -> vector<1x16xf32>
    %cst_45 = arith.constant 0.353553385 : f32
    %96 = vector.broadcast %cst_45 : f32 to vector<1x16xf32>
    %97 = arith.mulf %95, %96 : vector<1x16xf32>
    %cst_46 = arith.constant dense<0xFF800000> : vector<1xf32>
    %98 = vector.multi_reduction <maximumf>, %97, %cst_46 [1] : vector<1x16xf32> to vector<1xf32>
    %99 = vector.shape_cast %98 : vector<1xf32> to vector<1x1xf32>
    %100 = vector.broadcast %99 : vector<1x1xf32> to vector<1x16xf32>
    %101 = arith.subf %97, %100 : vector<1x16xf32>
    %102 = math.exp %101 : vector<1x16xf32>
    %cst_47 = arith.constant dense<0.000000e+00> : vector<1xf32>
    %103 = vector.multi_reduction <add>, %102, %cst_47 [1] : vector<1x16xf32> to vector<1xf32>
    %104 = vector.shape_cast %103 : vector<1xf32> to vector<1x1xf32>
    %105 = tpu.reciprocal %104 {approx = true} : vector<1x1xf32> -> vector<1x1xf32>
    %106 = vector.broadcast %105 : vector<1x1xf32> to vector<1x16xf32>
    %107 = arith.mulf %102, %106 : vector<1x16xf32>
    %cst_48 = arith.constant dense<0.000000e+00> : vector<1x8xf32>
    %108 = tpu.matmul %107, %94, %cst_48 {dimension_numbers = #tpu.dot_dimension_numbers<[1], [0], [0], [1], [0, 0, 1, 1], [], []>} : vector<1x16xf32>, vector<16x8xf32>, vector<1x8xf32> -> vector<1x8xf32>
    %109 = vector.extract_strided_slice %55 {offsets = [0, 24], sizes = [1, 8], strides = [1, 1]} : vector<1x32xf32> to vector<1x8xf32>
    %110 = vector.extract_strided_slice %56 {offsets = [0, 24], sizes = [16, 8], strides = [1, 1]} : vector<16x32xf32> to vector<16x8xf32>
    %111 = vector.extract_strided_slice %57 {offsets = [0, 24], sizes = [16, 8], strides = [1, 1]} : vector<16x32xf32> to vector<16x8xf32>
    %cst_49 = arith.constant dense<0.000000e+00> : vector<1x16xf32>
    %112 = tpu.matmul %109, %110, %cst_49 {dimension_numbers = #tpu.dot_dimension_numbers<[1], [1], [0], [0], [0, 0, 1, 0], [], []>} : vector<1x8xf32>, vector<16x8xf32>, vector<1x16xf32> -> vector<1x16xf32>
    %cst_50 = arith.constant 0.353553385 : f32
    %113 = vector.broadcast %cst_50 : f32 to vector<1x16xf32>
    %114 = arith.mulf %112, %113 : vector<1x16xf32>
    %cst_51 = arith.constant dense<0xFF800000> : vector<1xf32>
    %115 = vector.multi_reduction <maximumf>, %114, %cst_51 [1] : vector<1x16xf32> to vector<1xf32>
    %116 = vector.shape_cast %115 : vector<1xf32> to vector<1x1xf32>
    %117 = vector.broadcast %116 : vector<1x1xf32> to vector<1x16xf32>
    %118 = arith.subf %114, %117 : vector<1x16xf32>
    %119 = math.exp %118 : vector<1x16xf32>
    %cst_52 = arith.constant dense<0.000000e+00> : vector<1xf32>
    %120 = vector.multi_reduction <add>, %119, %cst_52 [1] : vector<1x16xf32> to vector<1xf32>
    %121 = vector.shape_cast %120 : vector<1xf32> to vector<1x1xf32>
    %122 = tpu.reciprocal %121 {approx = true} : vector<1x1xf32> -> vector<1x1xf32>
    %123 = vector.broadcast %122 : vector<1x1xf32> to vector<1x16xf32>
    %124 = arith.mulf %119, %123 : vector<1x16xf32>
    %cst_53 = arith.constant dense<0.000000e+00> : vector<1x8xf32>
    %125 = tpu.matmul %124, %111, %cst_53 {dimension_numbers = #tpu.dot_dimension_numbers<[1], [0], [0], [1], [0, 0, 1, 1], [], []>} : vector<1x16xf32>, vector<16x8xf32>, vector<1x8xf32> -> vector<1x8xf32>
    %126 = tpu.concatenate %74, %91, %108, %125 in 1 : vector<1x8xf32>, vector<1x8xf32>, vector<1x8xf32>, vector<1x8xf32> -> vector<1x32xf32>
    %127 = vector.extract_strided_slice %47 {offsets = [1, 0], sizes = [1, 32], strides = [1, 1]} : vector<2x32xf32> to vector<1x32xf32>
    %128 = vector.extract_strided_slice %53 {offsets = [16, 0], sizes = [16, 32], strides = [1, 1]} : vector<32x32xf32> to vector<16x32xf32>
    %129 = vector.extract_strided_slice %54 {offsets = [16, 0], sizes = [16, 32], strides = [1, 1]} : vector<32x32xf32> to vector<16x32xf32>
    %130 = vector.extract_strided_slice %127 {offsets = [0, 0], sizes = [1, 8], strides = [1, 1]} : vector<1x32xf32> to vector<1x8xf32>
    %131 = vector.extract_strided_slice %128 {offsets = [0, 0], sizes = [16, 8], strides = [1, 1]} : vector<16x32xf32> to vector<16x8xf32>
    %132 = vector.extract_strided_slice %129 {offsets = [0, 0], sizes = [16, 8], strides = [1, 1]} : vector<16x32xf32> to vector<16x8xf32>
    %cst_54 = arith.constant dense<0.000000e+00> : vector<1x16xf32>
    %133 = tpu.matmul %130, %131, %cst_54 {dimension_numbers = #tpu.dot_dimension_numbers<[1], [1], [0], [0], [0, 0, 1, 0], [], []>} : vector<1x8xf32>, vector<16x8xf32>, vector<1x16xf32> -> vector<1x16xf32>
    %cst_55 = arith.constant 0.353553385 : f32
    %134 = vector.broadcast %cst_55 : f32 to vector<1x16xf32>
    %135 = arith.mulf %133, %134 : vector<1x16xf32>
    %cst_56 = arith.constant dense<0xFF800000> : vector<1xf32>
    %136 = vector.multi_reduction <maximumf>, %135, %cst_56 [1] : vector<1x16xf32> to vector<1xf32>
    %137 = vector.shape_cast %136 : vector<1xf32> to vector<1x1xf32>
    %138 = vector.broadcast %137 : vector<1x1xf32> to vector<1x16xf32>
    %139 = arith.subf %135, %138 : vector<1x16xf32>
    %140 = math.exp %139 : vector<1x16xf32>
    %cst_57 = arith.constant dense<0.000000e+00> : vector<1xf32>
    %141 = vector.multi_reduction <add>, %140, %cst_57 [1] : vector<1x16xf32> to vector<1xf32>
    %142 = vector.shape_cast %141 : vector<1xf32> to vector<1x1xf32>
    %143 = tpu.reciprocal %142 {approx = true} : vector<1x1xf32> -> vector<1x1xf32>
    %144 = vector.broadcast %143 : vector<1x1xf32> to vector<1x16xf32>
    %145 = arith.mulf %140, %144 : vector<1x16xf32>
    %cst_58 = arith.constant dense<0.000000e+00> : vector<1x8xf32>
    %146 = tpu.matmul %145, %132, %cst_58 {dimension_numbers = #tpu.dot_dimension_numbers<[1], [0], [0], [1], [0, 0, 1, 1], [], []>} : vector<1x16xf32>, vector<16x8xf32>, vector<1x8xf32> -> vector<1x8xf32>
    %147 = vector.extract_strided_slice %127 {offsets = [0, 8], sizes = [1, 8], strides = [1, 1]} : vector<1x32xf32> to vector<1x8xf32>
    %148 = vector.extract_strided_slice %128 {offsets = [0, 8], sizes = [16, 8], strides = [1, 1]} : vector<16x32xf32> to vector<16x8xf32>
    %149 = vector.extract_strided_slice %129 {offsets = [0, 8], sizes = [16, 8], strides = [1, 1]} : vector<16x32xf32> to vector<16x8xf32>
    %cst_59 = arith.constant dense<0.000000e+00> : vector<1x16xf32>
    %150 = tpu.matmul %147, %148, %cst_59 {dimension_numbers = #tpu.dot_dimension_numbers<[1], [1], [0], [0], [0, 0, 1, 0], [], []>} : vector<1x8xf32>, vector<16x8xf32>, vector<1x16xf32> -> vector<1x16xf32>
    %cst_60 = arith.constant 0.353553385 : f32
    %151 = vector.broadcast %cst_60 : f32 to vector<1x16xf32>
    %152 = arith.mulf %150, %151 : vector<1x16xf32>
    %cst_61 = arith.constant dense<0xFF800000> : vector<1xf32>
    %153 = vector.multi_reduction <maximumf>, %152, %cst_61 [1] : vector<1x16xf32> to vector<1xf32>
    %154 = vector.shape_cast %153 : vector<1xf32> to vector<1x1xf32>
    %155 = vector.broadcast %154 : vector<1x1xf32> to vector<1x16xf32>
    %156 = arith.subf %152, %155 : vector<1x16xf32>
    %157 = math.exp %156 : vector<1x16xf32>
    %cst_62 = arith.constant dense<0.000000e+00> : vector<1xf32>
    %158 = vector.multi_reduction <add>, %157, %cst_62 [1] : vector<1x16xf32> to vector<1xf32>
    %159 = vector.shape_cast %158 : vector<1xf32> to vector<1x1xf32>
    %160 = tpu.reciprocal %159 {approx = true} : vector<1x1xf32> -> vector<1x1xf32>
    %161 = vector.broadcast %160 : vector<1x1xf32> to vector<1x16xf32>
    %162 = arith.mulf %157, %161 : vector<1x16xf32>
    %cst_63 = arith.constant dense<0.000000e+00> : vector<1x8xf32>
    %163 = tpu.matmul %162, %149, %cst_63 {dimension_numbers = #tpu.dot_dimension_numbers<[1], [0], [0], [1], [0, 0, 1, 1], [], []>} : vector<1x16xf32>, vector<16x8xf32>, vector<1x8xf32> -> vector<1x8xf32>
    %164 = vector.extract_strided_slice %127 {offsets = [0, 16], sizes = [1, 8], strides = [1, 1]} : vector<1x32xf32> to vector<1x8xf32>
    %165 = vector.extract_strided_slice %128 {offsets = [0, 16], sizes = [16, 8], strides = [1, 1]} : vector<16x32xf32> to vector<16x8xf32>
    %166 = vector.extract_strided_slice %129 {offsets = [0, 16], sizes = [16, 8], strides = [1, 1]} : vector<16x32xf32> to vector<16x8xf32>
    %cst_64 = arith.constant dense<0.000000e+00> : vector<1x16xf32>
    %167 = tpu.matmul %164, %165, %cst_64 {dimension_numbers = #tpu.dot_dimension_numbers<[1], [1], [0], [0], [0, 0, 1, 0], [], []>} : vector<1x8xf32>, vector<16x8xf32>, vector<1x16xf32> -> vector<1x16xf32>
    %cst_65 = arith.constant 0.353553385 : f32
    %168 = vector.broadcast %cst_65 : f32 to vector<1x16xf32>
    %169 = arith.mulf %167, %168 : vector<1x16xf32>
    %cst_66 = arith.constant dense<0xFF800000> : vector<1xf32>
    %170 = vector.multi_reduction <maximumf>, %169, %cst_66 [1] : vector<1x16xf32> to vector<1xf32>
    %171 = vector.shape_cast %170 : vector<1xf32> to vector<1x1xf32>
    %172 = vector.broadcast %171 : vector<1x1xf32> to vector<1x16xf32>
    %173 = arith.subf %169, %172 : vector<1x16xf32>
    %174 = math.exp %173 : vector<1x16xf32>
    %cst_67 = arith.constant dense<0.000000e+00> : vector<1xf32>
    %175 = vector.multi_reduction <add>, %174, %cst_67 [1] : vector<1x16xf32> to vector<1xf32>
    %176 = vector.shape_cast %175 : vector<1xf32> to vector<1x1xf32>
    %177 = tpu.reciprocal %176 {approx = true} : vector<1x1xf32> -> vector<1x1xf32>
    %178 = vector.broadcast %177 : vector<1x1xf32> to vector<1x16xf32>
    %179 = arith.mulf %174, %178 : vector<1x16xf32>
    %cst_68 = arith.constant dense<0.000000e+00> : vector<1x8xf32>
    %180 = tpu.matmul %179, %166, %cst_68 {dimension_numbers = #tpu.dot_dimension_numbers<[1], [0], [0], [1], [0, 0, 1, 1], [], []>} : vector<1x16xf32>, vector<16x8xf32>, vector<1x8xf32> -> vector<1x8xf32>
    %181 = vector.extract_strided_slice %127 {offsets = [0, 24], sizes = [1, 8], strides = [1, 1]} : vector<1x32xf32> to vector<1x8xf32>
    %182 = vector.extract_strided_slice %128 {offsets = [0, 24], sizes = [16, 8], strides = [1, 1]} : vector<16x32xf32> to vector<16x8xf32>
    %183 = vector.extract_strided_slice %129 {offsets = [0, 24], sizes = [16, 8], strides = [1, 1]} : vector<16x32xf32> to vector<16x8xf32>
    %cst_69 = arith.constant dense<0.000000e+00> : vector<1x16xf32>
    %184 = tpu.matmul %181, %182, %cst_69 {dimension_numbers = #tpu.dot_dimension_numbers<[1], [1], [0], [0], [0, 0, 1, 0], [], []>} : vector<1x8xf32>, vector<16x8xf32>, vector<1x16xf32> -> vector<1x16xf32>
    %cst_70 = arith.constant 0.353553385 : f32
    %185 = vector.broadcast %cst_70 : f32 to vector<1x16xf32>
    %186 = arith.mulf %184, %185 : vector<1x16xf32>
    %cst_71 = arith.constant dense<0xFF800000> : vector<1xf32>
    %187 = vector.multi_reduction <maximumf>, %186, %cst_71 [1] : vector<1x16xf32> to vector<1xf32>
    %188 = vector.shape_cast %187 : vector<1xf32> to vector<1x1xf32>
    %189 = vector.broadcast %188 : vector<1x1xf32> to vector<1x16xf32>
    %190 = arith.subf %186, %189 : vector<1x16xf32>
    %191 = math.exp %190 : vector<1x16xf32>
    %cst_72 = arith.constant dense<0.000000e+00> : vector<1xf32>
    %192 = vector.multi_reduction <add>, %191, %cst_72 [1] : vector<1x16xf32> to vector<1xf32>
    %193 = vector.shape_cast %192 : vector<1xf32> to vector<1x1xf32>
    %194 = tpu.reciprocal %193 {approx = true} : vector<1x1xf32> -> vector<1x1xf32>
    %195 = vector.broadcast %194 : vector<1x1xf32> to vector<1x16xf32>
    %196 = arith.mulf %191, %195 : vector<1x16xf32>
    %cst_73 = arith.constant dense<0.000000e+00> : vector<1x8xf32>
    %197 = tpu.matmul %196, %183, %cst_73 {dimension_numbers = #tpu.dot_dimension_numbers<[1], [0], [0], [1], [0, 0, 1, 1], [], []>} : vector<1x16xf32>, vector<16x8xf32>, vector<1x8xf32> -> vector<1x8xf32>
    %198 = tpu.concatenate %146, %163, %180, %197 in 1 : vector<1x8xf32>, vector<1x8xf32>, vector<1x8xf32>, vector<1x8xf32> -> vector<1x32xf32>
    %199 = tpu.concatenate %126, %198 in 0 : vector<1x32xf32>, vector<1x32xf32> -> vector<2x32xf32>
    %c0_74 = arith.constant 0 : index
    %c0_75 = arith.constant 0 : index
    %200 = vector.load %arg14[%c0_74, %c0_75] : memref<32x32xf32, #tpu.memory_space<vmem>>, vector<32x32xf32>
    %c0_76 = arith.constant 0 : index
    %c0_77 = arith.constant 0 : index
    %201 = vector.load %arg15[%c0_76, %c0_77] : memref<1x32xf32, #tpu.memory_space<vmem>>, vector<1x32xf32>
    %cst_78 = arith.constant dense<0.000000e+00> : vector<2x32xf32>
    %202 = tpu.matmul %199, %200, %cst_78 {dimension_numbers = #tpu.dot_dimension_numbers<[1], [0], [0], [1], [0, 0, 1, 1], [], []>} : vector<2x32xf32>, vector<32x32xf32>, vector<2x32xf32> -> vector<2x32xf32>
    %203 = vector.broadcast %201 : vector<1x32xf32> to vector<2x32xf32>
    %204 = arith.addf %202, %203 : vector<2x32xf32>
    %205 = arith.addf %42, %204 : vector<2x32xf32>
    %c0_79 = arith.constant 0 : index
    %c0_80 = arith.constant 0 : index
    %206 = vector.load %arg16[%c0_79, %c0_80] : memref<1x32xf32, #tpu.memory_space<vmem>>, vector<1x32xf32>
    %c0_81 = arith.constant 0 : index
    %c0_82 = arith.constant 0 : index
    %207 = vector.load %arg17[%c0_81, %c0_82] : memref<1x32xf32, #tpu.memory_space<vmem>>, vector<1x32xf32>
    %cst_83 = arith.constant dense<0.000000e+00> : vector<2xf32>
    %208 = vector.multi_reduction <add>, %205, %cst_83 [1] : vector<2x32xf32> to vector<2xf32>
    %209 = vector.shape_cast %208 : vector<2xf32> to vector<2x1xf32>
    %cst_84 = arith.constant 3.200000e+01 : f32
    %210 = vector.broadcast %cst_84 : f32 to vector<2x1xf32>
    %211 = arith.divf %209, %210 : vector<2x1xf32>
    %212 = vector.broadcast %211 : vector<2x1xf32> to vector<2x32xf32>
    %213 = arith.subf %205, %212 : vector<2x32xf32>
    %214 = arith.mulf %213, %213 : vector<2x32xf32>
    %cst_85 = arith.constant dense<0.000000e+00> : vector<2xf32>
    %215 = vector.multi_reduction <add>, %214, %cst_85 [1] : vector<2x32xf32> to vector<2xf32>
    %216 = vector.shape_cast %215 : vector<2xf32> to vector<2x1xf32>
    %cst_86 = arith.constant 3.200000e+01 : f32
    %217 = vector.broadcast %cst_86 : f32 to vector<2x1xf32>
    %218 = arith.divf %216, %217 : vector<2x1xf32>
    %219 = vector.broadcast %211 : vector<2x1xf32> to vector<2x32xf32>
    %220 = arith.subf %205, %219 : vector<2x32xf32>
    %cst_87 = arith.constant 9.99999974E-6 : f32
    %221 = vector.broadcast %cst_87 : f32 to vector<2x1xf32>
    %222 = arith.addf %218, %221 : vector<2x1xf32>
    %223 = math.rsqrt %222 : vector<2x1xf32>
    %224 = vector.broadcast %223 : vector<2x1xf32> to vector<2x32xf32>
    %225 = arith.mulf %220, %224 : vector<2x32xf32>
    %226 = vector.broadcast %206 : vector<1x32xf32> to vector<2x32xf32>
    %227 = arith.mulf %225, %226 : vector<2x32xf32>
    %228 = vector.broadcast %207 : vector<1x32xf32> to vector<2x32xf32>
    %229 = arith.addf %227, %228 : vector<2x32xf32>
    %c0_88 = arith.constant 0 : index
    %c0_89 = arith.constant 0 : index
    %230 = vector.load %arg18[%c0_88, %c0_89] : memref<32x64xf32, #tpu.memory_space<vmem>>, vector<32x64xf32>
    %c0_90 = arith.constant 0 : index
    %c0_91 = arith.constant 0 : index
    %231 = vector.load %arg19[%c0_90, %c0_91] : memref<1x64xf32, #tpu.memory_space<vmem>>, vector<1x64xf32>
    %cst_92 = arith.constant dense<0.000000e+00> : vector<2x64xf32>
    %232 = tpu.matmul %229, %230, %cst_92 {dimension_numbers = #tpu.dot_dimension_numbers<[1], [0], [0], [1], [0, 0, 1, 1], [], []>} : vector<2x32xf32>, vector<32x64xf32>, vector<2x64xf32> -> vector<2x64xf32>
    %233 = vector.broadcast %231 : vector<1x64xf32> to vector<2x64xf32>
    %234 = arith.addf %232, %233 : vector<2x64xf32>
    %cst_93 = arith.constant 0.000000e+00 : f32
    %235 = vector.broadcast %cst_93 : f32 to vector<2x64xf32>
    %236 = arith.maximumf %234, %235 : vector<2x64xf32>
    %c0_94 = arith.constant 0 : index
    %c0_95 = arith.constant 0 : index
    %237 = vector.load %arg20[%c0_94, %c0_95] : memref<64x32xf32, #tpu.memory_space<vmem>>, vector<64x32xf32>
    %c0_96 = arith.constant 0 : index
    %c0_97 = arith.constant 0 : index
    %238 = vector.load %arg21[%c0_96, %c0_97] : memref<1x32xf32, #tpu.memory_space<vmem>>, vector<1x32xf32>
    %cst_98 = arith.constant dense<0.000000e+00> : vector<2x32xf32>
    %239 = tpu.matmul %236, %237, %cst_98 {dimension_numbers = #tpu.dot_dimension_numbers<[1], [0], [0], [1], [0, 0, 1, 1], [], []>} : vector<2x64xf32>, vector<64x32xf32>, vector<2x32xf32> -> vector<2x32xf32>
    %240 = vector.broadcast %238 : vector<1x32xf32> to vector<2x32xf32>
    %241 = arith.addf %239, %240 : vector<2x32xf32>
    %242 = arith.addf %229, %241 : vector<2x32xf32>
    %c0_99 = arith.constant 0 : index
    %c0_100 = arith.constant 0 : index
    %243 = vector.load %arg22[%c0_99, %c0_100] : memref<1x32xf32, #tpu.memory_space<vmem>>, vector<1x32xf32>
    %c0_101 = arith.constant 0 : index
    %c0_102 = arith.constant 0 : index
    %244 = vector.load %arg23[%c0_101, %c0_102] : memref<1x32xf32, #tpu.memory_space<vmem>>, vector<1x32xf32>
    %cst_103 = arith.constant dense<0.000000e+00> : vector<2xf32>
    %245 = vector.multi_reduction <add>, %242, %cst_103 [1] : vector<2x32xf32> to vector<2xf32>
    %246 = vector.shape_cast %245 : vector<2xf32> to vector<2x1xf32>
    %cst_104 = arith.constant 3.200000e+01 : f32
    %247 = vector.broadcast %cst_104 : f32 to vector<2x1xf32>
    %248 = arith.divf %246, %247 : vector<2x1xf32>
    %249 = vector.broadcast %248 : vector<2x1xf32> to vector<2x32xf32>
    %250 = arith.subf %242, %249 : vector<2x32xf32>
    %251 = arith.mulf %250, %250 : vector<2x32xf32>
    %cst_105 = arith.constant dense<0.000000e+00> : vector<2xf32>
    %252 = vector.multi_reduction <add>, %251, %cst_105 [1] : vector<2x32xf32> to vector<2xf32>
    %253 = vector.shape_cast %252 : vector<2xf32> to vector<2x1xf32>
    %cst_106 = arith.constant 3.200000e+01 : f32
    %254 = vector.broadcast %cst_106 : f32 to vector<2x1xf32>
    %255 = arith.divf %253, %254 : vector<2x1xf32>
    %256 = vector.broadcast %248 : vector<2x1xf32> to vector<2x32xf32>
    %257 = arith.subf %242, %256 : vector<2x32xf32>
    %cst_107 = arith.constant 9.99999974E-6 : f32
    %258 = vector.broadcast %cst_107 : f32 to vector<2x1xf32>
    %259 = arith.addf %255, %258 : vector<2x1xf32>
    %260 = math.rsqrt %259 : vector<2x1xf32>
    %261 = vector.broadcast %260 : vector<2x1xf32> to vector<2x32xf32>
    %262 = arith.mulf %257, %261 : vector<2x32xf32>
    %263 = vector.broadcast %243 : vector<1x32xf32> to vector<2x32xf32>
    %264 = arith.mulf %262, %263 : vector<2x32xf32>
    %265 = vector.broadcast %244 : vector<1x32xf32> to vector<2x32xf32>
    %266 = arith.addf %264, %265 : vector<2x32xf32>
    %c0_108 = arith.constant 0 : index
    %c0_109 = arith.constant 0 : index
    %267 = vector.load %arg24[%c0_108, %c0_109] : memref<32x32xf32, #tpu.memory_space<vmem>>, vector<32x32xf32>
    %c0_110 = arith.constant 0 : index
    %c0_111 = arith.constant 0 : index
    %268 = vector.load %arg25[%c0_110, %c0_111] : memref<1x32xf32, #tpu.memory_space<vmem>>, vector<1x32xf32>
    %cst_112 = arith.constant dense<0.000000e+00> : vector<2x32xf32>
    %269 = tpu.matmul %266, %267, %cst_112 {dimension_numbers = #tpu.dot_dimension_numbers<[1], [0], [0], [1], [0, 0, 1, 1], [], []>} : vector<2x32xf32>, vector<32x32xf32>, vector<2x32xf32> -> vector<2x32xf32>
    %270 = vector.broadcast %268 : vector<1x32xf32> to vector<2x32xf32>
    %271 = arith.addf %269, %270 : vector<2x32xf32>
    %c0_113 = arith.constant 0 : index
    %c0_114 = arith.constant 0 : index
    %272 = vector.load %arg26[%c0_113, %c0_114] : memref<2x32xf32, #tpu.memory_space<vmem>>, vector<2x32xf32>
    tpu.vector_store %arg26[%c0_113, %c0_114], %271 {strides = array<i32>} : memref<2x32xf32, #tpu.memory_space<vmem>>, vector<2x32xf32>,
    return
  }
  func.func @transform_0(%arg0: i32) -> (i32, i32) {
    %c0_i32 = arith.constant 0 : i32
    %c0_i32_0 = arith.constant 0 : i32
    %c0_i32_1 = arith.constant 0 : i32
    return %c0_i32, %c0_i32_0 : i32, i32
  }
  func.func @transform_1(%arg0: i32) -> (i32, i32) {
    %c0_i32 = arith.constant 0 : i32
    %c0_i32_0 = arith.constant 0 : i32
    %c0_i32_1 = arith.constant 0 : i32
    return %c0_i32, %c0_i32_0 : i32, i32
  }
  func.func @transform_2(%arg0: i32) -> (i32, i32) {
    %c0_i32 = arith.constant 0 : i32
    %c0_i32_0 = arith.constant 0 : i32
    %c0_i32_1 = arith.constant 0 : i32
    return %c0_i32, %c0_i32_0 : i32, i32
  }
  func.func @transform_3(%arg0: i32) -> (i32, i32) {
    %c0_i32 = arith.constant 0 : i32
    %c0_i32_0 = arith.constant 0 : i32
    %c0_i32_1 = arith.constant 0 : i32
    return %c0_i32, %c0_i32_0 : i32, i32
  }
  func.func @transform_4(%arg0: i32) -> (i32, i32) {
    %c0_i32 = arith.constant 0 : i32
    %c0_i32_0 = arith.constant 0 : i32
    %c0_i32_1 = arith.constant 0 : i32
    return %c0_i32, %c0_i32_0 : i32, i32
  }
  func.func @transform_5(%arg0: i32) -> (i32, i32) {
    %c0_i32 = arith.constant 0 : i32
    %c0_i32_0 = arith.constant 0 : i32
    %c0_i32_1 = arith.constant 0 : i32
    return %c0_i32, %c0_i32_0 : i32, i32
  }
  func.func @transform_6(%arg0: i32) -> (i32, i32) {
    %c0_i32 = arith.constant 0 : i32
    %c0_i32_0 = arith.constant 0 : i32
    %c0_i32_1 = arith.constant 0 : i32
    return %c0_i32, %c0_i32_0 : i32, i32
  }
  func.func @transform_7(%arg0: i32) -> (i32, i32) {
    %c0_i32 = arith.constant 0 : i32
    %c0_i32_0 = arith.constant 0 : i32
    %c0_i32_1 = arith.constant 0 : i32
    return %c0_i32, %c0_i32_0 : i32, i32
  }
  func.func @transform_8(%arg0: i32) -> (i32, i32) {
    %c0_i32 = arith.constant 0 : i32
    %c0_i32_0 = arith.constant 0 : i32
    %c0_i32_1 = arith.constant 0 : i32
    return %c0_i32, %c0_i32_0 : i32, i32
  }
  func.func @transform_9(%arg0: i32) -> (i32, i32) {
    %c0_i32 = arith.constant 0 : i32
    %c0_i32_0 = arith.constant 0 : i32
    %c0_i32_1 = arith.constant 0 : i32
    return %c0_i32, %c0_i32_0 : i32, i32
  }
  func.func @transform_10(%arg0: i32) -> (i32, i32) {
    %c0_i32 = arith.constant 0 : i32
    %c0_i32_0 = arith.constant 0 : i32
    %c0_i32_1 = arith.constant 0 : i32
    return %c0_i32, %c0_i32_0 : i32, i32
  }
  func.func @transform_11(%arg0: i32) -> (i32, i32) {
    %c0_i32 = arith.constant 0 : i32
    %c0_i32_0 = arith.constant 0 : i32
    %c0_i32_1 = arith.constant 0 : i32
    return %c0_i32, %c0_i32_0 : i32, i32
  }
  func.func @transform_12(%arg0: i32) -> (i32, i32) {
    %c0_i32 = arith.constant 0 : i32
    %c0_i32_0 = arith.constant 0 : i32
    %c0_i32_1 = arith.constant 0 : i32
    return %c0_i32, %c0_i32_0 : i32, i32
  }
  func.func @transform_13(%arg0: i32) -> (i32, i32) {
    %c0_i32 = arith.constant 0 : i32
    %c0_i32_0 = arith.constant 0 : i32
    %c0_i32_1 = arith.constant 0 : i32
    return %c0_i32, %c0_i32_0 : i32, i32
  }
  func.func @transform_14(%arg0: i32) -> (i32, i32) {
    %c0_i32 = arith.constant 0 : i32
    %c0_i32_0 = arith.constant 0 : i32
    %c0_i32_1 = arith.constant 0 : i32
    return %c0_i32, %c0_i32_0 : i32, i32
  }
  func.func @transform_15(%arg0: i32) -> (i32, i32) {
    %c0_i32 = arith.constant 0 : i32
    %c0_i32_0 = arith.constant 0 : i32
    %c0_i32_1 = arith.constant 0 : i32
    return %c0_i32, %c0_i32_0 : i32, i32
  }
  func.func @transform_16(%arg0: i32) -> (i32, i32) {
    %c0_i32 = arith.constant 0 : i32
    %c0_i32_0 = arith.constant 0 : i32
    %c0_i32_1 = arith.constant 0 : i32
    return %c0_i32, %c0_i32_0 : i32, i32
  }
  func.func @transform_17(%arg0: i32) -> (i32, i32) {
    %c0_i32 = arith.constant 0 : i32
    %c0_i32_0 = arith.constant 0 : i32
    %c0_i32_1 = arith.constant 0 : i32
    return %c0_i32, %c0_i32_0 : i32, i32
  }
  func.func @transform_18(%arg0: i32) -> (i32, i32) {
    %c0_i32 = arith.constant 0 : i32
    %c0_i32_0 = arith.constant 0 : i32
    %c0_i32_1 = arith.constant 0 : i32
    return %c0_i32, %c0_i32_0 : i32, i32
  }
  func.func @transform_19(%arg0: i32) -> (i32, i32) {
    %c0_i32 = arith.constant 0 : i32
    %c0_i32_0 = arith.constant 0 : i32
    %c0_i32_1 = arith.constant 0 : i32
    return %c0_i32, %c0_i32_0 : i32, i32
  }
  func.func @transform_20(%arg0: i32) -> (i32, i32) {
    %c0_i32 = arith.constant 0 : i32
    %c0_i32_0 = arith.constant 0 : i32
    %c0_i32_1 = arith.constant 0 : i32
    return %c0_i32, %c0_i32_0 : i32, i32
  }
  func.func @transform_21(%arg0: i32) -> (i32, i32) {
    %c0_i32 = arith.constant 0 : i32
    %c0_i32_0 = arith.constant 0 : i32
    %c0_i32_1 = arith.constant 0 : i32
    return %c0_i32, %c0_i32_0 : i32, i32
  }
  func.func @transform_22(%arg0: i32) -> (i32, i32) {
    %c0_i32 = arith.constant 0 : i32
    %c0_i32_0 = arith.constant 0 : i32
    %c0_i32_1 = arith.constant 0 : i32
    return %c0_i32, %c0_i32_0 : i32, i32
  }
  func.func @transform_23(%arg0: i32) -> (i32, i32) {
    %c0_i32 = arith.constant 0 : i32
    %c0_i32_0 = arith.constant 0 : i32
    %c0_i32_1 = arith.constant 0 : i32
    return %c0_i32, %c0_i32_0 : i32, i32
  }
  func.func @transform_24(%arg0: i32) -> (i32, i32) {
    %c0_i32 = arith.constant 0 : i32
    %c0_i32_0 = arith.constant 0 : i32
    %c0_i32_1 = arith.constant 0 : i32
    return %c0_i32, %c0_i32_0 : i32, i32
  }
  func.func @transform_25(%arg0: i32) -> (i32, i32) {
    %c0_i32 = arith.constant 0 : i32
    %c0_i32_0 = arith.constant 0 : i32
    %c0_i32_1 = arith.constant 0 : i32
    return %c0_i32, %c0_i32_0 : i32, i32
  }
}

</mosaic_0001>

<llo_original>
// kernel: encoder_decoder_forward.3
$region0: #{encoder_decoder_forward.3}
  #allocation0 [shape = 'u32[]', space=smem, size = 0x4, offset = 0x4, fixed_abs, tag = 'smem constant byte address 0x4 - core index']
  #allocation1 [shape = 'u32[144,128]{1,0:T(1,128)}', space=vmem, size = 0x12000, scoped, tag = 'internal scratch']
  %s0 = inlined_call_operand.vmem [shape: f32[2,32], index: 0, kind: input, shape index: {}]
  %s1 = inlined_call_operand.vmem [shape: f32[1,32], index: 1, kind: input, shape index: {}]
  %s2 = inlined_call_operand.vmem [shape: f32[32,32], index: 2, kind: input, shape index: {}]
  %s3 = inlined_call_operand.vmem [shape: f32[32,96], index: 3, kind: input, shape index: {}]
  %s4 = inlined_call_operand.vmem [shape: f32[1,96], index: 4, kind: input, shape index: {}]
  %s5 = inlined_call_operand.vmem [shape: f32[32,32], index: 5, kind: input, shape index: {}]
  %s6 = inlined_call_operand.vmem [shape: f32[1,32], index: 6, kind: input, shape index: {}]
  %s7 = inlined_call_operand.vmem [shape: f32[1,32], index: 7, kind: input, shape index: {}]
  %s8 = inlined_call_operand.vmem [shape: f32[1,32], index: 8, kind: input, shape index: {}]
  %s9 = inlined_call_operand.vmem [shape: f32[32,32], index: 9, kind: input, shape index: {}]
  %s10 = inlined_call_operand.vmem [shape: f32[1,32], index: 10, kind: input, shape index: {}]
  %s11 = inlined_call_operand.vmem [shape: f32[32,64], index: 11, kind: input, shape index: {}]
  %s12 = inlined_call_operand.vmem [shape: f32[1,64], index: 12, kind: input, shape index: {}]
  %s13 = inlined_call_operand.vmem [shape: f32[32,32], index: 13, kind: input, shape index: {}]
  %s14 = inlined_call_operand.vmem [shape: f32[1,32], index: 14, kind: input, shape index: {}]
  %s15 = inlined_call_operand.vmem [shape: f32[1,32], index: 15, kind: input, shape index: {}]
  %s16 = inlined_call_operand.vmem [shape: f32[1,32], index: 16, kind: input, shape index: {}]
  %s17 = inlined_call_operand.vmem [shape: f32[32,64], index: 17, kind: input, shape index: {}]
  %s18 = inlined_call_operand.vmem [shape: f32[1,64], index: 18, kind: input, shape index: {}]
  %s19 = inlined_call_operand.vmem [shape: f32[64,32], index: 19, kind: input, shape index: {}]
  %s20 = inlined_call_operand.vmem [shape: f32[1,32], index: 20, kind: input, shape index: {}]
  %s21 = inlined_call_operand.vmem [shape: f32[1,32], index: 21, kind: input, shape index: {}]
  %s22 = inlined_call_operand.vmem [shape: f32[1,32], index: 22, kind: input, shape index: {}]
  %s23 = inlined_call_operand.vmem [shape: f32[32,32], index: 23, kind: input, shape index: {}]
  %s24 = inlined_call_operand.vmem [shape: f32[1,32], index: 24, kind: input, shape index: {}]
  %s25 = inlined_call_operand.hbm [shape: f32[2,32], index: 25, kind: output, shape index: {}]
  %s26 = sld [smem:[#allocation0]]
  $region110: #{encoder_decoder_forward.3} parent=0
    _
  %s28 = ssub.s32 1, %s26
  %s29 = scalar_select 0, %s28, %s26
  $region1: #{encoder_decoder_forward.3} parent=0
    #allocation2 [shape = 'u8[1024]{0}', space=vmem, size = 0x400, scoped, tag = 'output window, operand 0, single buffered']
    #allocation3 [shape = 's32[1]{0}', space=sflag, size = 0x4, scoped, tag = 'scoped memory for encoder_decoder_forward.3']
    %30 = vsyncpa [#allocation3], 0
    // Predicated region
    $region2: #{encoder_decoder_forward.3} parent=1 // pred_check
      _
    $region3: #{encoder_decoder_forward.3} parent=1 // pred_check_branch
      %32 = sbr.rel (0) target = $region5
    $region4: #{encoder_decoder_forward.3} parent=1 // pred_region
      _
    $region5: #{encoder_decoder_forward.3} parent=1 // pred_fallthru
      _
    // Predicated region
    $region6: #{encoder_decoder_forward.3} parent=1 // pred_check
      _
    $region7: #{encoder_decoder_forward.3} parent=1 // pred_check_branch
      %34 = sbr.rel (0) target = $region9
    $region8: #{encoder_decoder_forward.3} parent=1 // pred_region
      _
    $region9: #{encoder_decoder_forward.3} parent=1 // pred_fallthru
      _
    // Predicated region
    $region10: #{encoder_decoder_forward.3} parent=1 // pred_check
      _
    $region11: #{encoder_decoder_forward.3} parent=1 // pred_check_branch
      %36 = sbr.rel (0) target = $region13
    $region12: #{encoder_decoder_forward.3} parent=1 // pred_region
      _
    $region13: #{encoder_decoder_forward.3} parent=1 // pred_fallthru
      _
    // Predicated region
    $region14: #{encoder_decoder_forward.3} parent=1 // pred_check
      _
    $region15: #{encoder_decoder_forward.3} parent=1 // pred_check_branch
      %38 = sbr.rel (0) target = $region17
    $region16: #{encoder_decoder_forward.3} parent=1 // pred_region
      _
    $region17: #{encoder_decoder_forward.3} parent=1 // pred_fallthru
      _
    // Predicated region
    $region18: #{encoder_decoder_forward.3} parent=1 // pred_check
      _
    $region19: #{encoder_decoder_forward.3} parent=1 // pred_check_branch
      %40 = sbr.rel (0) target = $region21
    $region20: #{encoder_decoder_forward.3} parent=1 // pred_region
      _
    $region21: #{encoder_decoder_forward.3} parent=1 // pred_fallthru
      _
    // Predicated region
    $region22: #{encoder_decoder_forward.3} parent=1 // pred_check
      _
    $region23: #{encoder_decoder_forward.3} parent=1 // pred_check_branch
      %42 = sbr.rel (0) target = $region25
    $region24: #{encoder_decoder_forward.3} parent=1 // pred_region
      _
    $region25: #{encoder_decoder_forward.3} parent=1 // pred_fallthru
      _
    // Predicated region
    $region26: #{encoder_decoder_forward.3} parent=1 // pred_check
      _
    $region27: #{encoder_decoder_forward.3} parent=1 // pred_check_branch
      %44 = sbr.rel (0) target = $region29
    $region28: #{encoder_decoder_forward.3} parent=1 // pred_region
      _
    $region29: #{encoder_decoder_forward.3} parent=1 // pred_fallthru
      _
    // Predicated region
    $region30: #{encoder_decoder_forward.3} parent=1 // pred_check
      _
    $region31: #{encoder_decoder_forward.3} parent=1 // pred_check_branch
      %46 = sbr.rel (0) target = $region33
    $region32: #{encoder_decoder_forward.3} parent=1 // pred_region
      _
    $region33: #{encoder_decoder_forward.3} parent=1 // pred_fallthru
      _
    // Predicated region
    $region34: #{encoder_decoder_forward.3} parent=1 // pred_check
      _
    $region35: #{encoder_decoder_forward.3} parent=1 // pred_check_branch
      %48 = sbr.rel (0) target = $region37
    $region36: #{encoder_decoder_forward.3} parent=1 // pred_region
      _
    $region37: #{encoder_decoder_forward.3} parent=1 // pred_fallthru
      _
    // Predicated region
    $region38: #{encoder_decoder_forward.3} parent=1 // pred_check
      _
    $region39: #{encoder_decoder_forward.3} parent=1 // pred_check_branch
      %50 = sbr.rel (0) target = $region41
    $region40: #{encoder_decoder_forward.3} parent=1 // pred_region
      _
    $region41: #{encoder_decoder_forward.3} parent=1 // pred_fallthru
      _
    // Predicated region
    $region42: #{encoder_decoder_forward.3} parent=1 // pred_check
      _
    $region43: #{encoder_decoder_forward.3} parent=1 // pred_check_branch
      %52 = sbr.rel (0) target = $region45
    $region44: #{encoder_decoder_forward.3} parent=1 // pred_region
      _
    $region45: #{encoder_decoder_forward.3} parent=1 // pred_fallthru
      _
    // Predicated region
    $region46: #{encoder_decoder_forward.3} parent=1 // pred_check
      _
    $region47: #{encoder_decoder_forward.3} parent=1 // pred_check_branch
      %54 = sbr.rel (0) target = $region49
    $region48: #{encoder_decoder_forward.3} parent=1 // pred_region
      _
    $region49: #{encoder_decoder_forward.3} parent=1 // pred_fallthru
      _
    // Predicated region
    $region50: #{encoder_decoder_forward.3} parent=1 // pred_check
      _
    $region51: #{encoder_decoder_forward.3} parent=1 // pred_check_branch
      %56 = sbr.rel (0) target = $region53
    $region52: #{encoder_decoder_forward.3} parent=1 // pred_region
      _
    $region53: #{encoder_decoder_forward.3} parent=1 // pred_fallthru
      _
    // Predicated region
    $region54: #{encoder_decoder_forward.3} parent=1 // pred_check
      _
    $region55: #{encoder_decoder_forward.3} parent=1 // pred_check_branch
      %58 = sbr.rel (0) target = $region57
    $region56: #{encoder_decoder_forward.3} parent=1 // pred_region
      _
    $region57: #{encoder_decoder_forward.3} parent=1 // pred_fallthru
      _
    // Predicated region
    $region58: #{encoder_decoder_forward.3} parent=1 // pred_check
      _
    $region59: #{encoder_decoder_forward.3} parent=1 // pred_check_branch
      %60 = sbr.rel (0) target = $region61
    $region60: #{encoder_decoder_forward.3} parent=1 // pred_region
      _
    $region61: #{encoder_decoder_forward.3} parent=1 // pred_fallthru
      _
    // Predicated region
    $region62: #{encoder_decoder_forward.3} parent=1 // pred_check
      _
    $region63: #{encoder_decoder_forward.3} parent=1 // pred_check_branch
      %62 = sbr.rel (0) target = $region65
    $region64: #{encoder_decoder_forward.3} parent=1 // pred_region
      _
    $region65: #{encoder_decoder_forward.3} parent=1 // pred_fallthru
      _
    // Predicated region
    $region66: #{encoder_decoder_forward.3} parent=1 // pred_check
      _
    $region67: #{encoder_decoder_forward.3} parent=1 // pred_check_branch
      %64 = sbr.rel (0) target = $region69
    $region68: #{encoder_decoder_forward.3} parent=1 // pred_region
      _
    $region69: #{encoder_decoder_forward.3} parent=1 // pred_fallthru
      _
    // Predicated region
    $region70: #{encoder_decoder_forward.3} parent=1 // pred_check
      _
    $region71: #{encoder_decoder_forward.3} parent=1 // pred_check_branch
      %66 = sbr.rel (0) target = $region73
    $region72: #{encoder_decoder_forward.3} parent=1 // pred_region
      _
    $region73: #{encoder_decoder_forward.3} parent=1 // pred_fallthru
      _
    // Predicated region
    $region74: #{encoder_decoder_forward.3} parent=1 // pred_check
      _
    $region75: #{encoder_decoder_forward.3} parent=1 // pred_check_branch
      %68 = sbr.rel (0) target = $region77
    $region76: #{encoder_decoder_forward.3} parent=1 // pred_region
      _
    $region77: #{encoder_decoder_forward.3} parent=1 // pred_fallthru
      _
    // Predicated region
    $region78: #{encoder_decoder_forward.3} parent=1 // pred_check
      _
    $region79: #{encoder_decoder_forward.3} parent=1 // pred_check_branch
      %70 = sbr.rel (0) target = $region81
    $region80: #{encoder_decoder_forward.3} parent=1 // pred_region
      _
    $region81: #{encoder_decoder_forward.3} parent=1 // pred_fallthru
      _
    // Predicated region
    $region82: #{encoder_decoder_forward.3} parent=1 // pred_check
      _
    $region83: #{encoder_decoder_forward.3} parent=1 // pred_check_branch
      %72 = sbr.rel (0) target = $region85
    $region84: #{encoder_decoder_forward.3} parent=1 // pred_region
      _
    $region85: #{encoder_decoder_forward.3} parent=1 // pred_fallthru
      _
    // Predicated region
    $region86: #{encoder_decoder_forward.3} parent=1 // pred_check
      _
    $region87: #{encoder_decoder_forward.3} parent=1 // pred_check_branch
      %74 = sbr.rel (0) target = $region89
    $region88: #{encoder_decoder_forward.3} parent=1 // pred_region
      _
    $region89: #{encoder_decoder_forward.3} parent=1 // pred_fallthru
      _
    // Predicated region
    $region90: #{encoder_decoder_forward.3} parent=1 // pred_check
      _
    $region91: #{encoder_decoder_forward.3} parent=1 // pred_check_branch
      %76 = sbr.rel (0) target = $region93
    $region92: #{encoder_decoder_forward.3} parent=1 // pred_region
      _
    $region93: #{encoder_decoder_forward.3} parent=1 // pred_fallthru
      _
    // Predicated region
    $region94: #{encoder_decoder_forward.3} parent=1 // pred_check
      _
    $region95: #{encoder_decoder_forward.3} parent=1 // pred_check_branch
      %78 = sbr.rel (0) target = $region97
    $region96: #{encoder_decoder_forward.3} parent=1 // pred_region
      _
    $region97: #{encoder_decoder_forward.3} parent=1 // pred_fallthru
      _
    // Predicated region
    $region98: #{encoder_decoder_forward.3} parent=1 // pred_check
      _
    $region99: #{encoder_decoder_forward.3} parent=1 // pred_check_branch
      %80 = sbr.rel (0) target = $region101
    $region100: #{encoder_decoder_forward.3} parent=1 // pred_region
      _
    $region101: #{encoder_decoder_forward.3} parent=1 // pred_fallthru
      _
    %v81 = vld [vmem:[%s0] sm:$0x3]
    %v82 = vmul.f32 %v81, 5.656854
    %v83 = vld [vmem:[%s1] sm:$0x1]
    %v85 = vlaneseq
    %v86 = vshrl.u32 %v85, 7
    %v87 = vsub.s32 0, %v86
    %v88 = vrot.slane %v83, %v87
    %v90 = vadd.f32 %v82, %v88
    %v91 = vld [vmem:[%s2] sm:$0xff]
    %v92 = vld [vmem:[%s2 + $0x8] sm:$0xff]
    %v93 = vld [vmem:[%s2 + $0x10] sm:$0xff]
    %v94 = vld [vmem:[%s2 + $0x18] sm:$0xff]
    %v95 = vld [vmem:[%s3] sm:$0xff]
    %v96 = vld [vmem:[%s3 + $0x8] sm:$0xff]
    %v97 = vld [vmem:[%s3 + $0x10] sm:$0xff]
    %v98 = vld [vmem:[%s3 + $0x18] sm:$0xff]
    %v99 = vld [vmem:[%s4] sm:$0x1]
    %v101 = vlaneseq
    %v102 = vshrl.u32 %v101, 7
    %v103 = vsub.s32 0, %v102
    %v104 = vrot.slane %v99, %v103
    %vm106 = vcmask 261120
    %v108 = vsel %vm106, %v90, 0
    %110 = vmatprep.subr.mxu0 0.0
    %111 = vmatpush1.msra.mxu0 %v95
    %112 = vmatprep.subr.mxu0 0.0
    %113 = vmatpush1.msra.mxu0 %v96
    %114 = vmatprep.subr.mxu0 0.0
    %115 = vmatpush1.msra.mxu0 %v97
    %116 = vmatprep.subr.mxu0 0.0
    %117 = vmatpush1.msra.mxu0 %v98
    %118 = vmatprep.subr.mxu0 0.0
    %119 = vmatpush1.msra.mxu0 0.0
    %120 = vmatprep.subr.mxu0 0.0
    %121 = vmatpush1.msra.mxu0 0.0
    %122 = vmatprep.subr.mxu0 0.0
    %123 = vmatpush1.msra.mxu0 0.0
    %124 = vmatprep.subr.mxu0 0.0
    %125 = vmatpush1.msra.mxu0 0.0
    %126 = vmatprep.subr.mxu0 0.0
    %127 = vmatpush1.msra.mxu0 0.0
    %128 = vmatprep.subr.mxu0 0.0
    %129 = vmatpush1.msra.mxu0 0.0
    %130 = vmatprep.subr.mxu0 0.0
    %131 = vmatpush1.msra.mxu0 0.0
    %132 = vmatprep.subr.mxu0 0.0
    %133 = vmatpush1.msra.mxu0 0.0
    %134 = vmatprep.subr.mxu0 0.0
    %135 = vmatpush1.msra.mxu0 0.0
    %136 = vmatprep.subr.mxu0 0.0
    %137 = vmatpush1.msra.mxu0 0.0
    %138 = vmatprep.subr.mxu0 0.0
    %139 = vmatpush1.msra.mxu0 0.0
    %140 = vmatprep.subr.mxu0 0.0
    %141 = vmatpush1.msra.mxu0 0.0
    %142 = vmatprep.subr.mxu0 0.0
    %143 = vmatpush1.msra.mxu0 0.0
    %144 = vmatprep.subr.mxu0 0.0
    %145 = vmatpush1.msra.mxu0 0.0
    %146 = vmatprep.subr.mxu0 0.0
    %147 = vmatpush1.msra.mxu0 0.0
    %148 = vmatprep.subr.mxu0 0.0
    %149 = vmatpush1.msra.mxu0 0.0
    %150 = vmatprep.subr.mxu0 0.0
    %151 = vmatpush1.msra.mxu0 0.0
    %152 = vmatprep.subr.mxu0 0.0
    %153 = vmatpush1.msra.mxu0 0.0
    %154 = vmatprep.subr.mxu0 0.0
    %155 = vmatpush1.msra.mxu0 0.0
    %156 = vmatprep.subr.mxu0 0.0
    %157 = vmatpush1.msra.mxu0 0.0
    %158 = vmatprep.subr.mxu0 0.0
    %159 = vmatpush1.msra.mxu0 0.0
    %160 = vmatprep.subr.mxu0 0.0
    %161 = vmatpush1.msra.mxu0 0.0
    %162 = vmatprep.subr.mxu0 0.0
    %163 = vmatpush1.msra.mxu0 0.0
    %164 = vmatprep.subr.mxu0 0.0
    %165 = vmatpush1.msra.mxu0 0.0
    %166 = vmatprep.subr.mxu0 0.0
    %167 = vmatpush1.msra.mxu0 0.0
    %168 = vmatprep.subr.mxu0 0.0
    %169 = vmatpush1.msra.mxu0 0.0
    %170 = vmatprep.subr.mxu0 0.0
    %171 = vmatpush1.msra.mxu0 0.0
    %172 = vmatprep.subr.mxu0 0.0
    %173 = vmatpush1.msra.mxu0 0.0
    %174 = vmatprep.mubr.f32.mxu0 0.0
    %175 = vmatmul.mubr.f32.gmra.mrb[0].mxu0 %v108
    %v176 = vpop.f32.mrb[0].mxu0
    %v177 = vadd.f32 %v104, %v176
    %v178 = vpop.f32.mrb[0].mxu0
    %179 = vdwg.mxu0
    %v180 = vld [vmem:[%s5] sm:$0xff]
    %v181 = vld [vmem:[%s5 + $0x8] sm:$0xff]
    %v182 = vld [vmem:[%s5 + $0x10] sm:$0xff]
    %v183 = vld [vmem:[%s5 + $0x18] sm:$0xff]
    %v184 = vld [vmem:[%s6] sm:$0x1]
    %v186 = vlaneseq
    %v187 = vshrl.u32 %v186, 7
    %v188 = vsub.s32 0, %v187
    %v189 = vrot.slane %v184, %v188
    %192 = vrot.lane.b32.xlu0 %v177, 64
    %v193 = vpop.permute.xlu0 %192
    %v194 = vsel %vm106, %v193, 0
    %196 = vmatprep.subr.mxu0 0.0
    %197 = vmatpush1.msra.mxu0 %v180
    %198 = vmatprep.subr.mxu0 0.0
    %199 = vmatpush1.msra.mxu0 %v181
    %200 = vmatprep.subr.mxu0 0.0
    %201 = vmatpush1.msra.mxu0 %v182
    %202 = vmatprep.subr.mxu0 0.0
    %203 = vmatpush1.msra.mxu0 %v183
    %204 = vmatprep.subr.mxu0 0.0
    %205 = vmatpush1.msra.mxu0 0.0
    %206 = vmatprep.subr.mxu0 0.0
    %207 = vmatpush1.msra.mxu0 0.0
    %208 = vmatprep.subr.mxu0 0.0
    %209 = vmatpush1.msra.mxu0 0.0
    %210 = vmatprep.subr.mxu0 0.0
    %211 = vmatpush1.msra.mxu0 0.0
    %212 = vmatprep.subr.mxu0 0.0
    %213 = vmatpush1.msra.mxu0 0.0
    %214 = vmatprep.subr.mxu0 0.0
    %215 = vmatpush1.msra.mxu0 0.0
    %216 = vmatprep.subr.mxu0 0.0
    %217 = vmatpush1.msra.mxu0 0.0
    %218 = vmatprep.subr.mxu0 0.0
    %219 = vmatpush1.msra.mxu0 0.0
    %220 = vmatprep.subr.mxu0 0.0
    %221 = vmatpush1.msra.mxu0 0.0
    %222 = vmatprep.subr.mxu0 0.0
    %223 = vmatpush1.msra.mxu0 0.0
    %224 = vmatprep.subr.mxu0 0.0
    %225 = vmatpush1.msra.mxu0 0.0
    %226 = vmatprep.subr.mxu0 0.0
    %227 = vmatpush1.msra.mxu0 0.0
    %228 = vmatprep.subr.mxu0 0.0
    %229 = vmatpush1.msra.mxu0 0.0
    %230 = vmatprep.subr.mxu0 0.0
    %231 = vmatpush1.msra.mxu0 0.0
    %232 = vmatprep.subr.mxu0 0.0
    %233 = vmatpush1.msra.mxu0 0.0
    %234 = vmatprep.subr.mxu0 0.0
    %235 = vmatpush1.msra.mxu0 0.0
    %236 = vmatprep.subr.mxu0 0.0
    %237 = vmatpush1.msra.mxu0 0.0
    %238 = vmatprep.subr.mxu0 0.0
    %239 = vmatpush1.msra.mxu0 0.0
    %240 = vmatprep.subr.mxu0 0.0
    %241 = vmatpush1.msra.mxu0 0.0
    %242 = vmatprep.subr.mxu0 0.0
    %243 = vmatpush1.msra.mxu0 0.0
    %244 = vmatprep.subr.mxu0 0.0
    %245 = vmatpush1.msra.mxu0 0.0
    %246 = vmatprep.subr.mxu0 0.0
    %247 = vmatpush1.msra.mxu0 0.0
    %248 = vmatprep.subr.mxu0 0.0
    %249 = vmatpush1.msra.mxu0 0.0
    %250 = vmatprep.subr.mxu0 0.0
    %251 = vmatpush1.msra.mxu0 0.0
    %252 = vmatprep.subr.mxu0 0.0
    %253 = vmatpush1.msra.mxu0 0.0
    %254 = vmatprep.subr.mxu0 0.0
    %255 = vmatpush1.msra.mxu0 0.0
    %256 = vmatprep.subr.mxu0 0.0
    %257 = vmatpush1.msra.mxu0 0.0
    %258 = vmatprep.subr.mxu0 0.0
    %259 = vmatpush1.msra.mxu0 0.0
    %260 = vmatprep.mubr.f32.mxu0 0.0
    %261 = vmatmul.mubr.f32.gmra.mrb[0].mxu0 %v194
    %v262 = vpop.f32.mrb[0].mxu0
    %v263 = vadd.f32 %v189, %v262
    %v264 = vpop.f32.mrb[0].mxu0
    %265 = vdwg.mxu0
    %v266 = vadd.f32 %v90, %v263
    %v267 = vld [vmem:[%s7] sm:$0x1]
    %v268 = vld [vmem:[%s8] sm:$0x1]
    %vm269 = vcmask 254976
    %v270 = vsel %vm269, %v266, 0.0
    %271 = vadd.xlane.f32.xlu0 %v270
    %v272 = vpop.xlane.xlu0 %271
    %v273 = vrcp.pop 32.0
    %v274 = vmul.f32 %v272, %v273
    %v275 = vsub.f32 %v266, %v274
    %v276 = vmul.f32 %v275, %v275
    %v277 = vsel %vm269, %v276, 0.0
    %278 = vadd.xlane.f32.xlu0 %v277
    %v279 = vpop.xlane.xlu0 %278
    %v280 = vmul.f32 %v279, %v273
    %v281 = vadd.f32 %v280, 1e-05
    %v282 = vrsqrt.pop %v281
    %v283 = vmul.f32 %v275, %v282
    %v285 = vlaneseq
    %v286 = vshrl.u32 %v285, 7
    %v287 = vsub.s32 0, %v286
    %v288 = vrot.slane %v267, %v287
    %v290 = vmul.f32 %v283, %v288
    %v292 = vlaneseq
    %v293 = vshrl.u32 %v292, 7
    %v294 = vsub.s32 0, %v293
    %v295 = vrot.slane %v268, %v294
    %v297 = vadd.f32 %v290, %v295
    %v298 = vld [vmem:[%s9] sm:$0xff]
    %v299 = vld [vmem:[%s9 + $0x8] sm:$0xff]
    %v300 = vld [vmem:[%s9 + $0x10] sm:$0xff]
    %v301 = vld [vmem:[%s9 + $0x18] sm:$0xff]
    %v302 = vld [vmem:[%s10] sm:$0x1]
    %v304 = vlaneseq
    %v305 = vshrl.u32 %v304, 7
    %v306 = vsub.s32 0, %v305
    %v307 = vrot.slane %v302, %v306
    %v310 = vsel %vm106, %v297, 0
    %312 = vmatprep.subr.mxu0 0.0
    %313 = vmatpush1.msra.mxu0 %v298
    %314 = vmatprep.subr.mxu0 0.0
    %315 = vmatpush1.msra.mxu0 %v299
    %316 = vmatprep.subr.mxu0 0.0
    %317 = vmatpush1.msra.mxu0 %v300
    %318 = vmatprep.subr.mxu0 0.0
    %319 = vmatpush1.msra.mxu0 %v301
    %320 = vmatprep.subr.mxu0 0.0
    %321 = vmatpush1.msra.mxu0 0.0
    %322 = vmatprep.subr.mxu0 0.0
    %323 = vmatpush1.msra.mxu0 0.0
    %324 = vmatprep.subr.mxu0 0.0
    %325 = vmatpush1.msra.mxu0 0.0
    %326 = vmatprep.subr.mxu0 0.0
    %327 = vmatpush1.msra.mxu0 0.0
    %328 = vmatprep.subr.mxu0 0.0
    %329 = vmatpush1.msra.mxu0 0.0
    %330 = vmatprep.subr.mxu0 0.0
    %331 = vmatpush1.msra.mxu0 0.0
    %332 = vmatprep.subr.mxu0 0.0
    %333 = vmatpush1.msra.mxu0 0.0
    %334 = vmatprep.subr.mxu0 0.0
    %335 = vmatpush1.msra.mxu0 0.0
    %336 = vmatprep.subr.mxu0 0.0
    %337 = vmatpush1.msra.mxu0 0.0
    %338 = vmatprep.subr.mxu0 0.0
    %339 = vmatpush1.msra.mxu0 0.0
    %340 = vmatprep.subr.mxu0 0.0
    %341 = vmatpush1.msra.mxu0 0.0
    %342 = vmatprep.subr.mxu0 0.0
    %343 = vmatpush1.msra.mxu0 0.0
    %344 = vmatprep.subr.mxu0 0.0
    %345 = vmatpush1.msra.mxu0 0.0
    %346 = vmatprep.subr.mxu0 0.0
    %347 = vmatpush1.msra.mxu0 0.0
    %348 = vmatprep.subr.mxu0 0.0
    %349 = vmatpush1.msra.mxu0 0.0
    %350 = vmatprep.subr.mxu0 0.0
    %351 = vmatpush1.msra.mxu0 0.0
    %352 = vmatprep.subr.mxu0 0.0
    %353 = vmatpush1.msra.mxu0 0.0
    %354 = vmatprep.subr.mxu0 0.0
    %355 = vmatpush1.msra.mxu0 0.0
    %356 = vmatprep.subr.mxu0 0.0
    %357 = vmatpush1.msra.mxu0 0.0
    %358 = vmatprep.subr.mxu0 0.0
    %359 = vmatpush1.msra.mxu0 0.0
    %360 = vmatprep.subr.mxu0 0.0
    %361 = vmatpush1.msra.mxu0 0.0
    %362 = vmatprep.subr.mxu0 0.0
    %363 = vmatpush1.msra.mxu0 0.0
    %364 = vmatprep.subr.mxu0 0.0
    %365 = vmatpush1.msra.mxu0 0.0
    %366 = vmatprep.subr.mxu0 0.0
    %367 = vmatpush1.msra.mxu0 0.0
    %368 = vmatprep.subr.mxu0 0.0
    %369 = vmatpush1.msra.mxu0 0.0
    %370 = vmatprep.subr.mxu0 0.0
    %371 = vmatpush1.msra.mxu0 0.0
    %372 = vmatprep.subr.mxu0 0.0
    %373 = vmatpush1.msra.mxu0 0.0
    %374 = vmatprep.subr.mxu0 0.0
    %375 = vmatpush1.msra.mxu0 0.0
    %376 = vmatprep.mubr.f32.mxu0 0.0
    %377 = vmatmul.mubr.f32.gmra.mrb[0].mxu0 %v310
    %v378 = vpop.f32.mrb[0].mxu0
    %v379 = vadd.f32 %v307, %v378
    %v380 = vpop.f32.mrb[0].mxu0
    %381 = vdwg.mxu0
    %v382 = vld [vmem:[%s11] sm:$0xff]
    %v383 = vld [vmem:[%s11 + $0x8] sm:$0xff]
    %v384 = vld [vmem:[%s11 + $0x10] sm:$0xff]
    %v385 = vld [vmem:[%s11 + $0x18] sm:$0xff]
    %v386 = vld [vmem:[%s12] sm:$0x1]
    %v388 = vlaneseq
    %v389 = vshrl.u32 %v388, 7
    %v390 = vsub.s32 0, %v389
    %v391 = vrot.slane %v386, %v390
    %v394 = vsel %vm106, %v91, 0
    %v397 = vsel %vm106, %v92, 0
    %v400 = vsel %vm106, %v93, 0
    %v403 = vsel %vm106, %v94, 0
    %405 = vmatprep.subr.mxu0 0.0
    %406 = vmatpush1.msra.mxu0 %v382
    %407 = vmatprep.subr.mxu0 0.0
    %408 = vmatpush1.msra.mxu0 %v383
    %409 = vmatprep.subr.mxu0 0.0
    %410 = vmatpush1.msra.mxu0 %v384
    %411 = vmatprep.subr.mxu0 0.0
    %412 = vmatpush1.msra.mxu0 %v385
    %413 = vmatprep.subr.mxu0 0.0
    %414 = vmatpush1.msra.mxu0 0.0
    %415 = vmatprep.subr.mxu0 0.0
    %416 = vmatpush1.msra.mxu0 0.0
    %417 = vmatprep.subr.mxu0 0.0
    %418 = vmatpush1.msra.mxu0 0.0
    %419 = vmatprep.subr.mxu0 0.0
    %420 = vmatpush1.msra.mxu0 0.0
    %421 = vmatprep.subr.mxu0 0.0
    %422 = vmatpush1.msra.mxu0 0.0
    %423 = vmatprep.subr.mxu0 0.0
    %424 = vmatpush1.msra.mxu0 0.0
    %425 = vmatprep.subr.mxu0 0.0
    %426 = vmatpush1.msra.mxu0 0.0
    %427 = vmatprep.subr.mxu0 0.0
    %428 = vmatpush1.msra.mxu0 0.0
    %429 = vmatprep.subr.mxu0 0.0
    %430 = vmatpush1.msra.mxu0 0.0
    %431 = vmatprep.subr.mxu0 0.0
    %432 = vmatpush1.msra.mxu0 0.0
    %433 = vmatprep.subr.mxu0 0.0
    %434 = vmatpush1.msra.mxu0 0.0
    %435 = vmatprep.subr.mxu0 0.0
    %436 = vmatpush1.msra.mxu0 0.0
    %437 = vmatprep.subr.mxu0 0.0
    %438 = vmatpush1.msra.mxu0 0.0
    %439 = vmatprep.subr.mxu0 0.0
    %440 = vmatpush1.msra.mxu0 0.0
    %441 = vmatprep.subr.mxu0 0.0
    %442 = vmatpush1.msra.mxu0 0.0
    %443 = vmatprep.subr.mxu0 0.0
    %444 = vmatpush1.msra.mxu0 0.0
    %445 = vmatprep.subr.mxu0 0.0
    %446 = vmatpush1.msra.mxu0 0.0
    %447 = vmatprep.subr.mxu0 0.0
    %448 = vmatpush1.msra.mxu0 0.0
    %449 = vmatprep.subr.mxu0 0.0
    %450 = vmatpush1.msra.mxu0 0.0
    %451 = vmatprep.subr.mxu0 0.0
    %452 = vmatpush1.msra.mxu0 0.0
    %453 = vmatprep.subr.mxu0 0.0
    %454 = vmatpush1.msra.mxu0 0.0
    %455 = vmatprep.subr.mxu0 0.0
    %456 = vmatpush1.msra.mxu0 0.0
    %457 = vmatprep.subr.mxu0 0.0
    %458 = vmatpush1.msra.mxu0 0.0
    %459 = vmatprep.subr.mxu0 0.0
    %460 = vmatpush1.msra.mxu0 0.0
    %461 = vmatprep.subr.mxu0 0.0
    %462 = vmatpush1.msra.mxu0 0.0
    %463 = vmatprep.subr.mxu0 0.0
    %464 = vmatpush1.msra.mxu0 0.0
    %465 = vmatprep.subr.mxu0 0.0
    %466 = vmatpush1.msra.mxu0 0.0
    %467 = vmatprep.subr.mxu0 0.0
    %468 = vmatpush1.msra.mxu0 0.0
    %469 = vmatprep.mubr.f32.mxu0 0.0
    %470 = vmatmul.mubr.f32.gmra.mrb[0].mxu0 %v394
    %v471 = vpop.f32.mrb[0].mxu0
    %v472 = vadd.f32 %v391, %v471
    %v473 = vpop.f32.mrb[0].mxu0
    %474 = vmatprep.mubr.f32.mxu0 0.0
    %475 = vmatmul.mubr.f32.gmra.mrb[0].mxu0 %v397
    %v476 = vpop.f32.mrb[0].mxu0
    %v477 = vadd.f32 %v391, %v476
    %v478 = vpop.f32.mrb[0].mxu0
    %479 = vmatprep.mubr.f32.mxu0 0.0
    %480 = vmatmul.mubr.f32.gmra.mrb[0].mxu0 %v400
    %v481 = vpop.f32.mrb[0].mxu0
    %v482 = vadd.f32 %v391, %v481
    %v483 = vpop.f32.mrb[0].mxu0
    %484 = vmatprep.mubr.f32.mxu0 0.0
    %485 = vmatmul.mubr.f32.gmra.mrb[0].mxu0 %v403
    %v486 = vpop.f32.mrb[0].mxu0
    %v487 = vadd.f32 %v391, %v486
    %v488 = vpop.f32.mrb[0].mxu0
    %489 = vdwg.mxu0
    %vm490 = vcmask 64512
    %v492 = vsel %vm490, %v379, 0
    %v495 = vsel %vm490, %v472, 0
    %v498 = vsel %vm490, %v477, 0
    %500 = vmatprep.subr.mxu0 0.0
    %501 = vmatpush1.xpose.msra.mxu0 %v495
    %502 = vmatprep.subr.mxu0 0.0
    %503 = vmatpush1.xpose.msra.mxu0 %v498
    %504 = vmatprep.subr.mxu0 0.0
    %505 = vmatpush1.xpose.msra.mxu0 0.0
    %506 = vmatprep.subr.mxu0 0.0
    %507 = vmatpush1.xpose.msra.mxu0 0.0
    %508 = vmatprep.subr.mxu0 0.0
    %509 = vmatpush1.xpose.msra.mxu0 0.0
    %510 = vmatprep.subr.mxu0 0.0
    %511 = vmatpush1.xpose.msra.mxu0 0.0
    %512 = vmatprep.subr.mxu0 0.0
    %513 = vmatpush1.xpose.msra.mxu0 0.0
    %514 = vmatprep.subr.mxu0 0.0
    %515 = vmatpush1.xpose.msra.mxu0 0.0
    %516 = vmatprep.subr.mxu0 0.0
    %517 = vmatpush1.xpose.msra.mxu0 0.0
    %518 = vmatprep.subr.mxu0 0.0
    %519 = vmatpush1.xpose.msra.mxu0 0.0
    %520 = vmatprep.subr.mxu0 0.0
    %521 = vmatpush1.xpose.msra.mxu0 0.0
    %522 = vmatprep.subr.mxu0 0.0
    %523 = vmatpush1.xpose.msra.mxu0 0.0
    %524 = vmatprep.subr.mxu0 0.0
    %525 = vmatpush1.xpose.msra.mxu0 0.0
    %526 = vmatprep.subr.mxu0 0.0
    %527 = vmatpush1.xpose.msra.mxu0 0.0
    %528 = vmatprep.subr.mxu0 0.0
    %529 = vmatpush1.xpose.msra.mxu0 0.0
    %530 = vmatprep.subr.mxu0 0.0
    %531 = vmatpush1.xpose.msra.mxu0 0.0
    %532 = vmatprep.subr.mxu0 0.0
    %533 = vmatpush1.xpose.msra.mxu0 0.0
    %534 = vmatprep.subr.mxu0 0.0
    %535 = vmatpush1.xpose.msra.mxu0 0.0
    %536 = vmatprep.subr.mxu0 0.0
    %537 = vmatpush1.xpose.msra.mxu0 0.0
    %538 = vmatprep.subr.mxu0 0.0
    %539 = vmatpush1.xpose.msra.mxu0 0.0
    %540 = vmatprep.subr.mxu0 0.0
    %541 = vmatpush1.xpose.msra.mxu0 0.0
    %542 = vmatprep.subr.mxu0 0.0
    %543 = vmatpush1.xpose.msra.mxu0 0.0
    %544 = vmatprep.subr.mxu0 0.0
    %545 = vmatpush1.xpose.msra.mxu0 0.0
    %546 = vmatprep.subr.mxu0 0.0
    %547 = vmatpush1.xpose.msra.mxu0 0.0
    %548 = vmatprep.subr.mxu0 0.0
    %549 = vmatpush1.xpose.msra.mxu0 0.0
    %550 = vmatprep.subr.mxu0 0.0
    %551 = vmatpush1.xpose.msra.mxu0 0.0
    %552 = vmatprep.subr.mxu0 0.0
    %553 = vmatpush1.xpose.msra.mxu0 0.0
    %554 = vmatprep.subr.mxu0 0.0
    %555 = vmatpush1.xpose.msra.mxu0 0.0
    %556 = vmatprep.subr.mxu0 0.0
    %557 = vmatpush1.xpose.msra.mxu0 0.0
    %558 = vmatprep.subr.mxu0 0.0
    %559 = vmatpush1.xpose.msra.mxu0 0.0
    %560 = vmatprep.subr.mxu0 0.0
    %561 = vmatpush1.xpose.msra.mxu0 0.0
    %562 = vmatprep.subr.mxu0 0.0
    %563 = vmatpush1.xpose.msra.mxu0 0.0
    %564 = vmatprep.mubr.f32.mxu0 0.0
    %565 = vmatmul.mubr.f32.gmra.mrb[0].mxu0 %v492
    %v566 = vpop.f32.mrb[0].mxu0
    %v567 = vadd.f32 0.0, %v566
    %v568 = vpop.f32.mrb[0].mxu0
    %569 = vdwg.mxu0
    %v570 = vmul.f32 %v567, 0.35355338
    %vm571 = vcmask 122880
    %v572 = vsel %vm571, %v570, -inf
    %573 = vmax.xlane.f32.xlu0 %v572
    %v574 = vpop.xlane.xlu0 %573
    %v575 = vsub.f32 %v570, %v574
    %v576 = vmul.f32 %v575, 1.442695
    %v577 = vpow.pop %v576
    %v578 = vsel %vm571, %v577, 0.0
    %579 = vadd.xlane.f32.xlu0 %v578
    %v580 = vpop.xlane.xlu0 %579
    %v581 = vrcp.pop %v580
    %v582 = vmul.f32 %v577, %v581
    %583 = vrot.lane.b32.xlu0 %v472, 96
    %v584 = vpop.permute.xlu0 %583
    %585 = vrot.lane.b32.xlu0 %v477, 96
    %v586 = vpop.permute.xlu0 %585
    %vm589 = vcmask 130048
    %v591 = vsel %vm589, %v582, 0
    %593 = vmatprep.subr.mxu0 0.0
    %594 = vmatpush1.msra.mxu0 %v584
    %595 = vmatprep.subr.mxu0 0.0
    %596 = vmatpush1.msra.mxu0 %v586
    %597 = vmatprep.subr.mxu0 0.0
    %598 = vmatpush1.msra.mxu0 0.0
    %599 = vmatprep.subr.mxu0 0.0
    %600 = vmatpush1.msra.mxu0 0.0
    %601 = vmatprep.subr.mxu0 0.0
    %602 = vmatpush1.msra.mxu0 0.0
    %603 = vmatprep.subr.mxu0 0.0
    %604 = vmatpush1.msra.mxu0 0.0
    %605 = vmatprep.subr.mxu0 0.0
    %606 = vmatpush1.msra.mxu0 0.0
    %607 = vmatprep.subr.mxu0 0.0
    %608 = vmatpush1.msra.mxu0 0.0
    %609 = vmatprep.subr.mxu0 0.0
    %610 = vmatpush1.msra.mxu0 0.0
    %611 = vmatprep.subr.mxu0 0.0
    %612 = vmatpush1.msra.mxu0 0.0
    %613 = vmatprep.subr.mxu0 0.0
    %614 = vmatpush1.msra.mxu0 0.0
    %615 = vmatprep.subr.mxu0 0.0
    %616 = vmatpush1.msra.mxu0 0.0
    %617 = vmatprep.subr.mxu0 0.0
    %618 = vmatpush1.msra.mxu0 0.0
    %619 = vmatprep.subr.mxu0 0.0
    %620 = vmatpush1.msra.mxu0 0.0
    %621 = vmatprep.subr.mxu0 0.0
    %622 = vmatpush1.msra.mxu0 0.0
    %623 = vmatprep.subr.mxu0 0.0
    %624 = vmatpush1.msra.mxu0 0.0
    %625 = vmatprep.subr.mxu0 0.0
    %626 = vmatpush1.msra.mxu0 0.0
    %627 = vmatprep.subr.mxu0 0.0
    %628 = vmatpush1.msra.mxu0 0.0
    %629 = vmatprep.subr.mxu0 0.0
    %630 = vmatpush1.msra.mxu0 0.0
    %631 = vmatprep.subr.mxu0 0.0
    %632 = vmatpush1.msra.mxu0 0.0
    %633 = vmatprep.subr.mxu0 0.0
    %634 = vmatpush1.msra.mxu0 0.0
    %635 = vmatprep.subr.mxu0 0.0
    %636 = vmatpush1.msra.mxu0 0.0
    %637 = vmatprep.subr.mxu0 0.0
    %638 = vmatpush1.msra.mxu0 0.0
    %639 = vmatprep.subr.mxu0 0.0
    %640 = vmatpush1.msra.mxu0 0.0
    %641 = vmatprep.subr.mxu0 0.0
    %642 = vmatpush1.msra.mxu0 0.0
    %643 = vmatprep.subr.mxu0 0.0
    %644 = vmatpush1.msra.mxu0 0.0
    %645 = vmatprep.subr.mxu0 0.0
    %646 = vmatpush1.msra.mxu0 0.0
    %647 = vmatprep.subr.mxu0 0.0
    %648 = vmatpush1.msra.mxu0 0.0
    %649 = vmatprep.subr.mxu0 0.0
    %650 = vmatpush1.msra.mxu0 0.0
    %651 = vmatprep.subr.mxu0 0.0
    %652 = vmatpush1.msra.mxu0 0.0
    %653 = vmatprep.subr.mxu0 0.0
    %654 = vmatpush1.msra.mxu0 0.0
    %655 = vmatprep.subr.mxu0 0.0
    %656 = vmatpush1.msra.mxu0 0.0
    %657 = vmatprep.mubr.f32.mxu0 0.0
    %658 = vmatmul.mubr.f32.gmra.mrb[0].mxu0 %v591
    %v659 = vpop.f32.mrb[0].mxu0
    %v660 = vadd.f32 0.0, %v659
    %v661 = vpop.f32.mrb[0].mxu0
    %662 = vdwg.mxu0
    %663 = vrot.lane.b32.xlu0 %v379, 120
    %v664 = vpop.permute.xlu0 %663
    %665 = vrot.lane.b32.xlu0 %v472, 120
    %v666 = vpop.permute.xlu0 %665
    %667 = vrot.lane.b32.xlu0 %v477, 120
    %v668 = vpop.permute.xlu0 %667
    %v669 = vsel %vm490, %v664, 0
    %v671 = vsel %vm490, %v666, 0
    %v673 = vsel %vm490, %v668, 0
    %675 = vmatprep.subr.mxu0 0.0
    %676 = vmatpush1.xpose.msra.mxu0 %v671
    %677 = vmatprep.subr.mxu0 0.0
    %678 = vmatpush1.xpose.msra.mxu0 %v673
    %679 = vmatprep.subr.mxu0 0.0
    %680 = vmatpush1.xpose.msra.mxu0 0.0
    %681 = vmatprep.subr.mxu0 0.0
    %682 = vmatpush1.xpose.msra.mxu0 0.0
    %683 = vmatprep.subr.mxu0 0.0
    %684 = vmatpush1.xpose.msra.mxu0 0.0
    %685 = vmatprep.subr.mxu0 0.0
    %686 = vmatpush1.xpose.msra.mxu0 0.0
    %687 = vmatprep.subr.mxu0 0.0
    %688 = vmatpush1.xpose.msra.mxu0 0.0
    %689 = vmatprep.subr.mxu0 0.0
    %690 = vmatpush1.xpose.msra.mxu0 0.0
    %691 = vmatprep.subr.mxu0 0.0
    %692 = vmatpush1.xpose.msra.mxu0 0.0
    %693 = vmatprep.subr.mxu0 0.0
    %694 = vmatpush1.xpose.msra.mxu0 0.0
    %695 = vmatprep.subr.mxu0 0.0
    %696 = vmatpush1.xpose.msra.mxu0 0.0
    %697 = vmatprep.subr.mxu0 0.0
    %698 = vmatpush1.xpose.msra.mxu0 0.0
    %699 = vmatprep.subr.mxu0 0.0
    %700 = vmatpush1.xpose.msra.mxu0 0.0
    %701 = vmatprep.subr.mxu0 0.0
    %702 = vmatpush1.xpose.msra.mxu0 0.0
    %703 = vmatprep.subr.mxu0 0.0
    %704 = vmatpush1.xpose.msra.mxu0 0.0
    %705 = vmatprep.subr.mxu0 0.0
    %706 = vmatpush1.xpose.msra.mxu0 0.0
    %707 = vmatprep.subr.mxu0 0.0
    %708 = vmatpush1.xpose.msra.mxu0 0.0
    %709 = vmatprep.subr.mxu0 0.0
    %710 = vmatpush1.xpose.msra.mxu0 0.0
    %711 = vmatprep.subr.mxu0 0.0
    %712 = vmatpush1.xpose.msra.mxu0 0.0
    %713 = vmatprep.subr.mxu0 0.0
    %714 = vmatpush1.xpose.msra.mxu0 0.0
    %715 = vmatprep.subr.mxu0 0.0
    %716 = vmatpush1.xpose.msra.mxu0 0.0
    %717 = vmatprep.subr.mxu0 0.0
    %718 = vmatpush1.xpose.msra.mxu0 0.0
    %719 = vmatprep.subr.mxu0 0.0
    %720 = vmatpush1.xpose.msra.mxu0 0.0
    %721 = vmatprep.subr.mxu0 0.0
    %722 = vmatpush1.xpose.msra.mxu0 0.0
    %723 = vmatprep.subr.mxu0 0.0
    %724 = vmatpush1.xpose.msra.mxu0 0.0
    %725 = vmatprep.subr.mxu0 0.0
    %726 = vmatpush1.xpose.msra.mxu0 0.0
    %727 = vmatprep.subr.mxu0 0.0
    %728 = vmatpush1.xpose.msra.mxu0 0.0
    %729 = vmatprep.subr.mxu0 0.0
    %730 = vmatpush1.xpose.msra.mxu0 0.0
    %731 = vmatprep.subr.mxu0 0.0
    %732 = vmatpush1.xpose.msra.mxu0 0.0
    %733 = vmatprep.subr.mxu0 0.0
    %734 = vmatpush1.xpose.msra.mxu0 0.0
    %735 = vmatprep.subr.mxu0 0.0
    %736 = vmatpush1.xpose.msra.mxu0 0.0
    %737 = vmatprep.subr.mxu0 0.0
    %738 = vmatpush1.xpose.msra.mxu0 0.0
    %739 = vmatprep.mubr.f32.mxu0 0.0
    %740 = vmatmul.mubr.f32.gmra.mrb[0].mxu0 %v669
    %v741 = vpop.f32.mrb[0].mxu0
    %v742 = vadd.f32 0.0, %v741
    %v743 = vpop.f32.mrb[0].mxu0
    %744 = vdwg.mxu0
    %v745 = vmul.f32 %v742, 0.35355338
    %v746 = vsel %vm571, %v745, -inf
    %747 = vmax.xlane.f32.xlu0 %v746
    %v748 = vpop.xlane.xlu0 %747
    %v749 = vsub.f32 %v745, %v748
    %v750 = vmul.f32 %v749, 1.442695
    %v751 = vpow.pop %v750
    %v752 = vsel %vm571, %v751, 0.0
    %753 = vadd.xlane.f32.xlu0 %v752
    %v754 = vpop.xlane.xlu0 %753
    %v755 = vrcp.pop %v754
    %v756 = vmul.f32 %v751, %v755
    %757 = vrot.lane.b32.xlu0 %v472, 88
    %v758 = vpop.permute.xlu0 %757
    %759 = vrot.lane.b32.xlu0 %v477, 88
    %v760 = vpop.permute.xlu0 %759
    %v764 = vsel %vm589, %v756, 0
    %766 = vmatprep.subr.mxu0 0.0
    %767 = vmatpush1.msra.mxu0 %v758
    %768 = vmatprep.subr.mxu0 0.0
    %769 = vmatpush1.msra.mxu0 %v760
    %770 = vmatprep.subr.mxu0 0.0
    %771 = vmatpush1.msra.mxu0 0.0
    %772 = vmatprep.subr.mxu0 0.0
    %773 = vmatpush1.msra.mxu0 0.0
    %774 = vmatprep.subr.mxu0 0.0
    %775 = vmatpush1.msra.mxu0 0.0
    %776 = vmatprep.subr.mxu0 0.0
    %777 = vmatpush1.msra.mxu0 0.0
    %778 = vmatprep.subr.mxu0 0.0
    %779 = vmatpush1.msra.mxu0 0.0
    %780 = vmatprep.subr.mxu0 0.0
    %781 = vmatpush1.msra.mxu0 0.0
    %782 = vmatprep.subr.mxu0 0.0
    %783 = vmatpush1.msra.mxu0 0.0
    %784 = vmatprep.subr.mxu0 0.0
    %785 = vmatpush1.msra.mxu0 0.0
    %786 = vmatprep.subr.mxu0 0.0
    %787 = vmatpush1.msra.mxu0 0.0
    %788 = vmatprep.subr.mxu0 0.0
    %789 = vmatpush1.msra.mxu0 0.0
    %790 = vmatprep.subr.mxu0 0.0
    %791 = vmatpush1.msra.mxu0 0.0
    %792 = vmatprep.subr.mxu0 0.0
    %793 = vmatpush1.msra.mxu0 0.0
    %794 = vmatprep.subr.mxu0 0.0
    %795 = vmatpush1.msra.mxu0 0.0
    %796 = vmatprep.subr.mxu0 0.0
    %797 = vmatpush1.msra.mxu0 0.0
    %798 = vmatprep.subr.mxu0 0.0
    %799 = vmatpush1.msra.mxu0 0.0
    %800 = vmatprep.subr.mxu0 0.0
    %801 = vmatpush1.msra.mxu0 0.0
    %802 = vmatprep.subr.mxu0 0.0
    %803 = vmatpush1.msra.mxu0 0.0
    %804 = vmatprep.subr.mxu0 0.0
    %805 = vmatpush1.msra.mxu0 0.0
    %806 = vmatprep.subr.mxu0 0.0
    %807 = vmatpush1.msra.mxu0 0.0
    %808 = vmatprep.subr.mxu0 0.0
    %809 = vmatpush1.msra.mxu0 0.0
    %810 = vmatprep.subr.mxu0 0.0
    %811 = vmatpush1.msra.mxu0 0.0
    %812 = vmatprep.subr.mxu0 0.0
    %813 = vmatpush1.msra.mxu0 0.0
    %814 = vmatprep.subr.mxu0 0.0
    %815 = vmatpush1.msra.mxu0 0.0
    %816 = vmatprep.subr.mxu0 0.0
    %817 = vmatpush1.msra.mxu0 0.0
    %818 = vmatprep.subr.mxu0 0.0
    %819 = vmatpush1.msra.mxu0 0.0
    %820 = vmatprep.subr.mxu0 0.0
    %821 = vmatpush1.msra.mxu0 0.0
    %822 = vmatprep.subr.mxu0 0.0
    %823 = vmatpush1.msra.mxu0 0.0
    %824 = vmatprep.subr.mxu0 0.0
    %825 = vmatpush1.msra.mxu0 0.0
    %826 = vmatprep.subr.mxu0 0.0
    %827 = vmatpush1.msra.mxu0 0.0
    %828 = vmatprep.subr.mxu0 0.0
    %829 = vmatpush1.msra.mxu0 0.0
    %830 = vmatprep.mubr.f32.mxu0 0.0
    %831 = vmatmul.mubr.f32.gmra.mrb[0].mxu0 %v764
    %v832 = vpop.f32.mrb[0].mxu0
    %v833 = vadd.f32 0.0, %v832
    %v834 = vpop.f32.mrb[0].mxu0
    %835 = vdwg.mxu0
    %836 = vrot.lane.b32.xlu0 %v379, 112
    %v837 = vpop.permute.xlu0 %836
    %838 = vrot.lane.b32.xlu0 %v472, 112
    %v839 = vpop.permute.xlu0 %838
    %840 = vrot.lane.b32.xlu0 %v477, 112
    %v841 = vpop.permute.xlu0 %840
    %v842 = vsel %vm490, %v837, 0
    %v844 = vsel %vm490, %v839, 0
    %v846 = vsel %vm490, %v841, 0
    %848 = vmatprep.subr.mxu0 0.0
    %849 = vmatpush1.xpose.msra.mxu0 %v844
    %850 = vmatprep.subr.mxu0 0.0
    %851 = vmatpush1.xpose.msra.mxu0 %v846
    %852 = vmatprep.subr.mxu0 0.0
    %853 = vmatpush1.xpose.msra.mxu0 0.0
    %854 = vmatprep.subr.mxu0 0.0
    %855 = vmatpush1.xpose.msra.mxu0 0.0
    %856 = vmatprep.subr.mxu0 0.0
    %857 = vmatpush1.xpose.msra.mxu0 0.0
    %858 = vmatprep.subr.mxu0 0.0
    %859 = vmatpush1.xpose.msra.mxu0 0.0
    %860 = vmatprep.subr.mxu0 0.0
    %861 = vmatpush1.xpose.msra.mxu0 0.0
    %862 = vmatprep.subr.mxu0 0.0
    %863 = vmatpush1.xpose.msra.mxu0 0.0
    %864 = vmatprep.subr.mxu0 0.0
    %865 = vmatpush1.xpose.msra.mxu0 0.0
    %866 = vmatprep.subr.mxu0 0.0
    %867 = vmatpush1.xpose.msra.mxu0 0.0
    %868 = vmatprep.subr.mxu0 0.0
    %869 = vmatpush1.xpose.msra.mxu0 0.0
    %870 = vmatprep.subr.mxu0 0.0
    %871 = vmatpush1.xpose.msra.mxu0 0.0
    %872 = vmatprep.subr.mxu0 0.0
    %873 = vmatpush1.xpose.msra.mxu0 0.0
    %874 = vmatprep.subr.mxu0 0.0
    %875 = vmatpush1.xpose.msra.mxu0 0.0
    %876 = vmatprep.subr.mxu0 0.0
    %877 = vmatpush1.xpose.msra.mxu0 0.0
    %878 = vmatprep.subr.mxu0 0.0
    %879 = vmatpush1.xpose.msra.mxu0 0.0
    %880 = vmatprep.subr.mxu0 0.0
    %881 = vmatpush1.xpose.msra.mxu0 0.0
    %882 = vmatprep.subr.mxu0 0.0
    %883 = vmatpush1.xpose.msra.mxu0 0.0
    %884 = vmatprep.subr.mxu0 0.0
    %885 = vmatpush1.xpose.msra.mxu0 0.0
    %886 = vmatprep.subr.mxu0 0.0
    %887 = vmatpush1.xpose.msra.mxu0 0.0
    %888 = vmatprep.subr.mxu0 0.0
    %889 = vmatpush1.xpose.msra.mxu0 0.0
    %890 = vmatprep.subr.mxu0 0.0
    %891 = vmatpush1.xpose.msra.mxu0 0.0
    %892 = vmatprep.subr.mxu0 0.0
    %893 = vmatpush1.xpose.msra.mxu0 0.0
    %894 = vmatprep.subr.mxu0 0.0
    %895 = vmatpush1.xpose.msra.mxu0 0.0
    %896 = vmatprep.subr.mxu0 0.0
    %897 = vmatpush1.xpose.msra.mxu0 0.0
    %898 = vmatprep.subr.mxu0 0.0
    %899 = vmatpush1.xpose.msra.mxu0 0.0
    %900 = vmatprep.subr.mxu0 0.0
    %901 = vmatpush1.xpose.msra.mxu0 0.0
    %902 = vmatprep.subr.mxu0 0.0
    %903 = vmatpush1.xpose.msra.mxu0 0.0
    %904 = vmatprep.subr.mxu0 0.0
    %905 = vmatpush1.xpose.msra.mxu0 0.0
    %906 = vmatprep.subr.mxu0 0.0
    %907 = vmatpush1.xpose.msra.mxu0 0.0
    %908 = vmatprep.subr.mxu0 0.0
    %909 = vmatpush1.xpose.msra.mxu0 0.0
    %910 = vmatprep.subr.mxu0 0.0
    %911 = vmatpush1.xpose.msra.mxu0 0.0
    %912 = vmatprep.mubr.f32.mxu0 0.0
    %913 = vmatmul.mubr.f32.gmra.mrb[0].mxu0 %v842
    %v914 = vpop.f32.mrb[0].mxu0
    %v915 = vadd.f32 0.0, %v914
    %v916 = vpop.f32.mrb[0].mxu0
    %917 = vdwg.mxu0
    %v918 = vmul.f32 %v915, 0.35355338
    %v919 = vsel %vm571, %v918, -inf
    %920 = vmax.xlane.f32.xlu0 %v919
    %v921 = vpop.xlane.xlu0 %920
    %v922 = vsub.f32 %v918, %v921
    %v923 = vmul.f32 %v922, 1.442695
    %v924 = vpow.pop %v923
    %v925 = vsel %vm571, %v924, 0.0
    %926 = vadd.xlane.f32.xlu0 %v925
    %v927 = vpop.xlane.xlu0 %926
    %v928 = vrcp.pop %v927
    %v929 = vmul.f32 %v924, %v928
    %930 = vrot.lane.b32.xlu0 %v472, 80
    %v931 = vpop.permute.xlu0 %930
    %932 = vrot.lane.b32.xlu0 %v477, 80
    %v933 = vpop.permute.xlu0 %932
    %v937 = vsel %vm589, %v929, 0
    %939 = vmatprep.subr.mxu0 0.0
    %940 = vmatpush1.msra.mxu0 %v931
    %941 = vmatprep.subr.mxu0 0.0
    %942 = vmatpush1.msra.mxu0 %v933
    %943 = vmatprep.subr.mxu0 0.0
    %944 = vmatpush1.msra.mxu0 0.0
    %945 = vmatprep.subr.mxu0 0.0
    %946 = vmatpush1.msra.mxu0 0.0
    %947 = vmatprep.subr.mxu0 0.0
    %948 = vmatpush1.msra.mxu0 0.0
    %949 = vmatprep.subr.mxu0 0.0
    %950 = vmatpush1.msra.mxu0 0.0
    %951 = vmatprep.subr.mxu0 0.0
    %952 = vmatpush1.msra.mxu0 0.0
    %953 = vmatprep.subr.mxu0 0.0
    %954 = vmatpush1.msra.mxu0 0.0
    %955 = vmatprep.subr.mxu0 0.0
    %956 = vmatpush1.msra.mxu0 0.0
    %957 = vmatprep.subr.mxu0 0.0
    %958 = vmatpush1.msra.mxu0 0.0
    %959 = vmatprep.subr.mxu0 0.0
    %960 = vmatpush1.msra.mxu0 0.0
    %961 = vmatprep.subr.mxu0 0.0
    %962 = vmatpush1.msra.mxu0 0.0
    %963 = vmatprep.subr.mxu0 0.0
    %964 = vmatpush1.msra.mxu0 0.0
    %965 = vmatprep.subr.mxu0 0.0
    %966 = vmatpush1.msra.mxu0 0.0
    %967 = vmatprep.subr.mxu0 0.0
    %968 = vmatpush1.msra.mxu0 0.0
    %969 = vmatprep.subr.mxu0 0.0
    %970 = vmatpush1.msra.mxu0 0.0
    %971 = vmatprep.subr.mxu0 0.0
    %972 = vmatpush1.msra.mxu0 0.0
    %973 = vmatprep.subr.mxu0 0.0
    %974 = vmatpush1.msra.mxu0 0.0
    %975 = vmatprep.subr.mxu0 0.0
    %976 = vmatpush1.msra.mxu0 0.0
    %977 = vmatprep.subr.mxu0 0.0
    %978 = vmatpush1.msra.mxu0 0.0
    %979 = vmatprep.subr.mxu0 0.0
    %980 = vmatpush1.msra.mxu0 0.0
    %981 = vmatprep.subr.mxu0 0.0
    %982 = vmatpush1.msra.mxu0 0.0
    %983 = vmatprep.subr.mxu0 0.0
    %984 = vmatpush1.msra.mxu0 0.0
    %985 = vmatprep.subr.mxu0 0.0
    %986 = vmatpush1.msra.mxu0 0.0
    %987 = vmatprep.subr.mxu0 0.0
    %988 = vmatpush1.msra.mxu0 0.0
    %989 = vmatprep.subr.mxu0 0.0
    %990 = vmatpush1.msra.mxu0 0.0
    %991 = vmatprep.subr.mxu0 0.0
    %992 = vmatpush1.msra.mxu0 0.0
    %993 = vmatprep.subr.mxu0 0.0
    %994 = vmatpush1.msra.mxu0 0.0
    %995 = vmatprep.subr.mxu0 0.0
    %996 = vmatpush1.msra.mxu0 0.0
    %997 = vmatprep.subr.mxu0 0.0
    %998 = vmatpush1.msra.mxu0 0.0
    %999 = vmatprep.subr.mxu0 0.0
    %1000 = vmatpush1.msra.mxu0 0.0
    %1001 = vmatprep.subr.mxu0 0.0
    %1002 = vmatpush1.msra.mxu0 0.0
    %1003 = vmatprep.mubr.f32.mxu0 0.0
    %1004 = vmatmul.mubr.f32.gmra.mrb[0].mxu0 %v937
    %v1005 = vpop.f32.mrb[0].mxu0
    %v1006 = vadd.f32 0.0, %v1005
    %v1007 = vpop.f32.mrb[0].mxu0
    %1008 = vdwg.mxu0
    %1009 = vrot.lane.b32.xlu0 %v379, 104
    %v1010 = vpop.permute.xlu0 %1009
    %1011 = vrot.lane.b32.xlu0 %v472, 104
    %v1012 = vpop.permute.xlu0 %1011
    %1013 = vrot.lane.b32.xlu0 %v477, 104
    %v1014 = vpop.permute.xlu0 %1013
    %v1015 = vsel %vm490, %v1010, 0
    %v1017 = vsel %vm490, %v1012, 0
    %v1019 = vsel %vm490, %v1014, 0
    %1021 = vmatprep.subr.mxu0 0.0
    %1022 = vmatpush1.xpose.msra.mxu0 %v1017
    %1023 = vmatprep.subr.mxu0 0.0
    %1024 = vmatpush1.xpose.msra.mxu0 %v1019
    %1025 = vmatprep.subr.mxu0 0.0
    %1026 = vmatpush1.xpose.msra.mxu0 0.0
    %1027 = vmatprep.subr.mxu0 0.0
    %1028 = vmatpush1.xpose.msra.mxu0 0.0
    %1029 = vmatprep.subr.mxu0 0.0
    %1030 = vmatpush1.xpose.msra.mxu0 0.0
    %1031 = vmatprep.subr.mxu0 0.0
    %1032 = vmatpush1.xpose.msra.mxu0 0.0
    %1033 = vmatprep.subr.mxu0 0.0
    %1034 = vmatpush1.xpose.msra.mxu0 0.0
    %1035 = vmatprep.subr.mxu0 0.0
    %1036 = vmatpush1.xpose.msra.mxu0 0.0
    %1037 = vmatprep.subr.mxu0 0.0
    %1038 = vmatpush1.xpose.msra.mxu0 0.0
    %1039 = vmatprep.subr.mxu0 0.0
    %1040 = vmatpush1.xpose.msra.mxu0 0.0
    %1041 = vmatprep.subr.mxu0 0.0
    %1042 = vmatpush1.xpose.msra.mxu0 0.0
    %1043 = vmatprep.subr.mxu0 0.0
    %1044 = vmatpush1.xpose.msra.mxu0 0.0
    %1045 = vmatprep.subr.mxu0 0.0
    %1046 = vmatpush1.xpose.msra.mxu0 0.0
    %1047 = vmatprep.subr.mxu0 0.0
    %1048 = vmatpush1.xpose.msra.mxu0 0.0
    %1049 = vmatprep.subr.mxu0 0.0
    %1050 = vmatpush1.xpose.msra.mxu0 0.0
    %1051 = vmatprep.subr.mxu0 0.0
    %1052 = vmatpush1.xpose.msra.mxu0 0.0
    %1053 = vmatprep.subr.mxu0 0.0
    %1054 = vmatpush1.xpose.msra.mxu0 0.0
    %1055 = vmatprep.subr.mxu0 0.0
    %1056 = vmatpush1.xpose.msra.mxu0 0.0
    %1057 = vmatprep.subr.mxu0 0.0
    %1058 = vmatpush1.xpose.msra.mxu0 0.0
    %1059 = vmatprep.subr.mxu0 0.0
    %1060 = vmatpush1.xpose.msra.mxu0 0.0
    %1061 = vmatprep.subr.mxu0 0.0
    %1062 = vmatpush1.xpose.msra.mxu0 0.0
    %1063 = vmatprep.subr.mxu0 0.0
    %1064 = vmatpush1.xpose.msra.mxu0 0.0
    %1065 = vmatprep.subr.mxu0 0.0
    %1066 = vmatpush1.xpose.msra.mxu0 0.0
    %1067 = vmatprep.subr.mxu0 0.0
    %1068 = vmatpush1.xpose.msra.mxu0 0.0
    %1069 = vmatprep.subr.mxu0 0.0
    %1070 = vmatpush1.xpose.msra.mxu0 0.0
    %1071 = vmatprep.subr.mxu0 0.0
    %1072 = vmatpush1.xpose.msra.mxu0 0.0
    %1073 = vmatprep.subr.mxu0 0.0
    %1074 = vmatpush1.xpose.msra.mxu0 0.0
    %1075 = vmatprep.subr.mxu0 0.0
    %1076 = vmatpush1.xpose.msra.mxu0 0.0
    %1077 = vmatprep.subr.mxu0 0.0
    %1078 = vmatpush1.xpose.msra.mxu0 0.0
    %1079 = vmatprep.subr.mxu0 0.0
    %1080 = vmatpush1.xpose.msra.mxu0 0.0
    %1081 = vmatprep.subr.mxu0 0.0
    %1082 = vmatpush1.xpose.msra.mxu0 0.0
    %1083 = vmatprep.subr.mxu0 0.0
    %1084 = vmatpush1.xpose.msra.mxu0 0.0
    %1085 = vmatprep.mubr.f32.mxu0 0.0
    %1086 = vmatmul.mubr.f32.gmra.mrb[0].mxu0 %v1015
    %v1087 = vpop.f32.mrb[0].mxu0
    %v1088 = vadd.f32 0.0, %v1087
    %v1089 = vpop.f32.mrb[0].mxu0
    %1090 = vdwg.mxu0
    %v1091 = vmul.f32 %v1088, 0.35355338
    %v1092 = vsel %vm571, %v1091, -inf
    %1093 = vmax.xlane.f32.xlu0 %v1092
    %v1094 = vpop.xlane.xlu0 %1093
    %v1095 = vsub.f32 %v1091, %v1094
    %v1096 = vmul.f32 %v1095, 1.442695
    %v1097 = vpow.pop %v1096
    %v1098 = vsel %vm571, %v1097, 0.0
    %1099 = vadd.xlane.f32.xlu0 %v1098
    %v1100 = vpop.xlane.xlu0 %1099
    %v1101 = vrcp.pop %v1100
    %v1102 = vmul.f32 %v1097, %v1101
    %1103 = vrot.lane.b32.xlu0 %v472, 72
    %v1104 = vpop.permute.xlu0 %1103
    %1105 = vrot.lane.b32.xlu0 %v477, 72
    %v1106 = vpop.permute.xlu0 %1105
    %v1110 = vsel %vm589, %v1102, 0
    %1112 = vmatprep.subr.mxu0 0.0
    %1113 = vmatpush1.msra.mxu0 %v1104
    %1114 = vmatprep.subr.mxu0 0.0
    %1115 = vmatpush1.msra.mxu0 %v1106
    %1116 = vmatprep.subr.mxu0 0.0
    %1117 = vmatpush1.msra.mxu0 0.0
    %1118 = vmatprep.subr.mxu0 0.0
    %1119 = vmatpush1.msra.mxu0 0.0
    %1120 = vmatprep.subr.mxu0 0.0
    %1121 = vmatpush1.msra.mxu0 0.0
    %1122 = vmatprep.subr.mxu0 0.0
    %1123 = vmatpush1.msra.mxu0 0.0
    %1124 = vmatprep.subr.mxu0 0.0
    %1125 = vmatpush1.msra.mxu0 0.0
    %1126 = vmatprep.subr.mxu0 0.0
    %1127 = vmatpush1.msra.mxu0 0.0
    %1128 = vmatprep.subr.mxu0 0.0
    %1129 = vmatpush1.msra.mxu0 0.0
    %1130 = vmatprep.subr.mxu0 0.0
    %1131 = vmatpush1.msra.mxu0 0.0
    %1132 = vmatprep.subr.mxu0 0.0
    %1133 = vmatpush1.msra.mxu0 0.0
    %1134 = vmatprep.subr.mxu0 0.0
    %1135 = vmatpush1.msra.mxu0 0.0
    %1136 = vmatprep.subr.mxu0 0.0
    %1137 = vmatpush1.msra.mxu0 0.0
    %1138 = vmatprep.subr.mxu0 0.0
    %1139 = vmatpush1.msra.mxu0 0.0
    %1140 = vmatprep.subr.mxu0 0.0
    %1141 = vmatpush1.msra.mxu0 0.0
    %1142 = vmatprep.subr.mxu0 0.0
    %1143 = vmatpush1.msra.mxu0 0.0
    %1144 = vmatprep.subr.mxu0 0.0
    %1145 = vmatpush1.msra.mxu0 0.0
    %1146 = vmatprep.subr.mxu0 0.0
    %1147 = vmatpush1.msra.mxu0 0.0
    %1148 = vmatprep.subr.mxu0 0.0
    %1149 = vmatpush1.msra.mxu0 0.0
    %1150 = vmatprep.subr.mxu0 0.0
    %1151 = vmatpush1.msra.mxu0 0.0
    %1152 = vmatprep.subr.mxu0 0.0
    %1153 = vmatpush1.msra.mxu0 0.0
    %1154 = vmatprep.subr.mxu0 0.0
    %1155 = vmatpush1.msra.mxu0 0.0
    %1156 = vmatprep.subr.mxu0 0.0
    %1157 = vmatpush1.msra.mxu0 0.0
    %1158 = vmatprep.subr.mxu0 0.0
    %1159 = vmatpush1.msra.mxu0 0.0
    %1160 = vmatprep.subr.mxu0 0.0
    %1161 = vmatpush1.msra.mxu0 0.0
    %1162 = vmatprep.subr.mxu0 0.0
    %1163 = vmatpush1.msra.mxu0 0.0
    %1164 = vmatprep.subr.mxu0 0.0
    %1165 = vmatpush1.msra.mxu0 0.0
    %1166 = vmatprep.subr.mxu0 0.0
    %1167 = vmatpush1.msra.mxu0 0.0
    %1168 = vmatprep.subr.mxu0 0.0
    %1169 = vmatpush1.msra.mxu0 0.0
    %1170 = vmatprep.subr.mxu0 0.0
    %1171 = vmatpush1.msra.mxu0 0.0
    %1172 = vmatprep.subr.mxu0 0.0
    %1173 = vmatpush1.msra.mxu0 0.0
    %1174 = vmatprep.subr.mxu0 0.0
    %1175 = vmatpush1.msra.mxu0 0.0
    %1176 = vmatprep.mubr.f32.mxu0 0.0
    %1177 = vmatmul.mubr.f32.gmra.mrb[0].mxu0 %v1110
    %v1178 = vpop.f32.mrb[0].mxu0
    %v1179 = vadd.f32 0.0, %v1178
    %v1180 = vpop.f32.mrb[0].mxu0
    %1181 = vdwg.mxu0
    %1183 = vrot.lane.b32.xlu0 %v833, 8
    %v1184 = vpop.permute.xlu0 %1183
    %1187 = vrot.lane.b32.xlu0 %v1006, 16
    %v1188 = vpop.permute.xlu0 %1187
    %1191 = vrot.lane.b32.xlu0 %v1179, 24
    %v1192 = vpop.permute.xlu0 %1191
    %v1194 = vsel %vm490, %v660, %v1184
    %v1195 = vsel %vm589, %v1194, %v1188
    %vm1196 = vcmask 195584
    %v1197 = vsel %vm1196, %v1195, %v1192
    %v1198 = vrot.slane %v379, 1
    %v1199 = vsel %vm490, %v1198, 0
    %v1202 = vsel %vm490, %v482, 0
    %v1205 = vsel %vm490, %v487, 0
    %1207 = vmatprep.subr.mxu0 0.0
    %1208 = vmatpush1.xpose.msra.mxu0 %v1202
    %1209 = vmatprep.subr.mxu0 0.0
    %1210 = vmatpush1.xpose.msra.mxu0 %v1205
    %1211 = vmatprep.subr.mxu0 0.0
    %1212 = vmatpush1.xpose.msra.mxu0 0.0
    %1213 = vmatprep.subr.mxu0 0.0
    %1214 = vmatpush1.xpose.msra.mxu0 0.0
    %1215 = vmatprep.subr.mxu0 0.0
    %1216 = vmatpush1.xpose.msra.mxu0 0.0
    %1217 = vmatprep.subr.mxu0 0.0
    %1218 = vmatpush1.xpose.msra.mxu0 0.0
    %1219 = vmatprep.subr.mxu0 0.0
    %1220 = vmatpush1.xpose.msra.mxu0 0.0
    %1221 = vmatprep.subr.mxu0 0.0
    %1222 = vmatpush1.xpose.msra.mxu0 0.0
    %1223 = vmatprep.subr.mxu0 0.0
    %1224 = vmatpush1.xpose.msra.mxu0 0.0
    %1225 = vmatprep.subr.mxu0 0.0
    %1226 = vmatpush1.xpose.msra.mxu0 0.0
    %1227 = vmatprep.subr.mxu0 0.0
    %1228 = vmatpush1.xpose.msra.mxu0 0.0
    %1229 = vmatprep.subr.mxu0 0.0
    %1230 = vmatpush1.xpose.msra.mxu0 0.0
    %1231 = vmatprep.subr.mxu0 0.0
    %1232 = vmatpush1.xpose.msra.mxu0 0.0
    %1233 = vmatprep.subr.mxu0 0.0
    %1234 = vmatpush1.xpose.msra.mxu0 0.0
    %1235 = vmatprep.subr.mxu0 0.0
    %1236 = vmatpush1.xpose.msra.mxu0 0.0
    %1237 = vmatprep.subr.mxu0 0.0
    %1238 = vmatpush1.xpose.msra.mxu0 0.0
    %1239 = vmatprep.subr.mxu0 0.0
    %1240 = vmatpush1.xpose.msra.mxu0 0.0
    %1241 = vmatprep.subr.mxu0 0.0
    %1242 = vmatpush1.xpose.msra.mxu0 0.0
    %1243 = vmatprep.subr.mxu0 0.0
    %1244 = vmatpush1.xpose.msra.mxu0 0.0
    %1245 = vmatprep.subr.mxu0 0.0
    %1246 = vmatpush1.xpose.msra.mxu0 0.0
    %1247 = vmatprep.subr.mxu0 0.0
    %1248 = vmatpush1.xpose.msra.mxu0 0.0
    %1249 = vmatprep.subr.mxu0 0.0
    %1250 = vmatpush1.xpose.msra.mxu0 0.0
    %1251 = vmatprep.subr.mxu0 0.0
    %1252 = vmatpush1.xpose.msra.mxu0 0.0
    %1253 = vmatprep.subr.mxu0 0.0
    %1254 = vmatpush1.xpose.msra.mxu0 0.0
    %1255 = vmatprep.subr.mxu0 0.0
    %1256 = vmatpush1.xpose.msra.mxu0 0.0
    %1257 = vmatprep.subr.mxu0 0.0
    %1258 = vmatpush1.xpose.msra.mxu0 0.0
    %1259 = vmatprep.subr.mxu0 0.0
    %1260 = vmatpush1.xpose.msra.mxu0 0.0
    %1261 = vmatprep.subr.mxu0 0.0
    %1262 = vmatpush1.xpose.msra.mxu0 0.0
    %1263 = vmatprep.subr.mxu0 0.0
    %1264 = vmatpush1.xpose.msra.mxu0 0.0
    %1265 = vmatprep.subr.mxu0 0.0
    %1266 = vmatpush1.xpose.msra.mxu0 0.0
    %1267 = vmatprep.subr.mxu0 0.0
    %1268 = vmatpush1.xpose.msra.mxu0 0.0
    %1269 = vmatprep.subr.mxu0 0.0
    %1270 = vmatpush1.xpose.msra.mxu0 0.0
    %1271 = vmatprep.mubr.f32.mxu0 0.0
    %1272 = vmatmul.mubr.f32.gmra.mrb[0].mxu0 %v1199
    %v1273 = vpop.f32.mrb[0].mxu0
    %v1274 = vadd.f32 0.0, %v1273
    %v1275 = vpop.f32.mrb[0].mxu0
    %1276 = vdwg.mxu0
    %v1277 = vmul.f32 %v1274, 0.35355338
    %v1278 = vsel %vm571, %v1277, -inf
    %1279 = vmax.xlane.f32.xlu0 %v1278
    %v1280 = vpop.xlane.xlu0 %1279
    %v1281 = vsub.f32 %v1277, %v1280
    %v1282 = vmul.f32 %v1281, 1.442695
    %v1283 = vpow.pop %v1282
    %v1284 = vsel %vm571, %v1283, 0.0
    %1285 = vadd.xlane.f32.xlu0 %v1284
    %v1286 = vpop.xlane.xlu0 %1285
    %v1287 = vrcp.pop %v1286
    %v1288 = vmul.f32 %v1283, %v1287
    %1289 = vrot.lane.b32.xlu0 %v482, 96
    %v1290 = vpop.permute.xlu0 %1289
    %1291 = vrot.lane.b32.xlu0 %v487, 96
    %v1292 = vpop.permute.xlu0 %1291
    %v1296 = vsel %vm589, %v1288, 0
    %1298 = vmatprep.subr.mxu0 0.0
    %1299 = vmatpush1.msra.mxu0 %v1290
    %1300 = vmatprep.subr.mxu0 0.0
    %1301 = vmatpush1.msra.mxu0 %v1292
    %1302 = vmatprep.subr.mxu0 0.0
    %1303 = vmatpush1.msra.mxu0 0.0
    %1304 = vmatprep.subr.mxu0 0.0
    %1305 = vmatpush1.msra.mxu0 0.0
    %1306 = vmatprep.subr.mxu0 0.0
    %1307 = vmatpush1.msra.mxu0 0.0
    %1308 = vmatprep.subr.mxu0 0.0
    %1309 = vmatpush1.msra.mxu0 0.0
    %1310 = vmatprep.subr.mxu0 0.0
    %1311 = vmatpush1.msra.mxu0 0.0
    %1312 = vmatprep.subr.mxu0 0.0
    %1313 = vmatpush1.msra.mxu0 0.0
    %1314 = vmatprep.subr.mxu0 0.0
    %1315 = vmatpush1.msra.mxu0 0.0
    %1316 = vmatprep.subr.mxu0 0.0
    %1317 = vmatpush1.msra.mxu0 0.0
    %1318 = vmatprep.subr.mxu0 0.0
    %1319 = vmatpush1.msra.mxu0 0.0
    %1320 = vmatprep.subr.mxu0 0.0
    %1321 = vmatpush1.msra.mxu0 0.0
    %1322 = vmatprep.subr.mxu0 0.0
    %1323 = vmatpush1.msra.mxu0 0.0
    %1324 = vmatprep.subr.mxu0 0.0
    %1325 = vmatpush1.msra.mxu0 0.0
    %1326 = vmatprep.subr.mxu0 0.0
    %1327 = vmatpush1.msra.mxu0 0.0
    %1328 = vmatprep.subr.mxu0 0.0
    %1329 = vmatpush1.msra.mxu0 0.0
    %1330 = vmatprep.subr.mxu0 0.0
    %1331 = vmatpush1.msra.mxu0 0.0
    %1332 = vmatprep.subr.mxu0 0.0
    %1333 = vmatpush1.msra.mxu0 0.0
    %1334 = vmatprep.subr.mxu0 0.0
    %1335 = vmatpush1.msra.mxu0 0.0
    %1336 = vmatprep.subr.mxu0 0.0
    %1337 = vmatpush1.msra.mxu0 0.0
    %1338 = vmatprep.subr.mxu0 0.0
    %1339 = vmatpush1.msra.mxu0 0.0
    %1340 = vmatprep.subr.mxu0 0.0
    %1341 = vmatpush1.msra.mxu0 0.0
    %1342 = vmatprep.subr.mxu0 0.0
    %1343 = vmatpush1.msra.mxu0 0.0
    %1344 = vmatprep.subr.mxu0 0.0
    %1345 = vmatpush1.msra.mxu0 0.0
    %1346 = vmatprep.subr.mxu0 0.0
    %1347 = vmatpush1.msra.mxu0 0.0
    %1348 = vmatprep.subr.mxu0 0.0
    %1349 = vmatpush1.msra.mxu0 0.0
    %1350 = vmatprep.subr.mxu0 0.0
    %1351 = vmatpush1.msra.mxu0 0.0
    %1352 = vmatprep.subr.mxu0 0.0
    %1353 = vmatpush1.msra.mxu0 0.0
    %1354 = vmatprep.subr.mxu0 0.0
    %1355 = vmatpush1.msra.mxu0 0.0
    %1356 = vmatprep.subr.mxu0 0.0
    %1357 = vmatpush1.msra.mxu0 0.0
    %1358 = vmatprep.subr.mxu0 0.0
    %1359 = vmatpush1.msra.mxu0 0.0
    %1360 = vmatprep.subr.mxu0 0.0
    %1361 = vmatpush1.msra.mxu0 0.0
    %1362 = vmatprep.mubr.f32.mxu0 0.0
    %1363 = vmatmul.mubr.f32.gmra.mrb[0].mxu0 %v1296
    %v1364 = vpop.f32.mrb[0].mxu0
    %v1365 = vadd.f32 0.0, %v1364
    %v1366 = vpop.f32.mrb[0].mxu0
    %1367 = vdwg.mxu0
    %1368 = vrot.lane.b32.xlu0 %v1198, 120
    %v1369 = vpop.permute.xlu0 %1368
    %1370 = vrot.lane.b32.xlu0 %v482, 120
    %v1371 = vpop.permute.xlu0 %1370
    %1372 = vrot.lane.b32.xlu0 %v487, 120
    %v1373 = vpop.permute.xlu0 %1372
    %v1374 = vsel %vm490, %v1369, 0
    %v1376 = vsel %vm490, %v1371, 0
    %v1378 = vsel %vm490, %v1373, 0
    %1380 = vmatprep.subr.mxu0 0.0
    %1381 = vmatpush1.xpose.msra.mxu0 %v1376
    %1382 = vmatprep.subr.mxu0 0.0
    %1383 = vmatpush1.xpose.msra.mxu0 %v1378
    %1384 = vmatprep.subr.mxu0 0.0
    %1385 = vmatpush1.xpose.msra.mxu0 0.0
    %1386 = vmatprep.subr.mxu0 0.0
    %1387 = vmatpush1.xpose.msra.mxu0 0.0
    %1388 = vmatprep.subr.mxu0 0.0
    %1389 = vmatpush1.xpose.msra.mxu0 0.0
    %1390 = vmatprep.subr.mxu0 0.0
    %1391 = vmatpush1.xpose.msra.mxu0 0.0
    %1392 = vmatprep.subr.mxu0 0.0
    %1393 = vmatpush1.xpose.msra.mxu0 0.0
    %1394 = vmatprep.subr.mxu0 0.0
    %1395 = vmatpush1.xpose.msra.mxu0 0.0
    %1396 = vmatprep.subr.mxu0 0.0
    %1397 = vmatpush1.xpose.msra.mxu0 0.0
    %1398 = vmatprep.subr.mxu0 0.0
    %1399 = vmatpush1.xpose.msra.mxu0 0.0
    %1400 = vmatprep.subr.mxu0 0.0
    %1401 = vmatpush1.xpose.msra.mxu0 0.0
    %1402 = vmatprep.subr.mxu0 0.0
    %1403 = vmatpush1.xpose.msra.mxu0 0.0
    %1404 = vmatprep.subr.mxu0 0.0
    %1405 = vmatpush1.xpose.msra.mxu0 0.0
    %1406 = vmatprep.subr.mxu0 0.0
    %1407 = vmatpush1.xpose.msra.mxu0 0.0
    %1408 = vmatprep.subr.mxu0 0.0
    %1409 = vmatpush1.xpose.msra.mxu0 0.0
    %1410 = vmatprep.subr.mxu0 0.0
    %1411 = vmatpush1.xpose.msra.mxu0 0.0
    %1412 = vmatprep.subr.mxu0 0.0
    %1413 = vmatpush1.xpose.msra.mxu0 0.0
    %1414 = vmatprep.subr.mxu0 0.0
    %1415 = vmatpush1.xpose.msra.mxu0 0.0
    %1416 = vmatprep.subr.mxu0 0.0
    %1417 = vmatpush1.xpose.msra.mxu0 0.0
    %1418 = vmatprep.subr.mxu0 0.0
    %1419 = vmatpush1.xpose.msra.mxu0 0.0
    %1420 = vmatprep.subr.mxu0 0.0
    %1421 = vmatpush1.xpose.msra.mxu0 0.0
    %1422 = vmatprep.subr.mxu0 0.0
    %1423 = vmatpush1.xpose.msra.mxu0 0.0
    %1424 = vmatprep.subr.mxu0 0.0
    %1425 = vmatpush1.xpose.msra.mxu0 0.0
    %1426 = vmatprep.subr.mxu0 0.0
    %1427 = vmatpush1.xpose.msra.mxu0 0.0
    %1428 = vmatprep.subr.mxu0 0.0
    %1429 = vmatpush1.xpose.msra.mxu0 0.0
    %1430 = vmatprep.subr.mxu0 0.0
    %1431 = vmatpush1.xpose.msra.mxu0 0.0
    %1432 = vmatprep.subr.mxu0 0.0
    %1433 = vmatpush1.xpose.msra.mxu0 0.0
    %1434 = vmatprep.subr.mxu0 0.0
    %1435 = vmatpush1.xpose.msra.mxu0 0.0
    %1436 = vmatprep.subr.mxu0 0.0
    %1437 = vmatpush1.xpose.msra.mxu0 0.0
    %1438 = vmatprep.subr.mxu0 0.0
    %1439 = vmatpush1.xpose.msra.mxu0 0.0
    %1440 = vmatprep.subr.mxu0 0.0
    %1441 = vmatpush1.xpose.msra.mxu0 0.0
    %1442 = vmatprep.subr.mxu0 0.0
    %1443 = vmatpush1.xpose.msra.mxu0 0.0
    %1444 = vmatprep.mubr.f32.mxu0 0.0
    %1445 = vmatmul.mubr.f32.gmra.mrb[0].mxu0 %v1374
    %v1446 = vpop.f32.mrb[0].mxu0
    %v1447 = vadd.f32 0.0, %v1446
    %v1448 = vpop.f32.mrb[0].mxu0
    %1449 = vdwg.mxu0
    %v1450 = vmul.f32 %v1447, 0.35355338
    %v1451 = vsel %vm571, %v1450, -inf
    %1452 = vmax.xlane.f32.xlu0 %v1451
    %v1453 = vpop.xlane.xlu0 %1452
    %v1454 = vsub.f32 %v1450, %v1453
    %v1455 = vmul.f32 %v1454, 1.442695
    %v1456 = vpow.pop %v1455
    %v1457 = vsel %vm571, %v1456, 0.0
    %1458 = vadd.xlane.f32.xlu0 %v1457
    %v1459 = vpop.xlane.xlu0 %1458
    %v1460 = vrcp.pop %v1459
    %v1461 = vmul.f32 %v1456, %v1460
    %1462 = vrot.lane.b32.xlu0 %v482, 88
    %v1463 = vpop.permute.xlu0 %1462
    %1464 = vrot.lane.b32.xlu0 %v487, 88
    %v1465 = vpop.permute.xlu0 %1464
    %v1469 = vsel %vm589, %v1461, 0
    %1471 = vmatprep.subr.mxu0 0.0
    %1472 = vmatpush1.msra.mxu0 %v1463
    %1473 = vmatprep.subr.mxu0 0.0
    %1474 = vmatpush1.msra.mxu0 %v1465
    %1475 = vmatprep.subr.mxu0 0.0
    %1476 = vmatpush1.msra.mxu0 0.0
    %1477 = vmatprep.subr.mxu0 0.0
    %1478 = vmatpush1.msra.mxu0 0.0
    %1479 = vmatprep.subr.mxu0 0.0
    %1480 = vmatpush1.msra.mxu0 0.0
    %1481 = vmatprep.subr.mxu0 0.0
    %1482 = vmatpush1.msra.mxu0 0.0
    %1483 = vmatprep.subr.mxu0 0.0
    %1484 = vmatpush1.msra.mxu0 0.0
    %1485 = vmatprep.subr.mxu0 0.0
    %1486 = vmatpush1.msra.mxu0 0.0
    %1487 = vmatprep.subr.mxu0 0.0
    %1488 = vmatpush1.msra.mxu0 0.0
    %1489 = vmatprep.subr.mxu0 0.0
    %1490 = vmatpush1.msra.mxu0 0.0
    %1491 = vmatprep.subr.mxu0 0.0
    %1492 = vmatpush1.msra.mxu0 0.0
    %1493 = vmatprep.subr.mxu0 0.0
    %1494 = vmatpush1.msra.mxu0 0.0
    %1495 = vmatprep.subr.mxu0 0.0
    %1496 = vmatpush1.msra.mxu0 0.0
    %1497 = vmatprep.subr.mxu0 0.0
    %1498 = vmatpush1.msra.mxu0 0.0
    %1499 = vmatprep.subr.mxu0 0.0
    %1500 = vmatpush1.msra.mxu0 0.0
    %1501 = vmatprep.subr.mxu0 0.0
    %1502 = vmatpush1.msra.mxu0 0.0
    %1503 = vmatprep.subr.mxu0 0.0
    %1504 = vmatpush1.msra.mxu0 0.0
    %1505 = vmatprep.subr.mxu0 0.0
    %1506 = vmatpush1.msra.mxu0 0.0
    %1507 = vmatprep.subr.mxu0 0.0
    %1508 = vmatpush1.msra.mxu0 0.0
    %1509 = vmatprep.subr.mxu0 0.0
    %1510 = vmatpush1.msra.mxu0 0.0
    %1511 = vmatprep.subr.mxu0 0.0
    %1512 = vmatpush1.msra.mxu0 0.0
    %1513 = vmatprep.subr.mxu0 0.0
    %1514 = vmatpush1.msra.mxu0 0.0
    %1515 = vmatprep.subr.mxu0 0.0
    %1516 = vmatpush1.msra.mxu0 0.0
    %1517 = vmatprep.subr.mxu0 0.0
    %1518 = vmatpush1.msra.mxu0 0.0
    %1519 = vmatprep.subr.mxu0 0.0
    %1520 = vmatpush1.msra.mxu0 0.0
    %1521 = vmatprep.subr.mxu0 0.0
    %1522 = vmatpush1.msra.mxu0 0.0
    %1523 = vmatprep.subr.mxu0 0.0
    %1524 = vmatpush1.msra.mxu0 0.0
    %1525 = vmatprep.subr.mxu0 0.0
    %1526 = vmatpush1.msra.mxu0 0.0
    %1527 = vmatprep.subr.mxu0 0.0
    %1528 = vmatpush1.msra.mxu0 0.0
    %1529 = vmatprep.subr.mxu0 0.0
    %1530 = vmatpush1.msra.mxu0 0.0
    %1531 = vmatprep.subr.mxu0 0.0
    %1532 = vmatpush1.msra.mxu0 0.0
    %1533 = vmatprep.subr.mxu0 0.0
    %1534 = vmatpush1.msra.mxu0 0.0
    %1535 = vmatprep.mubr.f32.mxu0 0.0
    %1536 = vmatmul.mubr.f32.gmra.mrb[0].mxu0 %v1469
    %v1537 = vpop.f32.mrb[0].mxu0
    %v1538 = vadd.f32 0.0, %v1537
    %v1539 = vpop.f32.mrb[0].mxu0
    %1540 = vdwg.mxu0
    %1541 = vrot.lane.b32.xlu0 %v1198, 112
    %v1542 = vpop.permute.xlu0 %1541
    %1543 = vrot.lane.b32.xlu0 %v482, 112
    %v1544 = vpop.permute.xlu0 %1543
    %1545 = vrot.lane.b32.xlu0 %v487, 112
    %v1546 = vpop.permute.xlu0 %1545
    %v1547 = vsel %vm490, %v1542, 0
    %v1549 = vsel %vm490, %v1544, 0
    %v1551 = vsel %vm490, %v1546, 0
    %1553 = vmatprep.subr.mxu0 0.0
    %1554 = vmatpush1.xpose.msra.mxu0 %v1549
    %1555 = vmatprep.subr.mxu0 0.0
    %1556 = vmatpush1.xpose.msra.mxu0 %v1551
    %1557 = vmatprep.subr.mxu0 0.0
    %1558 = vmatpush1.xpose.msra.mxu0 0.0
    %1559 = vmatprep.subr.mxu0 0.0
    %1560 = vmatpush1.xpose.msra.mxu0 0.0
    %1561 = vmatprep.subr.mxu0 0.0
    %1562 = vmatpush1.xpose.msra.mxu0 0.0
    %1563 = vmatprep.subr.mxu0 0.0
    %1564 = vmatpush1.xpose.msra.mxu0 0.0
    %1565 = vmatprep.subr.mxu0 0.0
    %1566 = vmatpush1.xpose.msra.mxu0 0.0
    %1567 = vmatprep.subr.mxu0 0.0
    %1568 = vmatpush1.xpose.msra.mxu0 0.0
    %1569 = vmatprep.subr.mxu0 0.0
    %1570 = vmatpush1.xpose.msra.mxu0 0.0
    %1571 = vmatprep.subr.mxu0 0.0
    %1572 = vmatpush1.xpose.msra.mxu0 0.0
    %1573 = vmatprep.subr.mxu0 0.0
    %1574 = vmatpush1.xpose.msra.mxu0 0.0
    %1575 = vmatprep.subr.mxu0 0.0
    %1576 = vmatpush1.xpose.msra.mxu0 0.0
    %1577 = vmatprep.subr.mxu0 0.0
    %1578 = vmatpush1.xpose.msra.mxu0 0.0
    %1579 = vmatprep.subr.mxu0 0.0
    %1580 = vmatpush1.xpose.msra.mxu0 0.0
    %1581 = vmatprep.subr.mxu0 0.0
    %1582 = vmatpush1.xpose.msra.mxu0 0.0
    %1583 = vmatprep.subr.mxu0 0.0
    %1584 = vmatpush1.xpose.msra.mxu0 0.0
    %1585 = vmatprep.subr.mxu0 0.0
    %1586 = vmatpush1.xpose.msra.mxu0 0.0
    %1587 = vmatprep.subr.mxu0 0.0
    %1588 = vmatpush1.xpose.msra.mxu0 0.0
    %1589 = vmatprep.subr.mxu0 0.0
    %1590 = vmatpush1.xpose.msra.mxu0 0.0
    %1591 = vmatprep.subr.mxu0 0.0
    %1592 = vmatpush1.xpose.msra.mxu0 0.0
    %1593 = vmatprep.subr.mxu0 0.0
    %1594 = vmatpush1.xpose.msra.mxu0 0.0
    %1595 = vmatprep.subr.mxu0 0.0
    %1596 = vmatpush1.xpose.msra.mxu0 0.0
    %1597 = vmatprep.subr.mxu0 0.0
    %1598 = vmatpush1.xpose.msra.mxu0 0.0
    %1599 = vmatprep.subr.mxu0 0.0
    %1600 = vmatpush1.xpose.msra.mxu0 0.0
    %1601 = vmatprep.subr.mxu0 0.0
    %1602 = vmatpush1.xpose.msra.mxu0 0.0
    %1603 = vmatprep.subr.mxu0 0.0
    %1604 = vmatpush1.xpose.msra.mxu0 0.0
    %1605 = vmatprep.subr.mxu0 0.0
    %1606 = vmatpush1.xpose.msra.mxu0 0.0
    %1607 = vmatprep.subr.mxu0 0.0
    %1608 = vmatpush1.xpose.msra.mxu0 0.0
    %1609 = vmatprep.subr.mxu0 0.0
    %1610 = vmatpush1.xpose.msra.mxu0 0.0
    %1611 = vmatprep.subr.mxu0 0.0
    %1612 = vmatpush1.xpose.msra.mxu0 0.0
    %1613 = vmatprep.subr.mxu0 0.0
    %1614 = vmatpush1.xpose.msra.mxu0 0.0
    %1615 = vmatprep.subr.mxu0 0.0
    %1616 = vmatpush1.xpose.msra.mxu0 0.0
    %1617 = vmatprep.mubr.f32.mxu0 0.0
    %1618 = vmatmul.mubr.f32.gmra.mrb[0].mxu0 %v1547
    %v1619 = vpop.f32.mrb[0].mxu0
    %v1620 = vadd.f32 0.0, %v1619
    %v1621 = vpop.f32.mrb[0].mxu0
    %1622 = vdwg.mxu0
    %v1623 = vmul.f32 %v1620, 0.35355338
    %v1624 = vsel %vm571, %v1623, -inf
    %1625 = vmax.xlane.f32.xlu0 %v1624
    %v1626 = vpop.xlane.xlu0 %1625
    %v1627 = vsub.f32 %v1623, %v1626
    %v1628 = vmul.f32 %v1627, 1.442695
    %v1629 = vpow.pop %v1628
    %v1630 = vsel %vm571, %v1629, 0.0
    %1631 = vadd.xlane.f32.xlu0 %v1630
    %v1632 = vpop.xlane.xlu0 %1631
    %v1633 = vrcp.pop %v1632
    %v1634 = vmul.f32 %v1629, %v1633
    %1635 = vrot.lane.b32.xlu0 %v482, 80
    %v1636 = vpop.permute.xlu0 %1635
    %1637 = vrot.lane.b32.xlu0 %v487, 80
    %v1638 = vpop.permute.xlu0 %1637
    %v1642 = vsel %vm589, %v1634, 0
    %1644 = vmatprep.subr.mxu0 0.0
    %1645 = vmatpush1.msra.mxu0 %v1636
    %1646 = vmatprep.subr.mxu0 0.0
    %1647 = vmatpush1.msra.mxu0 %v1638
    %1648 = vmatprep.subr.mxu0 0.0
    %1649 = vmatpush1.msra.mxu0 0.0
    %1650 = vmatprep.subr.mxu0 0.0
    %1651 = vmatpush1.msra.mxu0 0.0
    %1652 = vmatprep.subr.mxu0 0.0
    %1653 = vmatpush1.msra.mxu0 0.0
    %1654 = vmatprep.subr.mxu0 0.0
    %1655 = vmatpush1.msra.mxu0 0.0
    %1656 = vmatprep.subr.mxu0 0.0
    %1657 = vmatpush1.msra.mxu0 0.0
    %1658 = vmatprep.subr.mxu0 0.0
    %1659 = vmatpush1.msra.mxu0 0.0
    %1660 = vmatprep.subr.mxu0 0.0
    %1661 = vmatpush1.msra.mxu0 0.0
    %1662 = vmatprep.subr.mxu0 0.0
    %1663 = vmatpush1.msra.mxu0 0.0
    %1664 = vmatprep.subr.mxu0 0.0
    %1665 = vmatpush1.msra.mxu0 0.0
    %1666 = vmatprep.subr.mxu0 0.0
    %1667 = vmatpush1.msra.mxu0 0.0
    %1668 = vmatprep.subr.mxu0 0.0
    %1669 = vmatpush1.msra.mxu0 0.0
    %1670 = vmatprep.subr.mxu0 0.0
    %1671 = vmatpush1.msra.mxu0 0.0
    %1672 = vmatprep.subr.mxu0 0.0
    %1673 = vmatpush1.msra.mxu0 0.0
    %1674 = vmatprep.subr.mxu0 0.0
    %1675 = vmatpush1.msra.mxu0 0.0
    %1676 = vmatprep.subr.mxu0 0.0
    %1677 = vmatpush1.msra.mxu0 0.0
    %1678 = vmatprep.subr.mxu0 0.0
    %1679 = vmatpush1.msra.mxu0 0.0
    %1680 = vmatprep.subr.mxu0 0.0
    %1681 = vmatpush1.msra.mxu0 0.0
    %1682 = vmatprep.subr.mxu0 0.0
    %1683 = vmatpush1.msra.mxu0 0.0
    %1684 = vmatprep.subr.mxu0 0.0
    %1685 = vmatpush1.msra.mxu0 0.0
    %1686 = vmatprep.subr.mxu0 0.0
    %1687 = vmatpush1.msra.mxu0 0.0
    %1688 = vmatprep.subr.mxu0 0.0
    %1689 = vmatpush1.msra.mxu0 0.0
    %1690 = vmatprep.subr.mxu0 0.0
    %1691 = vmatpush1.msra.mxu0 0.0
    %1692 = vmatprep.subr.mxu0 0.0
    %1693 = vmatpush1.msra.mxu0 0.0
    %1694 = vmatprep.subr.mxu0 0.0
    %1695 = vmatpush1.msra.mxu0 0.0
    %1696 = vmatprep.subr.mxu0 0.0
    %1697 = vmatpush1.msra.mxu0 0.0
    %1698 = vmatprep.subr.mxu0 0.0
    %1699 = vmatpush1.msra.mxu0 0.0
    %1700 = vmatprep.subr.mxu0 0.0
    %1701 = vmatpush1.msra.mxu0 0.0
    %1702 = vmatprep.subr.mxu0 0.0
    %1703 = vmatpush1.msra.mxu0 0.0
    %1704 = vmatprep.subr.mxu0 0.0
    %1705 = vmatpush1.msra.mxu0 0.0
    %1706 = vmatprep.subr.mxu0 0.0
    %1707 = vmatpush1.msra.mxu0 0.0
    %1708 = vmatprep.mubr.f32.mxu0 0.0
    %1709 = vmatmul.mubr.f32.gmra.mrb[0].mxu0 %v1642
    %v1710 = vpop.f32.mrb[0].mxu0
    %v1711 = vadd.f32 0.0, %v1710
    %v1712 = vpop.f32.mrb[0].mxu0
    %1713 = vdwg.mxu0
    %1714 = vrot.lane.b32.xlu0 %v1198, 104
    %v1715 = vpop.permute.xlu0 %1714
    %1716 = vrot.lane.b32.xlu0 %v482, 104
    %v1717 = vpop.permute.xlu0 %1716
    %1718 = vrot.lane.b32.xlu0 %v487, 104
    %v1719 = vpop.permute.xlu0 %1718
    %v1720 = vsel %vm490, %v1715, 0
    %v1722 = vsel %vm490, %v1717, 0
    %v1724 = vsel %vm490, %v1719, 0
    %1726 = vmatprep.subr.mxu0 0.0
    %1727 = vmatpush1.xpose.msra.mxu0 %v1722
    %1728 = vmatprep.subr.mxu0 0.0
    %1729 = vmatpush1.xpose.msra.mxu0 %v1724
    %1730 = vmatprep.subr.mxu0 0.0
    %1731 = vmatpush1.xpose.msra.mxu0 0.0
    %1732 = vmatprep.subr.mxu0 0.0
    %1733 = vmatpush1.xpose.msra.mxu0 0.0
    %1734 = vmatprep.subr.mxu0 0.0
    %1735 = vmatpush1.xpose.msra.mxu0 0.0
    %1736 = vmatprep.subr.mxu0 0.0
    %1737 = vmatpush1.xpose.msra.mxu0 0.0
    %1738 = vmatprep.subr.mxu0 0.0
    %1739 = vmatpush1.xpose.msra.mxu0 0.0
    %1740 = vmatprep.subr.mxu0 0.0
    %1741 = vmatpush1.xpose.msra.mxu0 0.0
    %1742 = vmatprep.subr.mxu0 0.0
    %1743 = vmatpush1.xpose.msra.mxu0 0.0
    %1744 = vmatprep.subr.mxu0 0.0
    %1745 = vmatpush1.xpose.msra.mxu0 0.0
    %1746 = vmatprep.subr.mxu0 0.0
    %1747 = vmatpush1.xpose.msra.mxu0 0.0
    %1748 = vmatprep.subr.mxu0 0.0
    %1749 = vmatpush1.xpose.msra.mxu0 0.0
    %1750 = vmatprep.subr.mxu0 0.0
    %1751 = vmatpush1.xpose.msra.mxu0 0.0
    %1752 = vmatprep.subr.mxu0 0.0
    %1753 = vmatpush1.xpose.msra.mxu0 0.0
    %1754 = vmatprep.subr.mxu0 0.0
    %1755 = vmatpush1.xpose.msra.mxu0 0.0
    %1756 = vmatprep.subr.mxu0 0.0
    %1757 = vmatpush1.xpose.msra.mxu0 0.0
    %1758 = vmatprep.subr.mxu0 0.0
    %1759 = vmatpush1.xpose.msra.mxu0 0.0
    %1760 = vmatprep.subr.mxu0 0.0
    %1761 = vmatpush1.xpose.msra.mxu0 0.0
    %1762 = vmatprep.subr.mxu0 0.0
    %1763 = vmatpush1.xpose.msra.mxu0 0.0
    %1764 = vmatprep.subr.mxu0 0.0
    %1765 = vmatpush1.xpose.msra.mxu0 0.0
    %1766 = vmatprep.subr.mxu0 0.0
    %1767 = vmatpush1.xpose.msra.mxu0 0.0
    %1768 = vmatprep.subr.mxu0 0.0
    %1769 = vmatpush1.xpose.msra.mxu0 0.0
    %1770 = vmatprep.subr.mxu0 0.0
    %1771 = vmatpush1.xpose.msra.mxu0 0.0
    %1772 = vmatprep.subr.mxu0 0.0
    %1773 = vmatpush1.xpose.msra.mxu0 0.0
    %1774 = vmatprep.subr.mxu0 0.0
    %1775 = vmatpush1.xpose.msra.mxu0 0.0
    %1776 = vmatprep.subr.mxu0 0.0
    %1777 = vmatpush1.xpose.msra.mxu0 0.0
    %1778 = vmatprep.subr.mxu0 0.0
    %1779 = vmatpush1.xpose.msra.mxu0 0.0
    %1780 = vmatprep.subr.mxu0 0.0
    %1781 = vmatpush1.xpose.msra.mxu0 0.0
    %1782 = vmatprep.subr.mxu0 0.0
    %1783 = vmatpush1.xpose.msra.mxu0 0.0
    %1784 = vmatprep.subr.mxu0 0.0
    %1785 = vmatpush1.xpose.msra.mxu0 0.0
    %1786 = vmatprep.subr.mxu0 0.0
    %1787 = vmatpush1.xpose.msra.mxu0 0.0
    %1788 = vmatprep.subr.mxu0 0.0
    %1789 = vmatpush1.xpose.msra.mxu0 0.0
    %1790 = vmatprep.mubr.f32.mxu0 0.0
    %1791 = vmatmul.mubr.f32.gmra.mrb[0].mxu0 %v1720
    %v1792 = vpop.f32.mrb[0].mxu0
    %v1793 = vadd.f32 0.0, %v1792
    %v1794 = vpop.f32.mrb[0].mxu0
    %1795 = vdwg.mxu0
    %v1796 = vmul.f32 %v1793, 0.35355338
    %v1797 = vsel %vm571, %v1796, -inf
    %1798 = vmax.xlane.f32.xlu0 %v1797
    %v1799 = vpop.xlane.xlu0 %1798
    %v1800 = vsub.f32 %v1796, %v1799
    %v1801 = vmul.f32 %v1800, 1.442695
    %v1802 = vpow.pop %v1801
    %v1803 = vsel %vm571, %v1802, 0.0
    %1804 = vadd.xlane.f32.xlu0 %v1803
    %v1805 = vpop.xlane.xlu0 %1804
    %v1806 = vrcp.pop %v1805
    %v1807 = vmul.f32 %v1802, %v1806
    %1808 = vrot.lane.b32.xlu0 %v482, 72
    %v1809 = vpop.permute.xlu0 %1808
    %1810 = vrot.lane.b32.xlu0 %v487, 72
    %v1811 = vpop.permute.xlu0 %1810
    %v1815 = vsel %vm589, %v1807, 0
    %1817 = vmatprep.subr.mxu0 0.0
    %1818 = vmatpush1.msra.mxu0 %v1809
    %1819 = vmatprep.subr.mxu0 0.0
    %1820 = vmatpush1.msra.mxu0 %v1811
    %1821 = vmatprep.subr.mxu0 0.0
    %1822 = vmatpush1.msra.mxu0 0.0
    %1823 = vmatprep.subr.mxu0 0.0
    %1824 = vmatpush1.msra.mxu0 0.0
    %1825 = vmatprep.subr.mxu0 0.0
    %1826 = vmatpush1.msra.mxu0 0.0
    %1827 = vmatprep.subr.mxu0 0.0
    %1828 = vmatpush1.msra.mxu0 0.0
    %1829 = vmatprep.subr.mxu0 0.0
    %1830 = vmatpush1.msra.mxu0 0.0
    %1831 = vmatprep.subr.mxu0 0.0
    %1832 = vmatpush1.msra.mxu0 0.0
    %1833 = vmatprep.subr.mxu0 0.0
    %1834 = vmatpush1.msra.mxu0 0.0
    %1835 = vmatprep.subr.mxu0 0.0
    %1836 = vmatpush1.msra.mxu0 0.0
    %1837 = vmatprep.subr.mxu0 0.0
    %1838 = vmatpush1.msra.mxu0 0.0
    %1839 = vmatprep.subr.mxu0 0.0
    %1840 = vmatpush1.msra.mxu0 0.0
    %1841 = vmatprep.subr.mxu0 0.0
    %1842 = vmatpush1.msra.mxu0 0.0
    %1843 = vmatprep.subr.mxu0 0.0
    %1844 = vmatpush1.msra.mxu0 0.0
    %1845 = vmatprep.subr.mxu0 0.0
    %1846 = vmatpush1.msra.mxu0 0.0
    %1847 = vmatprep.subr.mxu0 0.0
    %1848 = vmatpush1.msra.mxu0 0.0
    %1849 = vmatprep.subr.mxu0 0.0
    %1850 = vmatpush1.msra.mxu0 0.0
    %1851 = vmatprep.subr.mxu0 0.0
    %1852 = vmatpush1.msra.mxu0 0.0
    %1853 = vmatprep.subr.mxu0 0.0
    %1854 = vmatpush1.msra.mxu0 0.0
    %1855 = vmatprep.subr.mxu0 0.0
    %1856 = vmatpush1.msra.mxu0 0.0
    %1857 = vmatprep.subr.mxu0 0.0
    %1858 = vmatpush1.msra.mxu0 0.0
    %1859 = vmatprep.subr.mxu0 0.0
    %1860 = vmatpush1.msra.mxu0 0.0
    %1861 = vmatprep.subr.mxu0 0.0
    %1862 = vmatpush1.msra.mxu0 0.0
    %1863 = vmatprep.subr.mxu0 0.0
    %1864 = vmatpush1.msra.mxu0 0.0
    %1865 = vmatprep.subr.mxu0 0.0
    %1866 = vmatpush1.msra.mxu0 0.0
    %1867 = vmatprep.subr.mxu0 0.0
    %1868 = vmatpush1.msra.mxu0 0.0
    %1869 = vmatprep.subr.mxu0 0.0
    %1870 = vmatpush1.msra.mxu0 0.0
    %1871 = vmatprep.subr.mxu0 0.0
    %1872 = vmatpush1.msra.mxu0 0.0
    %1873 = vmatprep.subr.mxu0 0.0
    %1874 = vmatpush1.msra.mxu0 0.0
    %1875 = vmatprep.subr.mxu0 0.0
    %1876 = vmatpush1.msra.mxu0 0.0
    %1877 = vmatprep.subr.mxu0 0.0
    %1878 = vmatpush1.msra.mxu0 0.0
    %1879 = vmatprep.subr.mxu0 0.0
    %1880 = vmatpush1.msra.mxu0 0.0
    %1881 = vmatprep.mubr.f32.mxu0 0.0
    %1882 = vmatmul.mubr.f32.gmra.mrb[0].mxu0 %v1815
    %v1883 = vpop.f32.mrb[0].mxu0
    %v1884 = vadd.f32 0.0, %v1883
    %v1885 = vpop.f32.mrb[0].mxu0
    %1886 = vdwg.mxu0
    %1888 = vrot.lane.b32.xlu0 %v1538, 8
    %v1889 = vpop.permute.xlu0 %1888
    %1892 = vrot.lane.b32.xlu0 %v1711, 16
    %v1893 = vpop.permute.xlu0 %1892
    %1896 = vrot.lane.b32.xlu0 %v1884, 24
    %v1897 = vpop.permute.xlu0 %1896
    %v1899 = vsel %vm490, %v1365, %v1889
    %v1900 = vsel %vm589, %v1899, %v1893
    %v1901 = vsel %vm1196, %v1900, %v1897
    %v1903 = vrot.slane %v1901, 7
    %vm1905 = vcmask 1040384
    %v1906 = vsel %vm1905, %v1197, %v1903
    %v1907 = vld [vmem:[%s13] sm:$0xff]
    %v1908 = vld [vmem:[%s13 + $0x8] sm:$0xff]
    %v1909 = vld [vmem:[%s13 + $0x10] sm:$0xff]
    %v1910 = vld [vmem:[%s13 + $0x18] sm:$0xff]
    %v1911 = vld [vmem:[%s14] sm:$0x1]
    %v1913 = vlaneseq
    %v1914 = vshrl.u32 %v1913, 7
    %v1915 = vsub.s32 0, %v1914
    %v1916 = vrot.slane %v1911, %v1915
    %v1919 = vsel %vm106, %v1906, 0
    %1921 = vmatprep.subr.mxu0 0.0
    %1922 = vmatpush1.msra.mxu0 %v1907
    %1923 = vmatprep.subr.mxu0 0.0
    %1924 = vmatpush1.msra.mxu0 %v1908
    %1925 = vmatprep.subr.mxu0 0.0
    %1926 = vmatpush1.msra.mxu0 %v1909
    %1927 = vmatprep.subr.mxu0 0.0
    %1928 = vmatpush1.msra.mxu0 %v1910
    %1929 = vmatprep.subr.mxu0 0.0
    %1930 = vmatpush1.msra.mxu0 0.0
    %1931 = vmatprep.subr.mxu0 0.0
    %1932 = vmatpush1.msra.mxu0 0.0
    %1933 = vmatprep.subr.mxu0 0.0
    %1934 = vmatpush1.msra.mxu0 0.0
    %1935 = vmatprep.subr.mxu0 0.0
    %1936 = vmatpush1.msra.mxu0 0.0
    %1937 = vmatprep.subr.mxu0 0.0
    %1938 = vmatpush1.msra.mxu0 0.0
    %1939 = vmatprep.subr.mxu0 0.0
    %1940 = vmatpush1.msra.mxu0 0.0
    %1941 = vmatprep.subr.mxu0 0.0
    %1942 = vmatpush1.msra.mxu0 0.0
    %1943 = vmatprep.subr.mxu0 0.0
    %1944 = vmatpush1.msra.mxu0 0.0
    %1945 = vmatprep.subr.mxu0 0.0
    %1946 = vmatpush1.msra.mxu0 0.0
    %1947 = vmatprep.subr.mxu0 0.0
    %1948 = vmatpush1.msra.mxu0 0.0
    %1949 = vmatprep.subr.mxu0 0.0
    %1950 = vmatpush1.msra.mxu0 0.0
    %1951 = vmatprep.subr.mxu0 0.0
    %1952 = vmatpush1.msra.mxu0 0.0
    %1953 = vmatprep.subr.mxu0 0.0
    %1954 = vmatpush1.msra.mxu0 0.0
    %1955 = vmatprep.subr.mxu0 0.0
    %1956 = vmatpush1.msra.mxu0 0.0
    %1957 = vmatprep.subr.mxu0 0.0
    %1958 = vmatpush1.msra.mxu0 0.0
    %1959 = vmatprep.subr.mxu0 0.0
    %1960 = vmatpush1.msra.mxu0 0.0
    %1961 = vmatprep.subr.mxu0 0.0
    %1962 = vmatpush1.msra.mxu0 0.0
    %1963 = vmatprep.subr.mxu0 0.0
    %1964 = vmatpush1.msra.mxu0 0.0
    %1965 = vmatprep.subr.mxu0 0.0
    %1966 = vmatpush1.msra.mxu0 0.0
    %1967 = vmatprep.subr.mxu0 0.0
    %1968 = vmatpush1.msra.mxu0 0.0
    %1969 = vmatprep.subr.mxu0 0.0
    %1970 = vmatpush1.msra.mxu0 0.0
    %1971 = vmatprep.subr.mxu0 0.0
    %1972 = vmatpush1.msra.mxu0 0.0
    %1973 = vmatprep.subr.mxu0 0.0
    %1974 = vmatpush1.msra.mxu0 0.0
    %1975 = vmatprep.subr.mxu0 0.0
    %1976 = vmatpush1.msra.mxu0 0.0
    %1977 = vmatprep.subr.mxu0 0.0
    %1978 = vmatpush1.msra.mxu0 0.0
    %1979 = vmatprep.subr.mxu0 0.0
    %1980 = vmatpush1.msra.mxu0 0.0
    %1981 = vmatprep.subr.mxu0 0.0
    %1982 = vmatpush1.msra.mxu0 0.0
    %1983 = vmatprep.subr.mxu0 0.0
    %1984 = vmatpush1.msra.mxu0 0.0
    %1985 = vmatprep.mubr.f32.mxu0 0.0
    %1986 = vmatmul.mubr.f32.gmra.mrb[0].mxu0 %v1919
    %v1987 = vpop.f32.mrb[0].mxu0
    %v1988 = vadd.f32 %v1916, %v1987
    %v1989 = vpop.f32.mrb[0].mxu0
    %1990 = vdwg.mxu0
    %v1991 = vadd.f32 %v297, %v1988
    %v1992 = vld [vmem:[%s15] sm:$0x1]
    %v1993 = vld [vmem:[%s16] sm:$0x1]
    %v1994 = vsel %vm269, %v1991, 0.0
    %1995 = vadd.xlane.f32.xlu0 %v1994
    %v1996 = vpop.xlane.xlu0 %1995
    %v1997 = vmul.f32 %v1996, %v273
    %v1998 = vsub.f32 %v1991, %v1997
    %v1999 = vmul.f32 %v1998, %v1998
    %v2000 = vsel %vm269, %v1999, 0.0
    %2001 = vadd.xlane.f32.xlu0 %v2000
    %v2002 = vpop.xlane.xlu0 %2001
    %v2003 = vmul.f32 %v2002, %v273
    %v2004 = vadd.f32 %v2003, 1e-05
    %v2005 = vrsqrt.pop %v2004
    %v2006 = vmul.f32 %v1998, %v2005
    %v2008 = vlaneseq
    %v2009 = vshrl.u32 %v2008, 7
    %v2010 = vsub.s32 0, %v2009
    %v2011 = vrot.slane %v1992, %v2010
    %v2013 = vmul.f32 %v2006, %v2011
    %v2015 = vlaneseq
    %v2016 = vshrl.u32 %v2015, 7
    %v2017 = vsub.s32 0, %v2016
    %v2018 = vrot.slane %v1993, %v2017
    %v2020 = vadd.f32 %v2013, %v2018
    %v2021 = vld [vmem:[%s17] sm:$0xff]
    %v2022 = vld [vmem:[%s17 + $0x8] sm:$0xff]
    %v2023 = vld [vmem:[%s17 + $0x10] sm:$0xff]
    %v2024 = vld [vmem:[%s17 + $0x18] sm:$0xff]
    %v2025 = vld [vmem:[%s18] sm:$0x1]
    %v2027 = vlaneseq
    %v2028 = vshrl.u32 %v2027, 7
    %v2029 = vsub.s32 0, %v2028
    %v2030 = vrot.slane %v2025, %v2029
    %v2033 = vsel %vm106, %v2020, 0
    %2035 = vmatprep.subr.mxu0 0.0
    %2036 = vmatpush1.msra.mxu0 %v2021
    %2037 = vmatprep.subr.mxu0 0.0
    %2038 = vmatpush1.msra.mxu0 %v2022
    %2039 = vmatprep.subr.mxu0 0.0
    %2040 = vmatpush1.msra.mxu0 %v2023
    %2041 = vmatprep.subr.mxu0 0.0
    %2042 = vmatpush1.msra.mxu0 %v2024
    %2043 = vmatprep.subr.mxu0 0.0
    %2044 = vmatpush1.msra.mxu0 0.0
    %2045 = vmatprep.subr.mxu0 0.0
    %2046 = vmatpush1.msra.mxu0 0.0
    %2047 = vmatprep.subr.mxu0 0.0
    %2048 = vmatpush1.msra.mxu0 0.0
    %2049 = vmatprep.subr.mxu0 0.0
    %2050 = vmatpush1.msra.mxu0 0.0
    %2051 = vmatprep.subr.mxu0 0.0
    %2052 = vmatpush1.msra.mxu0 0.0
    %2053 = vmatprep.subr.mxu0 0.0
    %2054 = vmatpush1.msra.mxu0 0.0
    %2055 = vmatprep.subr.mxu0 0.0
    %2056 = vmatpush1.msra.mxu0 0.0
    %2057 = vmatprep.subr.mxu0 0.0
    %2058 = vmatpush1.msra.mxu0 0.0
    %2059 = vmatprep.subr.mxu0 0.0
    %2060 = vmatpush1.msra.mxu0 0.0
    %2061 = vmatprep.subr.mxu0 0.0
    %2062 = vmatpush1.msra.mxu0 0.0
    %2063 = vmatprep.subr.mxu0 0.0
    %2064 = vmatpush1.msra.mxu0 0.0
    %2065 = vmatprep.subr.mxu0 0.0
    %2066 = vmatpush1.msra.mxu0 0.0
    %2067 = vmatprep.subr.mxu0 0.0
    %2068 = vmatpush1.msra.mxu0 0.0
    %2069 = vmatprep.subr.mxu0 0.0
    %2070 = vmatpush1.msra.mxu0 0.0
    %2071 = vmatprep.subr.mxu0 0.0
    %2072 = vmatpush1.msra.mxu0 0.0
    %2073 = vmatprep.subr.mxu0 0.0
    %2074 = vmatpush1.msra.mxu0 0.0
    %2075 = vmatprep.subr.mxu0 0.0
    %2076 = vmatpush1.msra.mxu0 0.0
    %2077 = vmatprep.subr.mxu0 0.0
    %2078 = vmatpush1.msra.mxu0 0.0
    %2079 = vmatprep.subr.mxu0 0.0
    %2080 = vmatpush1.msra.mxu0 0.0
    %2081 = vmatprep.subr.mxu0 0.0
    %2082 = vmatpush1.msra.mxu0 0.0
    %2083 = vmatprep.subr.mxu0 0.0
    %2084 = vmatpush1.msra.mxu0 0.0
    %2085 = vmatprep.subr.mxu0 0.0
    %2086 = vmatpush1.msra.mxu0 0.0
    %2087 = vmatprep.subr.mxu0 0.0
    %2088 = vmatpush1.msra.mxu0 0.0
    %2089 = vmatprep.subr.mxu0 0.0
    %2090 = vmatpush1.msra.mxu0 0.0
    %2091 = vmatprep.subr.mxu0 0.0
    %2092 = vmatpush1.msra.mxu0 0.0
    %2093 = vmatprep.subr.mxu0 0.0
    %2094 = vmatpush1.msra.mxu0 0.0
    %2095 = vmatprep.subr.mxu0 0.0
    %2096 = vmatpush1.msra.mxu0 0.0
    %2097 = vmatprep.subr.mxu0 0.0
    %2098 = vmatpush1.msra.mxu0 0.0
    %2099 = vmatprep.mubr.f32.mxu0 0.0
    %2100 = vmatmul.mubr.f32.gmra.mrb[0].mxu0 %v2033
    %v2101 = vpop.f32.mrb[0].mxu0
    %v2102 = vadd.f32 %v2030, %v2101
    %v2103 = vpop.f32.mrb[0].mxu0
    %2104 = vdwg.mxu0
    %v2105 = vmax.f32 %v2102, 0.0
    %v2106 = vld [vmem:[%s19] sm:$0xff]
    %v2107 = vld [vmem:[%s19 + $0x8] sm:$0xff]
    %v2108 = vld [vmem:[%s19 + $0x10] sm:$0xff]
    %v2109 = vld [vmem:[%s19 + $0x18] sm:$0xff]
    %v2110 = vld [vmem:[%s19 + $0x20] sm:$0xff]
    %v2111 = vld [vmem:[%s19 + $0x28] sm:$0xff]
    %v2112 = vld [vmem:[%s19 + $0x30] sm:$0xff]
    %v2113 = vld [vmem:[%s19 + $0x38] sm:$0xff]
    %v2114 = vld [vmem:[%s20] sm:$0x1]
    %v2116 = vlaneseq
    %v2117 = vshrl.u32 %v2116, 7
    %v2118 = vsub.s32 0, %v2117
    %v2119 = vrot.slane %v2114, %v2118
    %vm2121 = vcmask 523264
    %v2123 = vsel %vm2121, %v2105, 0
    %2125 = vmatprep.subr.mxu0 0.0
    %2126 = vmatpush1.msra.mxu0 %v2106
    %2127 = vmatprep.subr.mxu0 0.0
    %2128 = vmatpush1.msra.mxu0 %v2107
    %2129 = vmatprep.subr.mxu0 0.0
    %2130 = vmatpush1.msra.mxu0 %v2108
    %2131 = vmatprep.subr.mxu0 0.0
    %2132 = vmatpush1.msra.mxu0 %v2109
    %2133 = vmatprep.subr.mxu0 0.0
    %2134 = vmatpush1.msra.mxu0 %v2110
    %2135 = vmatprep.subr.mxu0 0.0
    %2136 = vmatpush1.msra.mxu0 %v2111
    %2137 = vmatprep.subr.mxu0 0.0
    %2138 = vmatpush1.msra.mxu0 %v2112
    %2139 = vmatprep.subr.mxu0 0.0
    %2140 = vmatpush1.msra.mxu0 %v2113
    %2141 = vmatprep.subr.mxu0 0.0
    %2142 = vmatpush1.msra.mxu0 0.0
    %2143 = vmatprep.subr.mxu0 0.0
    %2144 = vmatpush1.msra.mxu0 0.0
    %2145 = vmatprep.subr.mxu0 0.0
    %2146 = vmatpush1.msra.mxu0 0.0
    %2147 = vmatprep.subr.mxu0 0.0
    %2148 = vmatpush1.msra.mxu0 0.0
    %2149 = vmatprep.subr.mxu0 0.0
    %2150 = vmatpush1.msra.mxu0 0.0
    %2151 = vmatprep.subr.mxu0 0.0
    %2152 = vmatpush1.msra.mxu0 0.0
    %2153 = vmatprep.subr.mxu0 0.0
    %2154 = vmatpush1.msra.mxu0 0.0
    %2155 = vmatprep.subr.mxu0 0.0
    %2156 = vmatpush1.msra.mxu0 0.0
    %2157 = vmatprep.subr.mxu0 0.0
    %2158 = vmatpush1.msra.mxu0 0.0
    %2159 = vmatprep.subr.mxu0 0.0
    %2160 = vmatpush1.msra.mxu0 0.0
    %2161 = vmatprep.subr.mxu0 0.0
    %2162 = vmatpush1.msra.mxu0 0.0
    %2163 = vmatprep.subr.mxu0 0.0
    %2164 = vmatpush1.msra.mxu0 0.0
    %2165 = vmatprep.subr.mxu0 0.0
    %2166 = vmatpush1.msra.mxu0 0.0
    %2167 = vmatprep.subr.mxu0 0.0
    %2168 = vmatpush1.msra.mxu0 0.0
    %2169 = vmatprep.subr.mxu0 0.0
    %2170 = vmatpush1.msra.mxu0 0.0
    %2171 = vmatprep.subr.mxu0 0.0
    %2172 = vmatpush1.msra.mxu0 0.0
    %2173 = vmatprep.subr.mxu0 0.0
    %2174 = vmatpush1.msra.mxu0 0.0
    %2175 = vmatprep.subr.mxu0 0.0
    %2176 = vmatpush1.msra.mxu0 0.0
    %2177 = vmatprep.subr.mxu0 0.0
    %2178 = vmatpush1.msra.mxu0 0.0
    %2179 = vmatprep.subr.mxu0 0.0
    %2180 = vmatpush1.msra.mxu0 0.0
    %2181 = vmatprep.subr.mxu0 0.0
    %2182 = vmatpush1.msra.mxu0 0.0
    %2183 = vmatprep.subr.mxu0 0.0
    %2184 = vmatpush1.msra.mxu0 0.0
    %2185 = vmatprep.subr.mxu0 0.0
    %2186 = vmatpush1.msra.mxu0 0.0
    %2187 = vmatprep.subr.mxu0 0.0
    %2188 = vmatpush1.msra.mxu0 0.0
    %2189 = vmatprep.mubr.f32.mxu0 0.0
    %2190 = vmatmul.mubr.f32.gmra.mrb[0].mxu0 %v2123
    %v2191 = vpop.f32.mrb[0].mxu0
    %v2192 = vadd.f32 %v2119, %v2191
    %v2193 = vpop.f32.mrb[0].mxu0
    %2194 = vdwg.mxu0
    %v2195 = vadd.f32 %v2020, %v2192
    %v2196 = vld [vmem:[%s21] sm:$0x1]
    %v2197 = vld [vmem:[%s22] sm:$0x1]
    %v2198 = vsel %vm269, %v2195, 0.0
    %2199 = vadd.xlane.f32.xlu0 %v2198
    %v2200 = vpop.xlane.xlu0 %2199
    %v2201 = vmul.f32 %v2200, %v273
    %v2202 = vsub.f32 %v2195, %v2201
    %v2203 = vmul.f32 %v2202, %v2202
    %v2204 = vsel %vm269, %v2203, 0.0
    %2205 = vadd.xlane.f32.xlu0 %v2204
    %v2206 = vpop.xlane.xlu0 %2205
    %v2207 = vmul.f32 %v2206, %v273
    %v2208 = vadd.f32 %v2207, 1e-05
    %v2209 = vrsqrt.pop %v2208
    %v2210 = vmul.f32 %v2202, %v2209
    %v2212 = vlaneseq
    %v2213 = vshrl.u32 %v2212, 7
    %v2214 = vsub.s32 0, %v2213
    %v2215 = vrot.slane %v2196, %v2214
    %v2217 = vmul.f32 %v2210, %v2215
    %v2219 = vlaneseq
    %v2220 = vshrl.u32 %v2219, 7
    %v2221 = vsub.s32 0, %v2220
    %v2222 = vrot.slane %v2197, %v2221
    %v2224 = vadd.f32 %v2217, %v2222
    %v2225 = vld [vmem:[%s23] sm:$0xff]
    %v2226 = vld [vmem:[%s23 + $0x8] sm:$0xff]
    %v2227 = vld [vmem:[%s23 + $0x10] sm:$0xff]
    %v2228 = vld [vmem:[%s23 + $0x18] sm:$0xff]
    %v2229 = vld [vmem:[%s24] sm:$0x1]
    %v2231 = vlaneseq
    %v2232 = vshrl.u32 %v2231, 7
    %v2233 = vsub.s32 0, %v2232
    %v2234 = vrot.slane %v2229, %v2233
    %v2237 = vsel %vm106, %v2224, 0
    %2239 = vmatprep.subr.mxu0 0.0
    %2240 = vmatpush1.msra.mxu0 %v2225
    %2241 = vmatprep.subr.mxu0 0.0
    %2242 = vmatpush1.msra.mxu0 %v2226
    %2243 = vmatprep.subr.mxu0 0.0
    %2244 = vmatpush1.msra.mxu0 %v2227
    %2245 = vmatprep.subr.mxu0 0.0
    %2246 = vmatpush1.msra.mxu0 %v2228
    %2247 = vmatprep.subr.mxu0 0.0
    %2248 = vmatpush1.msra.mxu0 0.0
    %2249 = vmatprep.subr.mxu0 0.0
    %2250 = vmatpush1.msra.mxu0 0.0
    %2251 = vmatprep.subr.mxu0 0.0
    %2252 = vmatpush1.msra.mxu0 0.0
    %2253 = vmatprep.subr.mxu0 0.0
    %2254 = vmatpush1.msra.mxu0 0.0
    %2255 = vmatprep.subr.mxu0 0.0
    %2256 = vmatpush1.msra.mxu0 0.0
    %2257 = vmatprep.subr.mxu0 0.0
    %2258 = vmatpush1.msra.mxu0 0.0
    %2259 = vmatprep.subr.mxu0 0.0
    %2260 = vmatpush1.msra.mxu0 0.0
    %2261 = vmatprep.subr.mxu0 0.0
    %2262 = vmatpush1.msra.mxu0 0.0
    %2263 = vmatprep.subr.mxu0 0.0
    %2264 = vmatpush1.msra.mxu0 0.0
    %2265 = vmatprep.subr.mxu0 0.0
    %2266 = vmatpush1.msra.mxu0 0.0
    %2267 = vmatprep.subr.mxu0 0.0
    %2268 = vmatpush1.msra.mxu0 0.0
    %2269 = vmatprep.subr.mxu0 0.0
    %2270 = vmatpush1.msra.mxu0 0.0
    %2271 = vmatprep.subr.mxu0 0.0
    %2272 = vmatpush1.msra.mxu0 0.0
    %2273 = vmatprep.subr.mxu0 0.0
    %2274 = vmatpush1.msra.mxu0 0.0
    %2275 = vmatprep.subr.mxu0 0.0
    %2276 = vmatpush1.msra.mxu0 0.0
    %2277 = vmatprep.subr.mxu0 0.0
    %2278 = vmatpush1.msra.mxu0 0.0
    %2279 = vmatprep.subr.mxu0 0.0
    %2280 = vmatpush1.msra.mxu0 0.0
    %2281 = vmatprep.subr.mxu0 0.0
    %2282 = vmatpush1.msra.mxu0 0.0
    %2283 = vmatprep.subr.mxu0 0.0
    %2284 = vmatpush1.msra.mxu0 0.0
    %2285 = vmatprep.subr.mxu0 0.0
    %2286 = vmatpush1.msra.mxu0 0.0
    %2287 = vmatprep.subr.mxu0 0.0
    %2288 = vmatpush1.msra.mxu0 0.0
    %2289 = vmatprep.subr.mxu0 0.0
    %2290 = vmatpush1.msra.mxu0 0.0
    %2291 = vmatprep.subr.mxu0 0.0
    %2292 = vmatpush1.msra.mxu0 0.0
    %2293 = vmatprep.subr.mxu0 0.0
    %2294 = vmatpush1.msra.mxu0 0.0
    %2295 = vmatprep.subr.mxu0 0.0
    %2296 = vmatpush1.msra.mxu0 0.0
    %2297 = vmatprep.subr.mxu0 0.0
    %2298 = vmatpush1.msra.mxu0 0.0
    %2299 = vmatprep.subr.mxu0 0.0
    %2300 = vmatpush1.msra.mxu0 0.0
    %2301 = vmatprep.subr.mxu0 0.0
    %2302 = vmatpush1.msra.mxu0 0.0
    %2303 = vmatprep.mubr.f32.mxu0 0.0
    %2304 = vmatmul.mubr.f32.gmra.mrb[0].mxu0 %v2237
    %v2305 = vpop.f32.mrb[0].mxu0
    %v2306 = vadd.f32 %v2234, %v2305
    %v2307 = vpop.f32.mrb[0].mxu0
    %2308 = vdwg.mxu0
    %2309 = vst.msk [vmem:[#allocation2] sm:$0x3] %vm269, %v2306
    // Predicated region
    $region102: #{encoder_decoder_forward.3} parent=1 // pred_check
      _
    $region103: #{encoder_decoder_forward.3} parent=1 // pred_check_branch
      %2311 = sbr.rel (0) target = $region105
    $region104: #{encoder_decoder_forward.3} parent=1 // pred_region
      %s2313 = ssub.s32 32, 32
      %2314 = vsyncadd [#allocation3], %s2313
      %s2316 = sshll.u32 [#allocation2], 4
      %s2317 = int_to_ptr.vmem [resolvable:$true] %s2316
      %2319 = dma.vmem_to_hbm [thread:$0]  %s2317, 32, %s25, [#allocation3]
    $region105: #{encoder_decoder_forward.3} parent=1 // pred_fallthru
      _
    // Predicated region
    $region106: #{encoder_decoder_forward.3} parent=1 // pred_check
      _
    $region107: #{encoder_decoder_forward.3} parent=1 // pred_check_branch
      %2321 = sbr.rel (0) target = $region109
    $region108: #{encoder_decoder_forward.3} parent=1 // pred_region
      %2322 = dma.done [#allocation3], 32
    $region109: #{encoder_decoder_forward.3} parent=1 // pred_fallthru
      _
    %2323 = vsyncpa [#allocation3], 1

// kernel: encoder_decoder_forward.2
$region0: #{encoder_decoder_forward.2}
  #allocation0 [shape = 'u32[]', space=smem, size = 0x4, offset = 0x4, fixed_abs, tag = 'smem constant byte address 0x4 - core index']
  #allocation1 [shape = 'u32[144,128]{1,0:T(1,128)}', space=vmem, size = 0x12000, scoped, tag = 'internal scratch']
  %s0 = inlined_call_operand.vmem [shape: f32[32,64], index: 0, kind: input, shape index: {}]
  %s1 = inlined_call_operand.vmem [shape: f32[64,32], index: 1, kind: input, shape index: {}]
  %s2 = inlined_call_operand.vmem [shape: f32[1,32], index: 2, kind: input, shape index: {}]
  %s3 = inlined_call_operand.vmem [shape: f32[32,32], index: 3, kind: input, shape index: {}]
  %s4 = inlined_call_operand.vmem [shape: f32[32,96], index: 4, kind: input, shape index: {}]
  %s5 = inlined_call_operand.vmem [shape: f32[1,96], index: 5, kind: input, shape index: {}]
  %s6 = inlined_call_operand.vmem [shape: f32[32,32], index: 6, kind: input, shape index: {}]
  %s7 = inlined_call_operand.vmem [shape: f32[1,32], index: 7, kind: input, shape index: {}]
  %s8 = inlined_call_operand.vmem [shape: f32[1,32], index: 8, kind: input, shape index: {}]
  %s9 = inlined_call_operand.vmem [shape: f32[1,32], index: 9, kind: input, shape index: {}]
  %s10 = inlined_call_operand.vmem [shape: f32[32,64], index: 10, kind: input, shape index: {}]
  %s11 = inlined_call_operand.vmem [shape: f32[1,64], index: 11, kind: input, shape index: {}]
  %s12 = inlined_call_operand.vmem [shape: f32[64,32], index: 12, kind: input, shape index: {}]
  %s13 = inlined_call_operand.vmem [shape: f32[1,32], index: 13, kind: input, shape index: {}]
  %s14 = inlined_call_operand.vmem [shape: f32[1,32], index: 14, kind: input, shape index: {}]
  %s15 = inlined_call_operand.vmem [shape: f32[1,32], index: 15, kind: input, shape index: {}]
  %s16 = inlined_call_operand.vmem [shape: f32[1,32], index: 16, kind: input, shape index: {}]
  %s17 = inlined_call_operand.vmem [shape: f32[1,32], index: 17, kind: input, shape index: {}]
  %s18 = inlined_call_operand.vmem [shape: f32[32,32], index: 18, kind: output, shape index: {}]
  %s19 = sld [smem:[#allocation0]]
  $region82: #{encoder_decoder_forward.2} parent=0
    _
  %s21 = ssub.s32 1, %s19
  %s22 = scalar_select 0, %s21, %s19
  // Predicated region
  $region2: #{encoder_decoder_forward.2} parent=0 // pred_check
    _
  $region3: #{encoder_decoder_forward.2} parent=0 // pred_check_branch
    %24 = sbr.rel (0) target = $region5
  $region4: #{encoder_decoder_forward.2} parent=0 // pred_region
    _
  $region5: #{encoder_decoder_forward.2} parent=0 // pred_fallthru
    _
  // Predicated region
  $region6: #{encoder_decoder_forward.2} parent=0 // pred_check
    _
  $region7: #{encoder_decoder_forward.2} parent=0 // pred_check_branch
    %26 = sbr.rel (0) target = $region9
  $region8: #{encoder_decoder_forward.2} parent=0 // pred_region
    _
  $region9: #{encoder_decoder_forward.2} parent=0 // pred_fallthru
    _
  // Predicated region
  $region10: #{encoder_decoder_forward.2} parent=0 // pred_check
    _
  $region11: #{encoder_decoder_forward.2} parent=0 // pred_check_branch
    %28 = sbr.rel (0) target = $region13
  $region12: #{encoder_decoder_forward.2} parent=0 // pred_region
    _
  $region13: #{encoder_decoder_forward.2} parent=0 // pred_fallthru
    _
  // Predicated region
  $region14: #{encoder_decoder_forward.2} parent=0 // pred_check
    _
  $region15: #{encoder_decoder_forward.2} parent=0 // pred_check_branch
    %30 = sbr.rel (0) target = $region17
  $region16: #{encoder_decoder_forward.2} parent=0 // pred_region
    _
  $region17: #{encoder_decoder_forward.2} parent=0 // pred_fallthru
    _
  // Predicated region
  $region18: #{encoder_decoder_forward.2} parent=0 // pred_check
    _
  $region19: #{encoder_decoder_forward.2} parent=0 // pred_check_branch
    %32 = sbr.rel (0) target = $region21
  $region20: #{encoder_decoder_forward.2} parent=0 // pred_region
    _
  $region21: #{encoder_decoder_forward.2} parent=0 // pred_fallthru
    _
  // Predicated region
  $region22: #{encoder_decoder_forward.2} parent=0 // pred_check
    _
  $region23: #{encoder_decoder_forward.2} parent=0 // pred_check_branch
    %34 = sbr.rel (0) target = $region25
  $region24: #{encoder_decoder_forward.2} parent=0 // pred_region
    _
  $region25: #{encoder_decoder_forward.2} parent=0 // pred_fallthru
    _
  // Predicated region
  $region26: #{encoder_decoder_forward.2} parent=0 // pred_check
    _
  $region27: #{encoder_decoder_forward.2} parent=0 // pred_check_branch
    %36 = sbr.rel (0) target = $region29
  $region28: #{encoder_decoder_forward.2} parent=0 // pred_region
    _
  $region29: #{encoder_decoder_forward.2} parent=0 // pred_fallthru
    _
  // Predicated region
  $region30: #{encoder_decoder_forward.2} parent=0 // pred_check
    _
  $region31: #{encoder_decoder_forward.2} parent=0 // pred_check_branch
    %38 = sbr.rel (0) target = $region33
  $region32: #{encoder_decoder_forward.2} parent=0 // pred_region
    _
  $region33: #{encoder_decoder_forward.2} parent=0 // pred_fallthru
    _
  // Predicated region
  $region34: #{encoder_decoder_forward.2} parent=0 // pred_check
    _
  $region35: #{encoder_decoder_forward.2} parent=0 // pred_check_branch
    %40 = sbr.rel (0) target = $region37
  $region36: #{encoder_decoder_forward.2} parent=0 // pred_region
    _
  $region37: #{encoder_decoder_forward.2} parent=0 // pred_fallthru
    _
  // Predicated region
  $region38: #{encoder_decoder_forward.2} parent=0 // pred_check
    _
  $region39: #{encoder_decoder_forward.2} parent=0 // pred_check_branch
    %42 = sbr.rel (0) target = $region41
  $region40: #{encoder_decoder_forward.2} parent=0 // pred_region
    _
  $region41: #{encoder_decoder_forward.2} parent=0 // pred_fallthru
    _
  // Predicated region
  $region42: #{encoder_decoder_forward.2} parent=0 // pred_check
    _
  $region43: #{encoder_decoder_forward.2} parent=0 // pred_check_branch
    %44 = sbr.rel (0) target = $region45
  $region44: #{encoder_decoder_forward.2} parent=0 // pred_region
    _
  $region45: #{encoder_decoder_forward.2} parent=0 // pred_fallthru
    _
  // Predicated region
  $region46: #{encoder_decoder_forward.2} parent=0 // pred_check
    _
  $region47: #{encoder_decoder_forward.2} parent=0 // pred_check_branch
    %46 = sbr.rel (0) target = $region49
  $region48: #{encoder_decoder_forward.2} parent=0 // pred_region
    _
  $region49: #{encoder_decoder_forward.2} parent=0 // pred_fallthru
    _
  // Predicated region
  $region50: #{encoder_decoder_forward.2} parent=0 // pred_check
    _
  $region51: #{encoder_decoder_forward.2} parent=0 // pred_check_branch
    %48 = sbr.rel (0) target = $region53
  $region52: #{encoder_decoder_forward.2} parent=0 // pred_region
    _
  $region53: #{encoder_decoder_forward.2} parent=0 // pred_fallthru
    _
  // Predicated region
  $region54: #{encoder_decoder_forward.2} parent=0 // pred_check
    _
  $region55: #{encoder_decoder_forward.2} parent=0 // pred_check_branch
    %50 = sbr.rel (0) target = $region57
  $region56: #{encoder_decoder_forward.2} parent=0 // pred_region
    _
  $region57: #{encoder_decoder_forward.2} parent=0 // pred_fallthru
    _
  // Predicated region
  $region58: #{encoder_decoder_forward.2} parent=0 // pred_check
    _
  $region59: #{encoder_decoder_forward.2} parent=0 // pred_check_branch
    %52 = sbr.rel (0) target = $region61
  $region60: #{encoder_decoder_forward.2} parent=0 // pred_region
    _
  $region61: #{encoder_decoder_forward.2} parent=0 // pred_fallthru
    _
  // Predicated region
  $region62: #{encoder_decoder_forward.2} parent=0 // pred_check
    _
  $region63: #{encoder_decoder_forward.2} parent=0 // pred_check_branch
    %54 = sbr.rel (0) target = $region65
  $region64: #{encoder_decoder_forward.2} parent=0 // pred_region
    _
  $region65: #{encoder_decoder_forward.2} parent=0 // pred_fallthru
    _
  // Predicated region
  $region66: #{encoder_decoder_forward.2} parent=0 // pred_check
    _
  $region67: #{encoder_decoder_forward.2} parent=0 // pred_check_branch
    %56 = sbr.rel (0) target = $region69
  $region68: #{encoder_decoder_forward.2} parent=0 // pred_region
    _
  $region69: #{encoder_decoder_forward.2} parent=0 // pred_fallthru
    _
  // Predicated region
  $region70: #{encoder_decoder_forward.2} parent=0 // pred_check
    _
  $region71: #{encoder_decoder_forward.2} parent=0 // pred_check_branch
    %58 = sbr.rel (0) target = $region73
  $region72: #{encoder_decoder_forward.2} parent=0 // pred_region
    _
  $region73: #{encoder_decoder_forward.2} parent=0 // pred_fallthru
    _
  %v59 = vld [vmem:[%s0] sm:$0xff]
  %v60 = vld [vmem:[%s0 + $0x8] sm:$0xff]
  %v61 = vld [vmem:[%s0 + $0x10] sm:$0xff]
  %v62 = vld [vmem:[%s0 + $0x18] sm:$0xff]
  %v63 = vld [vmem:[%s1] sm:$0xff]
  %v64 = vld [vmem:[%s1 + $0x8] sm:$0xff]
  %v65 = vld [vmem:[%s1 + $0x10] sm:$0xff]
  %v66 = vld [vmem:[%s1 + $0x18] sm:$0xff]
  %v67 = vld [vmem:[%s1 + $0x20] sm:$0xff]
  %v68 = vld [vmem:[%s1 + $0x28] sm:$0xff]
  %v69 = vld [vmem:[%s1 + $0x30] sm:$0xff]
  %v70 = vld [vmem:[%s1 + $0x38] sm:$0xff]
  %v71 = vld [vmem:[%s2] sm:$0x1]
  %v73 = vlaneseq
  %v74 = vshrl.u32 %v73, 7
  %v75 = vsub.s32 0, %v74
  %v76 = vrot.slane %v71, %v75
  %vm78 = vcmask 523264
  %v80 = vsel %vm78, %v59, 0
  %v83 = vsel %vm78, %v60, 0
  %v86 = vsel %vm78, %v61, 0
  %v89 = vsel %vm78, %v62, 0
  %91 = vmatprep.subr.mxu0 0.0
  %92 = vmatpush1.msra.mxu0 %v63
  %93 = vmatprep.subr.mxu0 0.0
  %94 = vmatpush1.msra.mxu0 %v64
  %95 = vmatprep.subr.mxu0 0.0
  %96 = vmatpush1.msra.mxu0 %v65
  %97 = vmatprep.subr.mxu0 0.0
  %98 = vmatpush1.msra.mxu0 %v66
  %99 = vmatprep.subr.mxu0 0.0
  %100 = vmatpush1.msra.mxu0 %v67
  %101 = vmatprep.subr.mxu0 0.0
  %102 = vmatpush1.msra.mxu0 %v68
  %103 = vmatprep.subr.mxu0 0.0
  %104 = vmatpush1.msra.mxu0 %v69
  %105 = vmatprep.subr.mxu0 0.0
  %106 = vmatpush1.msra.mxu0 %v70
  %107 = vmatprep.subr.mxu0 0.0
  %108 = vmatpush1.msra.mxu0 0.0
  %109 = vmatprep.subr.mxu0 0.0
  %110 = vmatpush1.msra.mxu0 0.0
  %111 = vmatprep.subr.mxu0 0.0
  %112 = vmatpush1.msra.mxu0 0.0
  %113 = vmatprep.subr.mxu0 0.0
  %114 = vmatpush1.msra.mxu0 0.0
  %115 = vmatprep.subr.mxu0 0.0
  %116 = vmatpush1.msra.mxu0 0.0
  %117 = vmatprep.subr.mxu0 0.0
  %118 = vmatpush1.msra.mxu0 0.0
  %119 = vmatprep.subr.mxu0 0.0
  %120 = vmatpush1.msra.mxu0 0.0
  %121 = vmatprep.subr.mxu0 0.0
  %122 = vmatpush1.msra.mxu0 0.0
  %123 = vmatprep.subr.mxu0 0.0
  %124 = vmatpush1.msra.mxu0 0.0
  %125 = vmatprep.subr.mxu0 0.0
  %126 = vmatpush1.msra.mxu0 0.0
  %127 = vmatprep.subr.mxu0 0.0
  %128 = vmatpush1.msra.mxu0 0.0
  %129 = vmatprep.subr.mxu0 0.0
  %130 = vmatpush1.msra.mxu0 0.0
  %131 = vmatprep.subr.mxu0 0.0
  %132 = vmatpush1.msra.mxu0 0.0
  %133 = vmatprep.subr.mxu0 0.0
  %134 = vmatpush1.msra.mxu0 0.0
  %135 = vmatprep.subr.mxu0 0.0
  %136 = vmatpush1.msra.mxu0 0.0
  %137 = vmatprep.subr.mxu0 0.0
  %138 = vmatpush1.msra.mxu0 0.0
  %139 = vmatprep.subr.mxu0 0.0
  %140 = vmatpush1.msra.mxu0 0.0
  %141 = vmatprep.subr.mxu0 0.0
  %142 = vmatpush1.msra.mxu0 0.0
  %143 = vmatprep.subr.mxu0 0.0
  %144 = vmatpush1.msra.mxu0 0.0
  %145 = vmatprep.subr.mxu0 0.0
  %146 = vmatpush1.msra.mxu0 0.0
  %147 = vmatprep.subr.mxu0 0.0
  %148 = vmatpush1.msra.mxu0 0.0
  %149 = vmatprep.subr.mxu0 0.0
  %150 = vmatpush1.msra.mxu0 0.0
  %151 = vmatprep.subr.mxu0 0.0
  %152 = vmatpush1.msra.mxu0 0.0
  %153 = vmatprep.subr.mxu0 0.0
  %154 = vmatpush1.msra.mxu0 0.0
  %155 = vmatprep.mubr.f32.mxu0 0.0
  %156 = vmatmul.mubr.f32.gmra.mrb[0].mxu0 %v80
  %v157 = vpop.f32.mrb[0].mxu0
  %v158 = vadd.f32 %v76, %v157
  %v159 = vpop.f32.mrb[0].mxu0
  %160 = vmatprep.mubr.f32.mxu0 0.0
  %161 = vmatmul.mubr.f32.gmra.mrb[0].mxu0 %v83
  %v162 = vpop.f32.mrb[0].mxu0
  %v163 = vadd.f32 %v76, %v162
  %v164 = vpop.f32.mrb[0].mxu0
  %165 = vmatprep.mubr.f32.mxu0 0.0
  %166 = vmatmul.mubr.f32.gmra.mrb[0].mxu0 %v86
  %v167 = vpop.f32.mrb[0].mxu0
  %v168 = vadd.f32 %v76, %v167
  %v169 = vpop.f32.mrb[0].mxu0
  %170 = vmatprep.mubr.f32.mxu0 0.0
  %171 = vmatmul.mubr.f32.gmra.mrb[0].mxu0 %v89
  %v172 = vpop.f32.mrb[0].mxu0
  %v173 = vadd.f32 %v76, %v172
  %v174 = vpop.f32.mrb[0].mxu0
  %175 = vdwg.mxu0
  %v176 = vld [vmem:[%s3] sm:$0xff]
  %v177 = vld [vmem:[%s3 + $0x8] sm:$0xff]
  %v178 = vld [vmem:[%s3 + $0x10] sm:$0xff]
  %v179 = vld [vmem:[%s3 + $0x18] sm:$0xff]
  %v180 = vadd.f32 %v158, %v176
  %v181 = vadd.f32 %v163, %v177
  %v182 = vadd.f32 %v168, %v178
  %v183 = vadd.f32 %v173, %v179
  %v184 = vld [vmem:[%s4] sm:$0xff]
  %v185 = vld [vmem:[%s4 + $0x8] sm:$0xff]
  %v186 = vld [vmem:[%s4 + $0x10] sm:$0xff]
  %v187 = vld [vmem:[%s4 + $0x18] sm:$0xff]
  %v188 = vld [vmem:[%s5] sm:$0x1]
  %v190 = vlaneseq
  %v191 = vshrl.u32 %v190, 7
  %v192 = vsub.s32 0, %v191
  %v193 = vrot.slane %v188, %v192
  %vm195 = vcmask 261120
  %v197 = vsel %vm195, %v180, 0
  %v200 = vsel %vm195, %v181, 0
  %v203 = vsel %vm195, %v182, 0
  %v206 = vsel %vm195, %v183, 0
  %208 = vmatprep.subr.mxu0 0.0
  %209 = vmatpush1.msra.mxu0 %v184
  %210 = vmatprep.subr.mxu0 0.0
  %211 = vmatpush1.msra.mxu0 %v185
  %212 = vmatprep.subr.mxu0 0.0
  %213 = vmatpush1.msra.mxu0 %v186
  %214 = vmatprep.subr.mxu0 0.0
  %215 = vmatpush1.msra.mxu0 %v187
  %216 = vmatprep.subr.mxu0 0.0
  %217 = vmatpush1.msra.mxu0 0.0
  %218 = vmatprep.subr.mxu0 0.0
  %219 = vmatpush1.msra.mxu0 0.0
  %220 = vmatprep.subr.mxu0 0.0
  %221 = vmatpush1.msra.mxu0 0.0
  %222 = vmatprep.subr.mxu0 0.0
  %223 = vmatpush1.msra.mxu0 0.0
  %224 = vmatprep.subr.mxu0 0.0
  %225 = vmatpush1.msra.mxu0 0.0
  %226 = vmatprep.subr.mxu0 0.0
  %227 = vmatpush1.msra.mxu0 0.0
  %228 = vmatprep.subr.mxu0 0.0
  %229 = vmatpush1.msra.mxu0 0.0
  %230 = vmatprep.subr.mxu0 0.0
  %231 = vmatpush1.msra.mxu0 0.0
  %232 = vmatprep.subr.mxu0 0.0
  %233 = vmatpush1.msra.mxu0 0.0
  %234 = vmatprep.subr.mxu0 0.0
  %235 = vmatpush1.msra.mxu0 0.0
  %236 = vmatprep.subr.mxu0 0.0
  %237 = vmatpush1.msra.mxu0 0.0
  %238 = vmatprep.subr.mxu0 0.0
  %239 = vmatpush1.msra.mxu0 0.0
  %240 = vmatprep.subr.mxu0 0.0
  %241 = vmatpush1.msra.mxu0 0.0
  %242 = vmatprep.subr.mxu0 0.0
  %243 = vmatpush1.msra.mxu0 0.0
  %244 = vmatprep.subr.mxu0 0.0
  %245 = vmatpush1.msra.mxu0 0.0
  %246 = vmatprep.subr.mxu0 0.0
  %247 = vmatpush1.msra.mxu0 0.0
  %248 = vmatprep.subr.mxu0 0.0
  %249 = vmatpush1.msra.mxu0 0.0
  %250 = vmatprep.subr.mxu0 0.0
  %251 = vmatpush1.msra.mxu0 0.0
  %252 = vmatprep.subr.mxu0 0.0
  %253 = vmatpush1.msra.mxu0 0.0
  %254 = vmatprep.subr.mxu0 0.0
  %255 = vmatpush1.msra.mxu0 0.0
  %256 = vmatprep.subr.mxu0 0.0
  %257 = vmatpush1.msra.mxu0 0.0
  %258 = vmatprep.subr.mxu0 0.0
  %259 = vmatpush1.msra.mxu0 0.0
  %260 = vmatprep.subr.mxu0 0.0
  %261 = vmatpush1.msra.mxu0 0.0
  %262 = vmatprep.subr.mxu0 0.0
  %263 = vmatpush1.msra.mxu0 0.0
  %264 = vmatprep.subr.mxu0 0.0
  %265 = vmatpush1.msra.mxu0 0.0
  %266 = vmatprep.subr.mxu0 0.0
  %267 = vmatpush1.msra.mxu0 0.0
  %268 = vmatprep.subr.mxu0 0.0
  %269 = vmatpush1.msra.mxu0 0.0
  %270 = vmatprep.subr.mxu0 0.0
  %271 = vmatpush1.msra.mxu0 0.0
  %272 = vmatprep.mubr.f32.mxu0 0.0
  %273 = vmatmul.mubr.f32.gmra.mrb[0].mxu0 %v197
  %v274 = vpop.f32.mrb[0].mxu0
  %v275 = vadd.f32 %v193, %v274
  %v276 = vpop.f32.mrb[0].mxu0
  %277 = vmatprep.mubr.f32.mxu0 0.0
  %278 = vmatmul.mubr.f32.gmra.mrb[0].mxu0 %v200
  %v279 = vpop.f32.mrb[0].mxu0
  %v280 = vadd.f32 %v193, %v279
  %v281 = vpop.f32.mrb[0].mxu0
  %282 = vmatprep.mubr.f32.mxu0 0.0
  %283 = vmatmul.mubr.f32.gmra.mrb[0].mxu0 %v203
  %v284 = vpop.f32.mrb[0].mxu0
  %v285 = vadd.f32 %v193, %v284
  %v286 = vpop.f32.mrb[0].mxu0
  %287 = vmatprep.mubr.f32.mxu0 0.0
  %288 = vmatmul.mubr.f32.gmra.mrb[0].mxu0 %v206
  %v289 = vpop.f32.mrb[0].mxu0
  %v290 = vadd.f32 %v193, %v289
  %v291 = vpop.f32.mrb[0].mxu0
  %292 = vdwg.mxu0
  %295 = vrot.lane.b32.xlu0 %v275, 96
  %v296 = vpop.permute.xlu0 %295
  %297 = vrot.lane.b32.xlu0 %v280, 96
  %v298 = vpop.permute.xlu0 %297
  %vm299 = vcmask 64512
  %v300 = vsel %vm299, %v275, 0
  %v302 = vsel %vm299, %v280, 0
  %v304 = vsel %vm299, %v296, 0
  %v306 = vsel %vm299, %v298, 0
  %308 = vmatprep.subr.mxu0 0.0
  %309 = vmatpush1.xpose.msra.mxu0 %v304
  %310 = vmatprep.subr.mxu0 0.0
  %311 = vmatpush1.xpose.msra.mxu0 %v306
  %312 = vmatprep.subr.mxu0 0.0
  %313 = vmatpush1.xpose.msra.mxu0 0.0
  %314 = vmatprep.subr.mxu0 0.0
  %315 = vmatpush1.xpose.msra.mxu0 0.0
  %316 = vmatprep.subr.mxu0 0.0
  %317 = vmatpush1.xpose.msra.mxu0 0.0
  %318 = vmatprep.subr.mxu0 0.0
  %319 = vmatpush1.xpose.msra.mxu0 0.0
  %320 = vmatprep.subr.mxu0 0.0
  %321 = vmatpush1.xpose.msra.mxu0 0.0
  %322 = vmatprep.subr.mxu0 0.0
  %323 = vmatpush1.xpose.msra.mxu0 0.0
  %324 = vmatprep.subr.mxu0 0.0
  %325 = vmatpush1.xpose.msra.mxu0 0.0
  %326 = vmatprep.subr.mxu0 0.0
  %327 = vmatpush1.xpose.msra.mxu0 0.0
  %328 = vmatprep.subr.mxu0 0.0
  %329 = vmatpush1.xpose.msra.mxu0 0.0
  %330 = vmatprep.subr.mxu0 0.0
  %331 = vmatpush1.xpose.msra.mxu0 0.0
  %332 = vmatprep.subr.mxu0 0.0
  %333 = vmatpush1.xpose.msra.mxu0 0.0
  %334 = vmatprep.subr.mxu0 0.0
  %335 = vmatpush1.xpose.msra.mxu0 0.0
  %336 = vmatprep.subr.mxu0 0.0
  %337 = vmatpush1.xpose.msra.mxu0 0.0
  %338 = vmatprep.subr.mxu0 0.0
  %339 = vmatpush1.xpose.msra.mxu0 0.0
  %340 = vmatprep.subr.mxu0 0.0
  %341 = vmatpush1.xpose.msra.mxu0 0.0
  %342 = vmatprep.subr.mxu0 0.0
  %343 = vmatpush1.xpose.msra.mxu0 0.0
  %344 = vmatprep.subr.mxu0 0.0
  %345 = vmatpush1.xpose.msra.mxu0 0.0
  %346 = vmatprep.subr.mxu0 0.0
  %347 = vmatpush1.xpose.msra.mxu0 0.0
  %348 = vmatprep.subr.mxu0 0.0
  %349 = vmatpush1.xpose.msra.mxu0 0.0
  %350 = vmatprep.subr.mxu0 0.0
  %351 = vmatpush1.xpose.msra.mxu0 0.0
  %352 = vmatprep.subr.mxu0 0.0
  %353 = vmatpush1.xpose.msra.mxu0 0.0
  %354 = vmatprep.subr.mxu0 0.0
  %355 = vmatpush1.xpose.msra.mxu0 0.0
  %356 = vmatprep.subr.mxu0 0.0
  %357 = vmatpush1.xpose.msra.mxu0 0.0
  %358 = vmatprep.subr.mxu0 0.0
  %359 = vmatpush1.xpose.msra.mxu0 0.0
  %360 = vmatprep.subr.mxu0 0.0
  %361 = vmatpush1.xpose.msra.mxu0 0.0
  %362 = vmatprep.subr.mxu0 0.0
  %363 = vmatpush1.xpose.msra.mxu0 0.0
  %364 = vmatprep.subr.mxu0 0.0
  %365 = vmatpush1.xpose.msra.mxu0 0.0
  %366 = vmatprep.subr.mxu0 0.0
  %367 = vmatpush1.xpose.msra.mxu0 0.0
  %368 = vmatprep.subr.mxu0 0.0
  %369 = vmatpush1.xpose.msra.mxu0 0.0
  %370 = vmatprep.subr.mxu0 0.0
  %371 = vmatpush1.xpose.msra.mxu0 0.0
  %372 = vmatprep.mubr.f32.mxu0 0.0
  %373 = vmatmul.mubr.f32.gmra.mrb[0].mxu0 %v300
  %v374 = vpop.f32.mrb[0].mxu0
  %v375 = vadd.f32 0.0, %v374
  %v376 = vpop.f32.mrb[0].mxu0
  %377 = vmatprep.mubr.f32.mxu0 0.0
  %378 = vmatmul.mubr.f32.gmra.mrb[0].mxu0 %v302
  %v379 = vpop.f32.mrb[0].mxu0
  %v380 = vadd.f32 0.0, %v379
  %v381 = vpop.f32.mrb[0].mxu0
  %382 = vdwg.mxu0
  %v383 = vmul.f32 %v375, 0.35355338
  %v384 = vmul.f32 %v380, 0.35355338
  %vm385 = vcmask 130048
  %v386 = vsel %vm385, %v383, -inf
  %387 = vmax.xlane.f32.xlu0 %v386
  %v388 = vpop.xlane.xlu0 %387
  %v389 = vsel %vm385, %v384, -inf
  %390 = vmax.xlane.f32.xlu0 %v389
  %v391 = vpop.xlane.xlu0 %390
  %v392 = vsub.f32 %v383, %v388
  %v393 = vsub.f32 %v384, %v391
  %v394 = vmul.f32 %v392, 1.442695
  %v395 = vpow.pop %v394
  %v396 = vmul.f32 %v393, 1.442695
  %v397 = vpow.pop %v396
  %v398 = vsel %vm385, %v395, 0.0
  %399 = vadd.xlane.f32.xlu0 %v398
  %v400 = vpop.xlane.xlu0 %399
  %v401 = vsel %vm385, %v397, 0.0
  %402 = vadd.xlane.f32.xlu0 %v401
  %v403 = vpop.xlane.xlu0 %402
  %v404 = vrcp.pop %v400
  %v405 = vrcp.pop %v403
  %v406 = vmul.f32 %v395, %v404
  %v407 = vmul.f32 %v397, %v405
  %408 = vrot.lane.b32.xlu0 %v275, 64
  %v409 = vpop.permute.xlu0 %408
  %410 = vrot.lane.b32.xlu0 %v280, 64
  %v411 = vpop.permute.xlu0 %410
  %v415 = vsel %vm385, %v406, 0
  %v418 = vsel %vm385, %v407, 0
  %420 = vmatprep.subr.mxu0 0.0
  %421 = vmatpush1.msra.mxu0 %v409
  %422 = vmatprep.subr.mxu0 0.0
  %423 = vmatpush1.msra.mxu0 %v411
  %424 = vmatprep.subr.mxu0 0.0
  %425 = vmatpush1.msra.mxu0 0.0
  %426 = vmatprep.subr.mxu0 0.0
  %427 = vmatpush1.msra.mxu0 0.0
  %428 = vmatprep.subr.mxu0 0.0
  %429 = vmatpush1.msra.mxu0 0.0
  %430 = vmatprep.subr.mxu0 0.0
  %431 = vmatpush1.msra.mxu0 0.0
  %432 = vmatprep.subr.mxu0 0.0
  %433 = vmatpush1.msra.mxu0 0.0
  %434 = vmatprep.subr.mxu0 0.0
  %435 = vmatpush1.msra.mxu0 0.0
  %436 = vmatprep.subr.mxu0 0.0
  %437 = vmatpush1.msra.mxu0 0.0
  %438 = vmatprep.subr.mxu0 0.0
  %439 = vmatpush1.msra.mxu0 0.0
  %440 = vmatprep.subr.mxu0 0.0
  %441 = vmatpush1.msra.mxu0 0.0
  %442 = vmatprep.subr.mxu0 0.0
  %443 = vmatpush1.msra.mxu0 0.0
  %444 = vmatprep.subr.mxu0 0.0
  %445 = vmatpush1.msra.mxu0 0.0
  %446 = vmatprep.subr.mxu0 0.0
  %447 = vmatpush1.msra.mxu0 0.0
  %448 = vmatprep.subr.mxu0 0.0
  %449 = vmatpush1.msra.mxu0 0.0
  %450 = vmatprep.subr.mxu0 0.0
  %451 = vmatpush1.msra.mxu0 0.0
  %452 = vmatprep.subr.mxu0 0.0
  %453 = vmatpush1.msra.mxu0 0.0
  %454 = vmatprep.subr.mxu0 0.0
  %455 = vmatpush1.msra.mxu0 0.0
  %456 = vmatprep.subr.mxu0 0.0
  %457 = vmatpush1.msra.mxu0 0.0
  %458 = vmatprep.subr.mxu0 0.0
  %459 = vmatpush1.msra.mxu0 0.0
  %460 = vmatprep.subr.mxu0 0.0
  %461 = vmatpush1.msra.mxu0 0.0
  %462 = vmatprep.subr.mxu0 0.0
  %463 = vmatpush1.msra.mxu0 0.0
  %464 = vmatprep.subr.mxu0 0.0
  %465 = vmatpush1.msra.mxu0 0.0
  %466 = vmatprep.subr.mxu0 0.0
  %467 = vmatpush1.msra.mxu0 0.0
  %468 = vmatprep.subr.mxu0 0.0
  %469 = vmatpush1.msra.mxu0 0.0
  %470 = vmatprep.subr.mxu0 0.0
  %471 = vmatpush1.msra.mxu0 0.0
  %472 = vmatprep.subr.mxu0 0.0
  %473 = vmatpush1.msra.mxu0 0.0
  %474 = vmatprep.subr.mxu0 0.0
  %475 = vmatpush1.msra.mxu0 0.0
  %476 = vmatprep.subr.mxu0 0.0
  %477 = vmatpush1.msra.mxu0 0.0
  %478 = vmatprep.subr.mxu0 0.0
  %479 = vmatpush1.msra.mxu0 0.0
  %480 = vmatprep.subr.mxu0 0.0
  %481 = vmatpush1.msra.mxu0 0.0
  %482 = vmatprep.subr.mxu0 0.0
  %483 = vmatpush1.msra.mxu0 0.0
  %484 = vmatprep.mubr.f32.mxu0 0.0
  %485 = vmatmul.mubr.f32.gmra.mrb[0].mxu0 %v415
  %v486 = vpop.f32.mrb[0].mxu0
  %v487 = vadd.f32 0.0, %v486
  %v488 = vpop.f32.mrb[0].mxu0
  %489 = vmatprep.mubr.f32.mxu0 0.0
  %490 = vmatmul.mubr.f32.gmra.mrb[0].mxu0 %v418
  %v491 = vpop.f32.mrb[0].mxu0
  %v492 = vadd.f32 0.0, %v491
  %v493 = vpop.f32.mrb[0].mxu0
  %494 = vdwg.mxu0
  %495 = vrot.lane.b32.xlu0 %v275, 120
  %v496 = vpop.permute.xlu0 %495
  %497 = vrot.lane.b32.xlu0 %v280, 120
  %v498 = vpop.permute.xlu0 %497
  %499 = vrot.lane.b32.xlu0 %v275, 88
  %v500 = vpop.permute.xlu0 %499
  %501 = vrot.lane.b32.xlu0 %v280, 88
  %v502 = vpop.permute.xlu0 %501
  %v503 = vsel %vm299, %v496, 0
  %v505 = vsel %vm299, %v498, 0
  %v507 = vsel %vm299, %v500, 0
  %v509 = vsel %vm299, %v502, 0
  %511 = vmatprep.subr.mxu0 0.0
  %512 = vmatpush1.xpose.msra.mxu0 %v507
  %513 = vmatprep.subr.mxu0 0.0
  %514 = vmatpush1.xpose.msra.mxu0 %v509
  %515 = vmatprep.subr.mxu0 0.0
  %516 = vmatpush1.xpose.msra.mxu0 0.0
  %517 = vmatprep.subr.mxu0 0.0
  %518 = vmatpush1.xpose.msra.mxu0 0.0
  %519 = vmatprep.subr.mxu0 0.0
  %520 = vmatpush1.xpose.msra.mxu0 0.0
  %521 = vmatprep.subr.mxu0 0.0
  %522 = vmatpush1.xpose.msra.mxu0 0.0
  %523 = vmatprep.subr.mxu0 0.0
  %524 = vmatpush1.xpose.msra.mxu0 0.0
  %525 = vmatprep.subr.mxu0 0.0
  %526 = vmatpush1.xpose.msra.mxu0 0.0
  %527 = vmatprep.subr.mxu0 0.0
  %528 = vmatpush1.xpose.msra.mxu0 0.0
  %529 = vmatprep.subr.mxu0 0.0
  %530 = vmatpush1.xpose.msra.mxu0 0.0
  %531 = vmatprep.subr.mxu0 0.0
  %532 = vmatpush1.xpose.msra.mxu0 0.0
  %533 = vmatprep.subr.mxu0 0.0
  %534 = vmatpush1.xpose.msra.mxu0 0.0
  %535 = vmatprep.subr.mxu0 0.0
  %536 = vmatpush1.xpose.msra.mxu0 0.0
  %537 = vmatprep.subr.mxu0 0.0
  %538 = vmatpush1.xpose.msra.mxu0 0.0
  %539 = vmatprep.subr.mxu0 0.0
  %540 = vmatpush1.xpose.msra.mxu0 0.0
  %541 = vmatprep.subr.mxu0 0.0
  %542 = vmatpush1.xpose.msra.mxu0 0.0
  %543 = vmatprep.subr.mxu0 0.0
  %544 = vmatpush1.xpose.msra.mxu0 0.0
  %545 = vmatprep.subr.mxu0 0.0
  %546 = vmatpush1.xpose.msra.mxu0 0.0
  %547 = vmatprep.subr.mxu0 0.0
  %548 = vmatpush1.xpose.msra.mxu0 0.0
  %549 = vmatprep.subr.mxu0 0.0
  %550 = vmatpush1.xpose.msra.mxu0 0.0
  %551 = vmatprep.subr.mxu0 0.0
  %552 = vmatpush1.xpose.msra.mxu0 0.0
  %553 = vmatprep.subr.mxu0 0.0
  %554 = vmatpush1.xpose.msra.mxu0 0.0
  %555 = vmatprep.subr.mxu0 0.0
  %556 = vmatpush1.xpose.msra.mxu0 0.0
  %557 = vmatprep.subr.mxu0 0.0
  %558 = vmatpush1.xpose.msra.mxu0 0.0
  %559 = vmatprep.subr.mxu0 0.0
  %560 = vmatpush1.xpose.msra.mxu0 0.0
  %561 = vmatprep.subr.mxu0 0.0
  %562 = vmatpush1.xpose.msra.mxu0 0.0
  %563 = vmatprep.subr.mxu0 0.0
  %564 = vmatpush1.xpose.msra.mxu0 0.0
  %565 = vmatprep.subr.mxu0 0.0
  %566 = vmatpush1.xpose.msra.mxu0 0.0
  %567 = vmatprep.subr.mxu0 0.0
  %568 = vmatpush1.xpose.msra.mxu0 0.0
  %569 = vmatprep.subr.mxu0 0.0
  %570 = vmatpush1.xpose.msra.mxu0 0.0
  %571 = vmatprep.subr.mxu0 0.0
  %572 = vmatpush1.xpose.msra.mxu0 0.0
  %573 = vmatprep.subr.mxu0 0.0
  %574 = vmatpush1.xpose.msra.mxu0 0.0
  %575 = vmatprep.mubr.f32.mxu0 0.0
  %576 = vmatmul.mubr.f32.gmra.mrb[0].mxu0 %v503
  %v577 = vpop.f32.mrb[0].mxu0
  %v578 = vadd.f32 0.0, %v577
  %v579 = vpop.f32.mrb[0].mxu0
  %580 = vmatprep.mubr.f32.mxu0 0.0
  %581 = vmatmul.mubr.f32.gmra.mrb[0].mxu0 %v505
  %v582 = vpop.f32.mrb[0].mxu0
  %v583 = vadd.f32 0.0, %v582
  %v584 = vpop.f32.mrb[0].mxu0
  %585 = vdwg.mxu0
  %v586 = vmul.f32 %v578, 0.35355338
  %v587 = vmul.f32 %v583, 0.35355338
  %v588 = vsel %vm385, %v586, -inf
  %589 = vmax.xlane.f32.xlu0 %v588
  %v590 = vpop.xlane.xlu0 %589
  %v591 = vsel %vm385, %v587, -inf
  %592 = vmax.xlane.f32.xlu0 %v591
  %v593 = vpop.xlane.xlu0 %592
  %v594 = vsub.f32 %v586, %v590
  %v595 = vsub.f32 %v587, %v593
  %v596 = vmul.f32 %v594, 1.442695
  %v597 = vpow.pop %v596
  %v598 = vmul.f32 %v595, 1.442695
  %v599 = vpow.pop %v598
  %v600 = vsel %vm385, %v597, 0.0
  %601 = vadd.xlane.f32.xlu0 %v600
  %v602 = vpop.xlane.xlu0 %601
  %v603 = vsel %vm385, %v599, 0.0
  %604 = vadd.xlane.f32.xlu0 %v603
  %v605 = vpop.xlane.xlu0 %604
  %v606 = vrcp.pop %v602
  %v607 = vrcp.pop %v605
  %v608 = vmul.f32 %v597, %v606
  %v609 = vmul.f32 %v599, %v607
  %610 = vrot.lane.b32.xlu0 %v275, 56
  %v611 = vpop.permute.xlu0 %610
  %612 = vrot.lane.b32.xlu0 %v280, 56
  %v613 = vpop.permute.xlu0 %612
  %v617 = vsel %vm385, %v608, 0
  %v620 = vsel %vm385, %v609, 0
  %622 = vmatprep.subr.mxu0 0.0
  %623 = vmatpush1.msra.mxu0 %v611
  %624 = vmatprep.subr.mxu0 0.0
  %625 = vmatpush1.msra.mxu0 %v613
  %626 = vmatprep.subr.mxu0 0.0
  %627 = vmatpush1.msra.mxu0 0.0
  %628 = vmatprep.subr.mxu0 0.0
  %629 = vmatpush1.msra.mxu0 0.0
  %630 = vmatprep.subr.mxu0 0.0
  %631 = vmatpush1.msra.mxu0 0.0
  %632 = vmatprep.subr.mxu0 0.0
  %633 = vmatpush1.msra.mxu0 0.0
  %634 = vmatprep.subr.mxu0 0.0
  %635 = vmatpush1.msra.mxu0 0.0
  %636 = vmatprep.subr.mxu0 0.0
  %637 = vmatpush1.msra.mxu0 0.0
  %638 = vmatprep.subr.mxu0 0.0
  %639 = vmatpush1.msra.mxu0 0.0
  %640 = vmatprep.subr.mxu0 0.0
  %641 = vmatpush1.msra.mxu0 0.0
  %642 = vmatprep.subr.mxu0 0.0
  %643 = vmatpush1.msra.mxu0 0.0
  %644 = vmatprep.subr.mxu0 0.0
  %645 = vmatpush1.msra.mxu0 0.0
  %646 = vmatprep.subr.mxu0 0.0
  %647 = vmatpush1.msra.mxu0 0.0
  %648 = vmatprep.subr.mxu0 0.0
  %649 = vmatpush1.msra.mxu0 0.0
  %650 = vmatprep.subr.mxu0 0.0
  %651 = vmatpush1.msra.mxu0 0.0
  %652 = vmatprep.subr.mxu0 0.0
  %653 = vmatpush1.msra.mxu0 0.0
  %654 = vmatprep.subr.mxu0 0.0
  %655 = vmatpush1.msra.mxu0 0.0
  %656 = vmatprep.subr.mxu0 0.0
  %657 = vmatpush1.msra.mxu0 0.0
  %658 = vmatprep.subr.mxu0 0.0
  %659 = vmatpush1.msra.mxu0 0.0
  %660 = vmatprep.subr.mxu0 0.0
  %661 = vmatpush1.msra.mxu0 0.0
  %662 = vmatprep.subr.mxu0 0.0
  %663 = vmatpush1.msra.mxu0 0.0
  %664 = vmatprep.subr.mxu0 0.0
  %665 = vmatpush1.msra.mxu0 0.0
  %666 = vmatprep.subr.mxu0 0.0
  %667 = vmatpush1.msra.mxu0 0.0
  %668 = vmatprep.subr.mxu0 0.0
  %669 = vmatpush1.msra.mxu0 0.0
  %670 = vmatprep.subr.mxu0 0.0
  %671 = vmatpush1.msra.mxu0 0.0
  %672 = vmatprep.subr.mxu0 0.0
  %673 = vmatpush1.msra.mxu0 0.0
  %674 = vmatprep.subr.mxu0 0.0
  %675 = vmatpush1.msra.mxu0 0.0
  %676 = vmatprep.subr.mxu0 0.0
  %677 = vmatpush1.msra.mxu0 0.0
  %678 = vmatprep.subr.mxu0 0.0
  %679 = vmatpush1.msra.mxu0 0.0
  %680 = vmatprep.subr.mxu0 0.0
  %681 = vmatpush1.msra.mxu0 0.0
  %682 = vmatprep.subr.mxu0 0.0
  %683 = vmatpush1.msra.mxu0 0.0
  %684 = vmatprep.subr.mxu0 0.0
  %685 = vmatpush1.msra.mxu0 0.0
  %686 = vmatprep.mubr.f32.mxu0 0.0
  %687 = vmatmul.mubr.f32.gmra.mrb[0].mxu0 %v617
  %v688 = vpop.f32.mrb[0].mxu0
  %v689 = vadd.f32 0.0, %v688
  %v690 = vpop.f32.mrb[0].mxu0
  %691 = vmatprep.mubr.f32.mxu0 0.0
  %692 = vmatmul.mubr.f32.gmra.mrb[0].mxu0 %v620
  %v693 = vpop.f32.mrb[0].mxu0
  %v694 = vadd.f32 0.0, %v693
  %v695 = vpop.f32.mrb[0].mxu0
  %696 = vdwg.mxu0
  %697 = vrot.lane.b32.xlu0 %v275, 112
  %v698 = vpop.permute.xlu0 %697
  %699 = vrot.lane.b32.xlu0 %v280, 112
  %v700 = vpop.permute.xlu0 %699
  %701 = vrot.lane.b32.xlu0 %v275, 80
  %v702 = vpop.permute.xlu0 %701
  %703 = vrot.lane.b32.xlu0 %v280, 80
  %v704 = vpop.permute.xlu0 %703
  %v705 = vsel %vm299, %v698, 0
  %v707 = vsel %vm299, %v700, 0
  %v709 = vsel %vm299, %v702, 0
  %v711 = vsel %vm299, %v704, 0
  %713 = vmatprep.subr.mxu0 0.0
  %714 = vmatpush1.xpose.msra.mxu0 %v709
  %715 = vmatprep.subr.mxu0 0.0
  %716 = vmatpush1.xpose.msra.mxu0 %v711
  %717 = vmatprep.subr.mxu0 0.0
  %718 = vmatpush1.xpose.msra.mxu0 0.0
  %719 = vmatprep.subr.mxu0 0.0
  %720 = vmatpush1.xpose.msra.mxu0 0.0
  %721 = vmatprep.subr.mxu0 0.0
  %722 = vmatpush1.xpose.msra.mxu0 0.0
  %723 = vmatprep.subr.mxu0 0.0
  %724 = vmatpush1.xpose.msra.mxu0 0.0
  %725 = vmatprep.subr.mxu0 0.0
  %726 = vmatpush1.xpose.msra.mxu0 0.0
  %727 = vmatprep.subr.mxu0 0.0
  %728 = vmatpush1.xpose.msra.mxu0 0.0
  %729 = vmatprep.subr.mxu0 0.0
  %730 = vmatpush1.xpose.msra.mxu0 0.0
  %731 = vmatprep.subr.mxu0 0.0
  %732 = vmatpush1.xpose.msra.mxu0 0.0
  %733 = vmatprep.subr.mxu0 0.0
  %734 = vmatpush1.xpose.msra.mxu0 0.0
  %735 = vmatprep.subr.mxu0 0.0
  %736 = vmatpush1.xpose.msra.mxu0 0.0
  %737 = vmatprep.subr.mxu0 0.0
  %738 = vmatpush1.xpose.msra.mxu0 0.0
  %739 = vmatprep.subr.mxu0 0.0
  %740 = vmatpush1.xpose.msra.mxu0 0.0
  %741 = vmatprep.subr.mxu0 0.0
  %742 = vmatpush1.xpose.msra.mxu0 0.0
  %743 = vmatprep.subr.mxu0 0.0
  %744 = vmatpush1.xpose.msra.mxu0 0.0
  %745 = vmatprep.subr.mxu0 0.0
  %746 = vmatpush1.xpose.msra.mxu0 0.0
  %747 = vmatprep.subr.mxu0 0.0
  %748 = vmatpush1.xpose.msra.mxu0 0.0
  %749 = vmatprep.subr.mxu0 0.0
  %750 = vmatpush1.xpose.msra.mxu0 0.0
  %751 = vmatprep.subr.mxu0 0.0
  %752 = vmatpush1.xpose.msra.mxu0 0.0
  %753 = vmatprep.subr.mxu0 0.0
  %754 = vmatpush1.xpose.msra.mxu0 0.0
  %755 = vmatprep.subr.mxu0 0.0
  %756 = vmatpush1.xpose.msra.mxu0 0.0
  %757 = vmatprep.subr.mxu0 0.0
  %758 = vmatpush1.xpose.msra.mxu0 0.0
  %759 = vmatprep.subr.mxu0 0.0
  %760 = vmatpush1.xpose.msra.mxu0 0.0
  %761 = vmatprep.subr.mxu0 0.0
  %762 = vmatpush1.xpose.msra.mxu0 0.0
  %763 = vmatprep.subr.mxu0 0.0
  %764 = vmatpush1.xpose.msra.mxu0 0.0
  %765 = vmatprep.subr.mxu0 0.0
  %766 = vmatpush1.xpose.msra.mxu0 0.0
  %767 = vmatprep.subr.mxu0 0.0
  %768 = vmatpush1.xpose.msra.mxu0 0.0
  %769 = vmatprep.subr.mxu0 0.0
  %770 = vmatpush1.xpose.msra.mxu0 0.0
  %771 = vmatprep.subr.mxu0 0.0
  %772 = vmatpush1.xpose.msra.mxu0 0.0
  %773 = vmatprep.subr.mxu0 0.0
  %774 = vmatpush1.xpose.msra.mxu0 0.0
  %775 = vmatprep.subr.mxu0 0.0
  %776 = vmatpush1.xpose.msra.mxu0 0.0
  %777 = vmatprep.mubr.f32.mxu0 0.0
  %778 = vmatmul.mubr.f32.gmra.mrb[0].mxu0 %v705
  %v779 = vpop.f32.mrb[0].mxu0
  %v780 = vadd.f32 0.0, %v779
  %v781 = vpop.f32.mrb[0].mxu0
  %782 = vmatprep.mubr.f32.mxu0 0.0
  %783 = vmatmul.mubr.f32.gmra.mrb[0].mxu0 %v707
  %v784 = vpop.f32.mrb[0].mxu0
  %v785 = vadd.f32 0.0, %v784
  %v786 = vpop.f32.mrb[0].mxu0
  %787 = vdwg.mxu0
  %v788 = vmul.f32 %v780, 0.35355338
  %v789 = vmul.f32 %v785, 0.35355338
  %v790 = vsel %vm385, %v788, -inf
  %791 = vmax.xlane.f32.xlu0 %v790
  %v792 = vpop.xlane.xlu0 %791
  %v793 = vsel %vm385, %v789, -inf
  %794 = vmax.xlane.f32.xlu0 %v793
  %v795 = vpop.xlane.xlu0 %794
  %v796 = vsub.f32 %v788, %v792
  %v797 = vsub.f32 %v789, %v795
  %v798 = vmul.f32 %v796, 1.442695
  %v799 = vpow.pop %v798
  %v800 = vmul.f32 %v797, 1.442695
  %v801 = vpow.pop %v800
  %v802 = vsel %vm385, %v799, 0.0
  %803 = vadd.xlane.f32.xlu0 %v802
  %v804 = vpop.xlane.xlu0 %803
  %v805 = vsel %vm385, %v801, 0.0
  %806 = vadd.xlane.f32.xlu0 %v805
  %v807 = vpop.xlane.xlu0 %806
  %v808 = vrcp.pop %v804
  %v809 = vrcp.pop %v807
  %v810 = vmul.f32 %v799, %v808
  %v811 = vmul.f32 %v801, %v809
  %812 = vrot.lane.b32.xlu0 %v275, 48
  %v813 = vpop.permute.xlu0 %812
  %814 = vrot.lane.b32.xlu0 %v280, 48
  %v815 = vpop.permute.xlu0 %814
  %v819 = vsel %vm385, %v810, 0
  %v822 = vsel %vm385, %v811, 0
  %824 = vmatprep.subr.mxu0 0.0
  %825 = vmatpush1.msra.mxu0 %v813
  %826 = vmatprep.subr.mxu0 0.0
  %827 = vmatpush1.msra.mxu0 %v815
  %828 = vmatprep.subr.mxu0 0.0
  %829 = vmatpush1.msra.mxu0 0.0
  %830 = vmatprep.subr.mxu0 0.0
  %831 = vmatpush1.msra.mxu0 0.0
  %832 = vmatprep.subr.mxu0 0.0
  %833 = vmatpush1.msra.mxu0 0.0
  %834 = vmatprep.subr.mxu0 0.0
  %835 = vmatpush1.msra.mxu0 0.0
  %836 = vmatprep.subr.mxu0 0.0
  %837 = vmatpush1.msra.mxu0 0.0
  %838 = vmatprep.subr.mxu0 0.0
  %839 = vmatpush1.msra.mxu0 0.0
  %840 = vmatprep.subr.mxu0 0.0
  %841 = vmatpush1.msra.mxu0 0.0
  %842 = vmatprep.subr.mxu0 0.0
  %843 = vmatpush1.msra.mxu0 0.0
  %844 = vmatprep.subr.mxu0 0.0
  %845 = vmatpush1.msra.mxu0 0.0
  %846 = vmatprep.subr.mxu0 0.0
  %847 = vmatpush1.msra.mxu0 0.0
  %848 = vmatprep.subr.mxu0 0.0
  %849 = vmatpush1.msra.mxu0 0.0
  %850 = vmatprep.subr.mxu0 0.0
  %851 = vmatpush1.msra.mxu0 0.0
  %852 = vmatprep.subr.mxu0 0.0
  %853 = vmatpush1.msra.mxu0 0.0
  %854 = vmatprep.subr.mxu0 0.0
  %855 = vmatpush1.msra.mxu0 0.0
  %856 = vmatprep.subr.mxu0 0.0
  %857 = vmatpush1.msra.mxu0 0.0
  %858 = vmatprep.subr.mxu0 0.0
  %859 = vmatpush1.msra.mxu0 0.0
  %860 = vmatprep.subr.mxu0 0.0
  %861 = vmatpush1.msra.mxu0 0.0
  %862 = vmatprep.subr.mxu0 0.0
  %863 = vmatpush1.msra.mxu0 0.0
  %864 = vmatprep.subr.mxu0 0.0
  %865 = vmatpush1.msra.mxu0 0.0
  %866 = vmatprep.subr.mxu0 0.0
  %867 = vmatpush1.msra.mxu0 0.0
  %868 = vmatprep.subr.mxu0 0.0
  %869 = vmatpush1.msra.mxu0 0.0
  %870 = vmatprep.subr.mxu0 0.0
  %871 = vmatpush1.msra.mxu0 0.0
  %872 = vmatprep.subr.mxu0 0.0
  %873 = vmatpush1.msra.mxu0 0.0
  %874 = vmatprep.subr.mxu0 0.0
  %875 = vmatpush1.msra.mxu0 0.0
  %876 = vmatprep.subr.mxu0 0.0
  %877 = vmatpush1.msra.mxu0 0.0
  %878 = vmatprep.subr.mxu0 0.0
  %879 = vmatpush1.msra.mxu0 0.0
  %880 = vmatprep.subr.mxu0 0.0
  %881 = vmatpush1.msra.mxu0 0.0
  %882 = vmatprep.subr.mxu0 0.0
  %883 = vmatpush1.msra.mxu0 0.0
  %884 = vmatprep.subr.mxu0 0.0
  %885 = vmatpush1.msra.mxu0 0.0
  %886 = vmatprep.subr.mxu0 0.0
  %887 = vmatpush1.msra.mxu0 0.0
  %888 = vmatprep.mubr.f32.mxu0 0.0
  %889 = vmatmul.mubr.f32.gmra.mrb[0].mxu0 %v819
  %v890 = vpop.f32.mrb[0].mxu0
  %v891 = vadd.f32 0.0, %v890
  %v892 = vpop.f32.mrb[0].mxu0
  %893 = vmatprep.mubr.f32.mxu0 0.0
  %894 = vmatmul.mubr.f32.gmra.mrb[0].mxu0 %v822
  %v895 = vpop.f32.mrb[0].mxu0
  %v896 = vadd.f32 0.0, %v895
  %v897 = vpop.f32.mrb[0].mxu0
  %898 = vdwg.mxu0
  %899 = vrot.lane.b32.xlu0 %v275, 104
  %v900 = vpop.permute.xlu0 %899
  %901 = vrot.lane.b32.xlu0 %v280, 104
  %v902 = vpop.permute.xlu0 %901
  %903 = vrot.lane.b32.xlu0 %v275, 72
  %v904 = vpop.permute.xlu0 %903
  %905 = vrot.lane.b32.xlu0 %v280, 72
  %v906 = vpop.permute.xlu0 %905
  %v907 = vsel %vm299, %v900, 0
  %v909 = vsel %vm299, %v902, 0
  %v911 = vsel %vm299, %v904, 0
  %v913 = vsel %vm299, %v906, 0
  %915 = vmatprep.subr.mxu0 0.0
  %916 = vmatpush1.xpose.msra.mxu0 %v911
  %917 = vmatprep.subr.mxu0 0.0
  %918 = vmatpush1.xpose.msra.mxu0 %v913
  %919 = vmatprep.subr.mxu0 0.0
  %920 = vmatpush1.xpose.msra.mxu0 0.0
  %921 = vmatprep.subr.mxu0 0.0
  %922 = vmatpush1.xpose.msra.mxu0 0.0
  %923 = vmatprep.subr.mxu0 0.0
  %924 = vmatpush1.xpose.msra.mxu0 0.0
  %925 = vmatprep.subr.mxu0 0.0
  %926 = vmatpush1.xpose.msra.mxu0 0.0
  %927 = vmatprep.subr.mxu0 0.0
  %928 = vmatpush1.xpose.msra.mxu0 0.0
  %929 = vmatprep.subr.mxu0 0.0
  %930 = vmatpush1.xpose.msra.mxu0 0.0
  %931 = vmatprep.subr.mxu0 0.0
  %932 = vmatpush1.xpose.msra.mxu0 0.0
  %933 = vmatprep.subr.mxu0 0.0
  %934 = vmatpush1.xpose.msra.mxu0 0.0
  %935 = vmatprep.subr.mxu0 0.0
  %936 = vmatpush1.xpose.msra.mxu0 0.0
  %937 = vmatprep.subr.mxu0 0.0
  %938 = vmatpush1.xpose.msra.mxu0 0.0
  %939 = vmatprep.subr.mxu0 0.0
  %940 = vmatpush1.xpose.msra.mxu0 0.0
  %941 = vmatprep.subr.mxu0 0.0
  %942 = vmatpush1.xpose.msra.mxu0 0.0
  %943 = vmatprep.subr.mxu0 0.0
  %944 = vmatpush1.xpose.msra.mxu0 0.0
  %945 = vmatprep.subr.mxu0 0.0
  %946 = vmatpush1.xpose.msra.mxu0 0.0
  %947 = vmatprep.subr.mxu0 0.0
  %948 = vmatpush1.xpose.msra.mxu0 0.0
  %949 = vmatprep.subr.mxu0 0.0
  %950 = vmatpush1.xpose.msra.mxu0 0.0
  %951 = vmatprep.subr.mxu0 0.0
  %952 = vmatpush1.xpose.msra.mxu0 0.0
  %953 = vmatprep.subr.mxu0 0.0
  %954 = vmatpush1.xpose.msra.mxu0 0.0
  %955 = vmatprep.subr.mxu0 0.0
  %956 = vmatpush1.xpose.msra.mxu0 0.0
  %957 = vmatprep.subr.mxu0 0.0
  %958 = vmatpush1.xpose.msra.mxu0 0.0
  %959 = vmatprep.subr.mxu0 0.0
  %960 = vmatpush1.xpose.msra.mxu0 0.0
  %961 = vmatprep.subr.mxu0 0.0
  %962 = vmatpush1.xpose.msra.mxu0 0.0
  %963 = vmatprep.subr.mxu0 0.0
  %964 = vmatpush1.xpose.msra.mxu0 0.0
  %965 = vmatprep.subr.mxu0 0.0
  %966 = vmatpush1.xpose.msra.mxu0 0.0
  %967 = vmatprep.subr.mxu0 0.0
  %968 = vmatpush1.xpose.msra.mxu0 0.0
  %969 = vmatprep.subr.mxu0 0.0
  %970 = vmatpush1.xpose.msra.mxu0 0.0
  %971 = vmatprep.subr.mxu0 0.0
  %972 = vmatpush1.xpose.msra.mxu0 0.0
  %973 = vmatprep.subr.mxu0 0.0
  %974 = vmatpush1.xpose.msra.mxu0 0.0
  %975 = vmatprep.subr.mxu0 0.0
  %976 = vmatpush1.xpose.msra.mxu0 0.0
  %977 = vmatprep.subr.mxu0 0.0
  %978 = vmatpush1.xpose.msra.mxu0 0.0
  %979 = vmatprep.mubr.f32.mxu0 0.0
  %980 = vmatmul.mubr.f32.gmra.mrb[0].mxu0 %v907
  %v981 = vpop.f32.mrb[0].mxu0
  %v982 = vadd.f32 0.0, %v981
  %v983 = vpop.f32.mrb[0].mxu0
  %984 = vmatprep.mubr.f32.mxu0 0.0
  %985 = vmatmul.mubr.f32.gmra.mrb[0].mxu0 %v909
  %v986 = vpop.f32.mrb[0].mxu0
  %v987 = vadd.f32 0.0, %v986
  %v988 = vpop.f32.mrb[0].mxu0
  %989 = vdwg.mxu0
  %v990 = vmul.f32 %v982, 0.35355338
  %v991 = vmul.f32 %v987, 0.35355338
  %v992 = vsel %vm385, %v990, -inf
  %993 = vmax.xlane.f32.xlu0 %v992
  %v994 = vpop.xlane.xlu0 %993
  %v995 = vsel %vm385, %v991, -inf
  %996 = vmax.xlane.f32.xlu0 %v995
  %v997 = vpop.xlane.xlu0 %996
  %v998 = vsub.f32 %v990, %v994
  %v999 = vsub.f32 %v991, %v997
  %v1000 = vmul.f32 %v998, 1.442695
  %v1001 = vpow.pop %v1000
  %v1002 = vmul.f32 %v999, 1.442695
  %v1003 = vpow.pop %v1002
  %v1004 = vsel %vm385, %v1001, 0.0
  %1005 = vadd.xlane.f32.xlu0 %v1004
  %v1006 = vpop.xlane.xlu0 %1005
  %v1007 = vsel %vm385, %v1003, 0.0
  %1008 = vadd.xlane.f32.xlu0 %v1007
  %v1009 = vpop.xlane.xlu0 %1008
  %v1010 = vrcp.pop %v1006
  %v1011 = vrcp.pop %v1009
  %v1012 = vmul.f32 %v1001, %v1010
  %v1013 = vmul.f32 %v1003, %v1011
  %1014 = vrot.lane.b32.xlu0 %v275, 40
  %v1015 = vpop.permute.xlu0 %1014
  %1016 = vrot.lane.b32.xlu0 %v280, 40
  %v1017 = vpop.permute.xlu0 %1016
  %v1021 = vsel %vm385, %v1012, 0
  %v1024 = vsel %vm385, %v1013, 0
  %1026 = vmatprep.subr.mxu0 0.0
  %1027 = vmatpush1.msra.mxu0 %v1015
  %1028 = vmatprep.subr.mxu0 0.0
  %1029 = vmatpush1.msra.mxu0 %v1017
  %1030 = vmatprep.subr.mxu0 0.0
  %1031 = vmatpush1.msra.mxu0 0.0
  %1032 = vmatprep.subr.mxu0 0.0
  %1033 = vmatpush1.msra.mxu0 0.0
  %1034 = vmatprep.subr.mxu0 0.0
  %1035 = vmatpush1.msra.mxu0 0.0
  %1036 = vmatprep.subr.mxu0 0.0
  %1037 = vmatpush1.msra.mxu0 0.0
  %1038 = vmatprep.subr.mxu0 0.0
  %1039 = vmatpush1.msra.mxu0 0.0
  %1040 = vmatprep.subr.mxu0 0.0
  %1041 = vmatpush1.msra.mxu0 0.0
  %1042 = vmatprep.subr.mxu0 0.0
  %1043 = vmatpush1.msra.mxu0 0.0
  %1044 = vmatprep.subr.mxu0 0.0
  %1045 = vmatpush1.msra.mxu0 0.0
  %1046 = vmatprep.subr.mxu0 0.0
  %1047 = vmatpush1.msra.mxu0 0.0
  %1048 = vmatprep.subr.mxu0 0.0
  %1049 = vmatpush1.msra.mxu0 0.0
  %1050 = vmatprep.subr.mxu0 0.0
  %1051 = vmatpush1.msra.mxu0 0.0
  %1052 = vmatprep.subr.mxu0 0.0
  %1053 = vmatpush1.msra.mxu0 0.0
  %1054 = vmatprep.subr.mxu0 0.0
  %1055 = vmatpush1.msra.mxu0 0.0
  %1056 = vmatprep.subr.mxu0 0.0
  %1057 = vmatpush1.msra.mxu0 0.0
  %1058 = vmatprep.subr.mxu0 0.0
  %1059 = vmatpush1.msra.mxu0 0.0
  %1060 = vmatprep.subr.mxu0 0.0
  %1061 = vmatpush1.msra.mxu0 0.0
  %1062 = vmatprep.subr.mxu0 0.0
  %1063 = vmatpush1.msra.mxu0 0.0
  %1064 = vmatprep.subr.mxu0 0.0
  %1065 = vmatpush1.msra.mxu0 0.0
  %1066 = vmatprep.subr.mxu0 0.0
  %1067 = vmatpush1.msra.mxu0 0.0
  %1068 = vmatprep.subr.mxu0 0.0
  %1069 = vmatpush1.msra.mxu0 0.0
  %1070 = vmatprep.subr.mxu0 0.0
  %1071 = vmatpush1.msra.mxu0 0.0
  %1072 = vmatprep.subr.mxu0 0.0
  %1073 = vmatpush1.msra.mxu0 0.0
  %1074 = vmatprep.subr.mxu0 0.0
  %1075 = vmatpush1.msra.mxu0 0.0
  %1076 = vmatprep.subr.mxu0 0.0
  %1077 = vmatpush1.msra.mxu0 0.0
  %1078 = vmatprep.subr.mxu0 0.0
  %1079 = vmatpush1.msra.mxu0 0.0
  %1080 = vmatprep.subr.mxu0 0.0
  %1081 = vmatpush1.msra.mxu0 0.0
  %1082 = vmatprep.subr.mxu0 0.0
  %1083 = vmatpush1.msra.mxu0 0.0
  %1084 = vmatprep.subr.mxu0 0.0
  %1085 = vmatpush1.msra.mxu0 0.0
  %1086 = vmatprep.subr.mxu0 0.0
  %1087 = vmatpush1.msra.mxu0 0.0
  %1088 = vmatprep.subr.mxu0 0.0
  %1089 = vmatpush1.msra.mxu0 0.0
  %1090 = vmatprep.mubr.f32.mxu0 0.0
  %1091 = vmatmul.mubr.f32.gmra.mrb[0].mxu0 %v1021
  %v1092 = vpop.f32.mrb[0].mxu0
  %v1093 = vadd.f32 0.0, %v1092
  %v1094 = vpop.f32.mrb[0].mxu0
  %1095 = vmatprep.mubr.f32.mxu0 0.0
  %1096 = vmatmul.mubr.f32.gmra.mrb[0].mxu0 %v1024
  %v1097 = vpop.f32.mrb[0].mxu0
  %v1098 = vadd.f32 0.0, %v1097
  %v1099 = vpop.f32.mrb[0].mxu0
  %1100 = vdwg.mxu0
  %1103 = vrot.lane.b32.xlu0 %v689, 8
  %v1104 = vpop.permute.xlu0 %1103
  %1105 = vrot.lane.b32.xlu0 %v694, 8
  %v1106 = vpop.permute.xlu0 %1105
  %1111 = vrot.lane.b32.xlu0 %v891, 16
  %v1112 = vpop.permute.xlu0 %1111
  %1113 = vrot.lane.b32.xlu0 %v896, 16
  %v1114 = vpop.permute.xlu0 %1113
  %1119 = vrot.lane.b32.xlu0 %v1093, 24
  %v1120 = vpop.permute.xlu0 %1119
  %1121 = vrot.lane.b32.xlu0 %v1098, 24
  %v1122 = vpop.permute.xlu0 %1121
  %v1125 = vsel %vm299, %v487, %v1104
  %v1126 = vsel %vm299, %v492, %v1106
  %v1127 = vsel %vm385, %v1125, %v1112
  %v1128 = vsel %vm385, %v1126, %v1114
  %vm1129 = vcmask 195584
  %v1130 = vsel %vm1129, %v1127, %v1120
  %v1131 = vsel %vm1129, %v1128, %v1122
  %1134 = vrot.lane.b32.xlu0 %v285, 96
  %v1135 = vpop.permute.xlu0 %1134
  %1136 = vrot.lane.b32.xlu0 %v290, 96
  %v1137 = vpop.permute.xlu0 %1136
  %v1138 = vsel %vm299, %v285, 0
  %v1140 = vsel %vm299, %v290, 0
  %v1142 = vsel %vm299, %v1135, 0
  %v1144 = vsel %vm299, %v1137, 0
  %1146 = vmatprep.subr.mxu0 0.0
  %1147 = vmatpush1.xpose.msra.mxu0 %v1142
  %1148 = vmatprep.subr.mxu0 0.0
  %1149 = vmatpush1.xpose.msra.mxu0 %v1144
  %1150 = vmatprep.subr.mxu0 0.0
  %1151 = vmatpush1.xpose.msra.mxu0 0.0
  %1152 = vmatprep.subr.mxu0 0.0
  %1153 = vmatpush1.xpose.msra.mxu0 0.0
  %1154 = vmatprep.subr.mxu0 0.0
  %1155 = vmatpush1.xpose.msra.mxu0 0.0
  %1156 = vmatprep.subr.mxu0 0.0
  %1157 = vmatpush1.xpose.msra.mxu0 0.0
  %1158 = vmatprep.subr.mxu0 0.0
  %1159 = vmatpush1.xpose.msra.mxu0 0.0
  %1160 = vmatprep.subr.mxu0 0.0
  %1161 = vmatpush1.xpose.msra.mxu0 0.0
  %1162 = vmatprep.subr.mxu0 0.0
  %1163 = vmatpush1.xpose.msra.mxu0 0.0
  %1164 = vmatprep.subr.mxu0 0.0
  %1165 = vmatpush1.xpose.msra.mxu0 0.0
  %1166 = vmatprep.subr.mxu0 0.0
  %1167 = vmatpush1.xpose.msra.mxu0 0.0
  %1168 = vmatprep.subr.mxu0 0.0
  %1169 = vmatpush1.xpose.msra.mxu0 0.0
  %1170 = vmatprep.subr.mxu0 0.0
  %1171 = vmatpush1.xpose.msra.mxu0 0.0
  %1172 = vmatprep.subr.mxu0 0.0
  %1173 = vmatpush1.xpose.msra.mxu0 0.0
  %1174 = vmatprep.subr.mxu0 0.0
  %1175 = vmatpush1.xpose.msra.mxu0 0.0
  %1176 = vmatprep.subr.mxu0 0.0
  %1177 = vmatpush1.xpose.msra.mxu0 0.0
  %1178 = vmatprep.subr.mxu0 0.0
  %1179 = vmatpush1.xpose.msra.mxu0 0.0
  %1180 = vmatprep.subr.mxu0 0.0
  %1181 = vmatpush1.xpose.msra.mxu0 0.0
  %1182 = vmatprep.subr.mxu0 0.0
  %1183 = vmatpush1.xpose.msra.mxu0 0.0
  %1184 = vmatprep.subr.mxu0 0.0
  %1185 = vmatpush1.xpose.msra.mxu0 0.0
  %1186 = vmatprep.subr.mxu0 0.0
  %1187 = vmatpush1.xpose.msra.mxu0 0.0
  %1188 = vmatprep.subr.mxu0 0.0
  %1189 = vmatpush1.xpose.msra.mxu0 0.0
  %1190 = vmatprep.subr.mxu0 0.0
  %1191 = vmatpush1.xpose.msra.mxu0 0.0
  %1192 = vmatprep.subr.mxu0 0.0
  %1193 = vmatpush1.xpose.msra.mxu0 0.0
  %1194 = vmatprep.subr.mxu0 0.0
  %1195 = vmatpush1.xpose.msra.mxu0 0.0
  %1196 = vmatprep.subr.mxu0 0.0
  %1197 = vmatpush1.xpose.msra.mxu0 0.0
  %1198 = vmatprep.subr.mxu0 0.0
  %1199 = vmatpush1.xpose.msra.mxu0 0.0
  %1200 = vmatprep.subr.mxu0 0.0
  %1201 = vmatpush1.xpose.msra.mxu0 0.0
  %1202 = vmatprep.subr.mxu0 0.0
  %1203 = vmatpush1.xpose.msra.mxu0 0.0
  %1204 = vmatprep.subr.mxu0 0.0
  %1205 = vmatpush1.xpose.msra.mxu0 0.0
  %1206 = vmatprep.subr.mxu0 0.0
  %1207 = vmatpush1.xpose.msra.mxu0 0.0
  %1208 = vmatprep.subr.mxu0 0.0
  %1209 = vmatpush1.xpose.msra.mxu0 0.0
  %1210 = vmatprep.mubr.f32.mxu0 0.0
  %1211 = vmatmul.mubr.f32.gmra.mrb[0].mxu0 %v1138
  %v1212 = vpop.f32.mrb[0].mxu0
  %v1213 = vadd.f32 0.0, %v1212
  %v1214 = vpop.f32.mrb[0].mxu0
  %1215 = vmatprep.mubr.f32.mxu0 0.0
  %1216 = vmatmul.mubr.f32.gmra.mrb[0].mxu0 %v1140
  %v1217 = vpop.f32.mrb[0].mxu0
  %v1218 = vadd.f32 0.0, %v1217
  %v1219 = vpop.f32.mrb[0].mxu0
  %1220 = vdwg.mxu0
  %v1221 = vmul.f32 %v1213, 0.35355338
  %v1222 = vmul.f32 %v1218, 0.35355338
  %v1223 = vsel %vm385, %v1221, -inf
  %1224 = vmax.xlane.f32.xlu0 %v1223
  %v1225 = vpop.xlane.xlu0 %1224
  %v1226 = vsel %vm385, %v1222, -inf
  %1227 = vmax.xlane.f32.xlu0 %v1226
  %v1228 = vpop.xlane.xlu0 %1227
  %v1229 = vsub.f32 %v1221, %v1225
  %v1230 = vsub.f32 %v1222, %v1228
  %v1231 = vmul.f32 %v1229, 1.442695
  %v1232 = vpow.pop %v1231
  %v1233 = vmul.f32 %v1230, 1.442695
  %v1234 = vpow.pop %v1233
  %v1235 = vsel %vm385, %v1232, 0.0
  %1236 = vadd.xlane.f32.xlu0 %v1235
  %v1237 = vpop.xlane.xlu0 %1236
  %v1238 = vsel %vm385, %v1234, 0.0
  %1239 = vadd.xlane.f32.xlu0 %v1238
  %v1240 = vpop.xlane.xlu0 %1239
  %v1241 = vrcp.pop %v1237
  %v1242 = vrcp.pop %v1240
  %v1243 = vmul.f32 %v1232, %v1241
  %v1244 = vmul.f32 %v1234, %v1242
  %1245 = vrot.lane.b32.xlu0 %v285, 64
  %v1246 = vpop.permute.xlu0 %1245
  %1247 = vrot.lane.b32.xlu0 %v290, 64
  %v1248 = vpop.permute.xlu0 %1247
  %v1252 = vsel %vm385, %v1243, 0
  %v1255 = vsel %vm385, %v1244, 0
  %1257 = vmatprep.subr.mxu0 0.0
  %1258 = vmatpush1.msra.mxu0 %v1246
  %1259 = vmatprep.subr.mxu0 0.0
  %1260 = vmatpush1.msra.mxu0 %v1248
  %1261 = vmatprep.subr.mxu0 0.0
  %1262 = vmatpush1.msra.mxu0 0.0
  %1263 = vmatprep.subr.mxu0 0.0
  %1264 = vmatpush1.msra.mxu0 0.0
  %1265 = vmatprep.subr.mxu0 0.0
  %1266 = vmatpush1.msra.mxu0 0.0
  %1267 = vmatprep.subr.mxu0 0.0
  %1268 = vmatpush1.msra.mxu0 0.0
  %1269 = vmatprep.subr.mxu0 0.0
  %1270 = vmatpush1.msra.mxu0 0.0
  %1271 = vmatprep.subr.mxu0 0.0
  %1272 = vmatpush1.msra.mxu0 0.0
  %1273 = vmatprep.subr.mxu0 0.0
  %1274 = vmatpush1.msra.mxu0 0.0
  %1275 = vmatprep.subr.mxu0 0.0
  %1276 = vmatpush1.msra.mxu0 0.0
  %1277 = vmatprep.subr.mxu0 0.0
  %1278 = vmatpush1.msra.mxu0 0.0
  %1279 = vmatprep.subr.mxu0 0.0
  %1280 = vmatpush1.msra.mxu0 0.0
  %1281 = vmatprep.subr.mxu0 0.0
  %1282 = vmatpush1.msra.mxu0 0.0
  %1283 = vmatprep.subr.mxu0 0.0
  %1284 = vmatpush1.msra.mxu0 0.0
  %1285 = vmatprep.subr.mxu0 0.0
  %1286 = vmatpush1.msra.mxu0 0.0
  %1287 = vmatprep.subr.mxu0 0.0
  %1288 = vmatpush1.msra.mxu0 0.0
  %1289 = vmatprep.subr.mxu0 0.0
  %1290 = vmatpush1.msra.mxu0 0.0
  %1291 = vmatprep.subr.mxu0 0.0
  %1292 = vmatpush1.msra.mxu0 0.0
  %1293 = vmatprep.subr.mxu0 0.0
  %1294 = vmatpush1.msra.mxu0 0.0
  %1295 = vmatprep.subr.mxu0 0.0
  %1296 = vmatpush1.msra.mxu0 0.0
  %1297 = vmatprep.subr.mxu0 0.0
  %1298 = vmatpush1.msra.mxu0 0.0
  %1299 = vmatprep.subr.mxu0 0.0
  %1300 = vmatpush1.msra.mxu0 0.0
  %1301 = vmatprep.subr.mxu0 0.0
  %1302 = vmatpush1.msra.mxu0 0.0
  %1303 = vmatprep.subr.mxu0 0.0
  %1304 = vmatpush1.msra.mxu0 0.0
  %1305 = vmatprep.subr.mxu0 0.0
  %1306 = vmatpush1.msra.mxu0 0.0
  %1307 = vmatprep.subr.mxu0 0.0
  %1308 = vmatpush1.msra.mxu0 0.0
  %1309 = vmatprep.subr.mxu0 0.0
  %1310 = vmatpush1.msra.mxu0 0.0
  %1311 = vmatprep.subr.mxu0 0.0
  %1312 = vmatpush1.msra.mxu0 0.0
  %1313 = vmatprep.subr.mxu0 0.0
  %1314 = vmatpush1.msra.mxu0 0.0
  %1315 = vmatprep.subr.mxu0 0.0
  %1316 = vmatpush1.msra.mxu0 0.0
  %1317 = vmatprep.subr.mxu0 0.0
  %1318 = vmatpush1.msra.mxu0 0.0
  %1319 = vmatprep.subr.mxu0 0.0
  %1320 = vmatpush1.msra.mxu0 0.0
  %1321 = vmatprep.mubr.f32.mxu0 0.0
  %1322 = vmatmul.mubr.f32.gmra.mrb[0].mxu0 %v1252
  %v1323 = vpop.f32.mrb[0].mxu0
  %v1324 = vadd.f32 0.0, %v1323
  %v1325 = vpop.f32.mrb[0].mxu0
  %1326 = vmatprep.mubr.f32.mxu0 0.0
  %1327 = vmatmul.mubr.f32.gmra.mrb[0].mxu0 %v1255
  %v1328 = vpop.f32.mrb[0].mxu0
  %v1329 = vadd.f32 0.0, %v1328
  %v1330 = vpop.f32.mrb[0].mxu0
  %1331 = vdwg.mxu0
  %1332 = vrot.lane.b32.xlu0 %v285, 120
  %v1333 = vpop.permute.xlu0 %1332
  %1334 = vrot.lane.b32.xlu0 %v290, 120
  %v1335 = vpop.permute.xlu0 %1334
  %1336 = vrot.lane.b32.xlu0 %v285, 88
  %v1337 = vpop.permute.xlu0 %1336
  %1338 = vrot.lane.b32.xlu0 %v290, 88
  %v1339 = vpop.permute.xlu0 %1338
  %v1340 = vsel %vm299, %v1333, 0
  %v1342 = vsel %vm299, %v1335, 0
  %v1344 = vsel %vm299, %v1337, 0
  %v1346 = vsel %vm299, %v1339, 0
  %1348 = vmatprep.subr.mxu0 0.0
  %1349 = vmatpush1.xpose.msra.mxu0 %v1344
  %1350 = vmatprep.subr.mxu0 0.0
  %1351 = vmatpush1.xpose.msra.mxu0 %v1346
  %1352 = vmatprep.subr.mxu0 0.0
  %1353 = vmatpush1.xpose.msra.mxu0 0.0
  %1354 = vmatprep.subr.mxu0 0.0
  %1355 = vmatpush1.xpose.msra.mxu0 0.0
  %1356 = vmatprep.subr.mxu0 0.0
  %1357 = vmatpush1.xpose.msra.mxu0 0.0
  %1358 = vmatprep.subr.mxu0 0.0
  %1359 = vmatpush1.xpose.msra.mxu0 0.0
  %1360 = vmatprep.subr.mxu0 0.0
  %1361 = vmatpush1.xpose.msra.mxu0 0.0
  %1362 = vmatprep.subr.mxu0 0.0
  %1363 = vmatpush1.xpose.msra.mxu0 0.0
  %1364 = vmatprep.subr.mxu0 0.0
  %1365 = vmatpush1.xpose.msra.mxu0 0.0
  %1366 = vmatprep.subr.mxu0 0.0
  %1367 = vmatpush1.xpose.msra.mxu0 0.0
  %1368 = vmatprep.subr.mxu0 0.0
  %1369 = vmatpush1.xpose.msra.mxu0 0.0
  %1370 = vmatprep.subr.mxu0 0.0
  %1371 = vmatpush1.xpose.msra.mxu0 0.0
  %1372 = vmatprep.subr.mxu0 0.0
  %1373 = vmatpush1.xpose.msra.mxu0 0.0
  %1374 = vmatprep.subr.mxu0 0.0
  %1375 = vmatpush1.xpose.msra.mxu0 0.0
  %1376 = vmatprep.subr.mxu0 0.0
  %1377 = vmatpush1.xpose.msra.mxu0 0.0
  %1378 = vmatprep.subr.mxu0 0.0
  %1379 = vmatpush1.xpose.msra.mxu0 0.0
  %1380 = vmatprep.subr.mxu0 0.0
  %1381 = vmatpush1.xpose.msra.mxu0 0.0
  %1382 = vmatprep.subr.mxu0 0.0
  %1383 = vmatpush1.xpose.msra.mxu0 0.0
  %1384 = vmatprep.subr.mxu0 0.0
  %1385 = vmatpush1.xpose.msra.mxu0 0.0
  %1386 = vmatprep.subr.mxu0 0.0
  %1387 = vmatpush1.xpose.msra.mxu0 0.0
  %1388 = vmatprep.subr.mxu0 0.0
  %1389 = vmatpush1.xpose.msra.mxu0 0.0
  %1390 = vmatprep.subr.mxu0 0.0
  %1391 = vmatpush1.xpose.msra.mxu0 0.0
  %1392 = vmatprep.subr.mxu0 0.0
  %1393 = vmatpush1.xpose.msra.mxu0 0.0
  %1394 = vmatprep.subr.mxu0 0.0
  %1395 = vmatpush1.xpose.msra.mxu0 0.0
  %1396 = vmatprep.subr.mxu0 0.0
  %1397 = vmatpush1.xpose.msra.mxu0 0.0
  %1398 = vmatprep.subr.mxu0 0.0
  %1399 = vmatpush1.xpose.msra.mxu0 0.0
  %1400 = vmatprep.subr.mxu0 0.0
  %1401 = vmatpush1.xpose.msra.mxu0 0.0
  %1402 = vmatprep.subr.mxu0 0.0
  %1403 = vmatpush1.xpose.msra.mxu0 0.0
  %1404 = vmatprep.subr.mxu0 0.0
  %1405 = vmatpush1.xpose.msra.mxu0 0.0
  %1406 = vmatprep.subr.mxu0 0.0
  %1407 = vmatpush1.xpose.msra.mxu0 0.0
  %1408 = vmatprep.subr.mxu0 0.0
  %1409 = vmatpush1.xpose.msra.mxu0 0.0
  %1410 = vmatprep.subr.mxu0 0.0
  %1411 = vmatpush1.xpose.msra.mxu0 0.0
  %1412 = vmatprep.mubr.f32.mxu0 0.0
  %1413 = vmatmul.mubr.f32.gmra.mrb[0].mxu0 %v1340
  %v1414 = vpop.f32.mrb[0].mxu0
  %v1415 = vadd.f32 0.0, %v1414
  %v1416 = vpop.f32.mrb[0].mxu0
  %1417 = vmatprep.mubr.f32.mxu0 0.0
  %1418 = vmatmul.mubr.f32.gmra.mrb[0].mxu0 %v1342
  %v1419 = vpop.f32.mrb[0].mxu0
  %v1420 = vadd.f32 0.0, %v1419
  %v1421 = vpop.f32.mrb[0].mxu0
  %1422 = vdwg.mxu0
  %v1423 = vmul.f32 %v1415, 0.35355338
  %v1424 = vmul.f32 %v1420, 0.35355338
  %v1425 = vsel %vm385, %v1423, -inf
  %1426 = vmax.xlane.f32.xlu0 %v1425
  %v1427 = vpop.xlane.xlu0 %1426
  %v1428 = vsel %vm385, %v1424, -inf
  %1429 = vmax.xlane.f32.xlu0 %v1428
  %v1430 = vpop.xlane.xlu0 %1429
  %v1431 = vsub.f32 %v1423, %v1427
  %v1432 = vsub.f32 %v1424, %v1430
  %v1433 = vmul.f32 %v1431, 1.442695
  %v1434 = vpow.pop %v1433
  %v1435 = vmul.f32 %v1432, 1.442695
  %v1436 = vpow.pop %v1435
  %v1437 = vsel %vm385, %v1434, 0.0
  %1438 = vadd.xlane.f32.xlu0 %v1437
  %v1439 = vpop.xlane.xlu0 %1438
  %v1440 = vsel %vm385, %v1436, 0.0
  %1441 = vadd.xlane.f32.xlu0 %v1440
  %v1442 = vpop.xlane.xlu0 %1441
  %v1443 = vrcp.pop %v1439
  %v1444 = vrcp.pop %v1442
  %v1445 = vmul.f32 %v1434, %v1443
  %v1446 = vmul.f32 %v1436, %v1444
  %1447 = vrot.lane.b32.xlu0 %v285, 56
  %v1448 = vpop.permute.xlu0 %1447
  %1449 = vrot.lane.b32.xlu0 %v290, 56
  %v1450 = vpop.permute.xlu0 %1449
  %v1454 = vsel %vm385, %v1445, 0
  %v1457 = vsel %vm385, %v1446, 0
  %1459 = vmatprep.subr.mxu0 0.0
  %1460 = vmatpush1.msra.mxu0 %v1448
  %1461 = vmatprep.subr.mxu0 0.0
  %1462 = vmatpush1.msra.mxu0 %v1450
  %1463 = vmatprep.subr.mxu0 0.0
  %1464 = vmatpush1.msra.mxu0 0.0
  %1465 = vmatprep.subr.mxu0 0.0
  %1466 = vmatpush1.msra.mxu0 0.0
  %1467 = vmatprep.subr.mxu0 0.0
  %1468 = vmatpush1.msra.mxu0 0.0
  %1469 = vmatprep.subr.mxu0 0.0
  %1470 = vmatpush1.msra.mxu0 0.0
  %1471 = vmatprep.subr.mxu0 0.0
  %1472 = vmatpush1.msra.mxu0 0.0
  %1473 = vmatprep.subr.mxu0 0.0
  %1474 = vmatpush1.msra.mxu0 0.0
  %1475 = vmatprep.subr.mxu0 0.0
  %1476 = vmatpush1.msra.mxu0 0.0
  %1477 = vmatprep.subr.mxu0 0.0
  %1478 = vmatpush1.msra.mxu0 0.0
  %1479 = vmatprep.subr.mxu0 0.0
  %1480 = vmatpush1.msra.mxu0 0.0
  %1481 = vmatprep.subr.mxu0 0.0
  %1482 = vmatpush1.msra.mxu0 0.0
  %1483 = vmatprep.subr.mxu0 0.0
  %1484 = vmatpush1.msra.mxu0 0.0
  %1485 = vmatprep.subr.mxu0 0.0
  %1486 = vmatpush1.msra.mxu0 0.0
  %1487 = vmatprep.subr.mxu0 0.0
  %1488 = vmatpush1.msra.mxu0 0.0
  %1489 = vmatprep.subr.mxu0 0.0
  %1490 = vmatpush1.msra.mxu0 0.0
  %1491 = vmatprep.subr.mxu0 0.0
  %1492 = vmatpush1.msra.mxu0 0.0
  %1493 = vmatprep.subr.mxu0 0.0
  %1494 = vmatpush1.msra.mxu0 0.0
  %1495 = vmatprep.subr.mxu0 0.0
  %1496 = vmatpush1.msra.mxu0 0.0
  %1497 = vmatprep.subr.mxu0 0.0
  %1498 = vmatpush1.msra.mxu0 0.0
  %1499 = vmatprep.subr.mxu0 0.0
  %1500 = vmatpush1.msra.mxu0 0.0
  %1501 = vmatprep.subr.mxu0 0.0
  %1502 = vmatpush1.msra.mxu0 0.0
  %1503 = vmatprep.subr.mxu0 0.0
  %1504 = vmatpush1.msra.mxu0 0.0
  %1505 = vmatprep.subr.mxu0 0.0
  %1506 = vmatpush1.msra.mxu0 0.0
  %1507 = vmatprep.subr.mxu0 0.0
  %1508 = vmatpush1.msra.mxu0 0.0
  %1509 = vmatprep.subr.mxu0 0.0
  %1510 = vmatpush1.msra.mxu0 0.0
  %1511 = vmatprep.subr.mxu0 0.0
  %1512 = vmatpush1.msra.mxu0 0.0
  %1513 = vmatprep.subr.mxu0 0.0
  %1514 = vmatpush1.msra.mxu0 0.0
  %1515 = vmatprep.subr.mxu0 0.0
  %1516 = vmatpush1.msra.mxu0 0.0
  %1517 = vmatprep.subr.mxu0 0.0
  %1518 = vmatpush1.msra.mxu0 0.0
  %1519 = vmatprep.subr.mxu0 0.0
  %1520 = vmatpush1.msra.mxu0 0.0
  %1521 = vmatprep.subr.mxu0 0.0
  %1522 = vmatpush1.msra.mxu0 0.0
  %1523 = vmatprep.mubr.f32.mxu0 0.0
  %1524 = vmatmul.mubr.f32.gmra.mrb[0].mxu0 %v1454
  %v1525 = vpop.f32.mrb[0].mxu0
  %v1526 = vadd.f32 0.0, %v1525
  %v1527 = vpop.f32.mrb[0].mxu0
  %1528 = vmatprep.mubr.f32.mxu0 0.0
  %1529 = vmatmul.mubr.f32.gmra.mrb[0].mxu0 %v1457
  %v1530 = vpop.f32.mrb[0].mxu0
  %v1531 = vadd.f32 0.0, %v1530
  %v1532 = vpop.f32.mrb[0].mxu0
  %1533 = vdwg.mxu0
  %1534 = vrot.lane.b32.xlu0 %v285, 112
  %v1535 = vpop.permute.xlu0 %1534
  %1536 = vrot.lane.b32.xlu0 %v290, 112
  %v1537 = vpop.permute.xlu0 %1536
  %1538 = vrot.lane.b32.xlu0 %v285, 80
  %v1539 = vpop.permute.xlu0 %1538
  %1540 = vrot.lane.b32.xlu0 %v290, 80
  %v1541 = vpop.permute.xlu0 %1540
  %v1542 = vsel %vm299, %v1535, 0
  %v1544 = vsel %vm299, %v1537, 0
  %v1546 = vsel %vm299, %v1539, 0
  %v1548 = vsel %vm299, %v1541, 0
  %1550 = vmatprep.subr.mxu0 0.0
  %1551 = vmatpush1.xpose.msra.mxu0 %v1546
  %1552 = vmatprep.subr.mxu0 0.0
  %1553 = vmatpush1.xpose.msra.mxu0 %v1548
  %1554 = vmatprep.subr.mxu0 0.0
  %1555 = vmatpush1.xpose.msra.mxu0 0.0
  %1556 = vmatprep.subr.mxu0 0.0
  %1557 = vmatpush1.xpose.msra.mxu0 0.0
  %1558 = vmatprep.subr.mxu0 0.0
  %1559 = vmatpush1.xpose.msra.mxu0 0.0
  %1560 = vmatprep.subr.mxu0 0.0
  %1561 = vmatpush1.xpose.msra.mxu0 0.0
  %1562 = vmatprep.subr.mxu0 0.0
  %1563 = vmatpush1.xpose.msra.mxu0 0.0
  %1564 = vmatprep.subr.mxu0 0.0
  %1565 = vmatpush1.xpose.msra.mxu0 0.0
  %1566 = vmatprep.subr.mxu0 0.0
  %1567 = vmatpush1.xpose.msra.mxu0 0.0
  %1568 = vmatprep.subr.mxu0 0.0
  %1569 = vmatpush1.xpose.msra.mxu0 0.0
  %1570 = vmatprep.subr.mxu0 0.0
  %1571 = vmatpush1.xpose.msra.mxu0 0.0
  %1572 = vmatprep.subr.mxu0 0.0
  %1573 = vmatpush1.xpose.msra.mxu0 0.0
  %1574 = vmatprep.subr.mxu0 0.0
  %1575 = vmatpush1.xpose.msra.mxu0 0.0
  %1576 = vmatprep.subr.mxu0 0.0
  %1577 = vmatpush1.xpose.msra.mxu0 0.0
  %1578 = vmatprep.subr.mxu0 0.0
  %1579 = vmatpush1.xpose.msra.mxu0 0.0
  %1580 = vmatprep.subr.mxu0 0.0
  %1581 = vmatpush1.xpose.msra.mxu0 0.0
  %1582 = vmatprep.subr.mxu0 0.0
  %1583 = vmatpush1.xpose.msra.mxu0 0.0
  %1584 = vmatprep.subr.mxu0 0.0
  %1585 = vmatpush1.xpose.msra.mxu0 0.0
  %1586 = vmatprep.subr.mxu0 0.0
  %1587 = vmatpush1.xpose.msra.mxu0 0.0
  %1588 = vmatprep.subr.mxu0 0.0
  %1589 = vmatpush1.xpose.msra.mxu0 0.0
  %1590 = vmatprep.subr.mxu0 0.0
  %1591 = vmatpush1.xpose.msra.mxu0 0.0
  %1592 = vmatprep.subr.mxu0 0.0
  %1593 = vmatpush1.xpose.msra.mxu0 0.0
  %1594 = vmatprep.subr.mxu0 0.0
  %1595 = vmatpush1.xpose.msra.mxu0 0.0
  %1596 = vmatprep.subr.mxu0 0.0
  %1597 = vmatpush1.xpose.msra.mxu0 0.0
  %1598 = vmatprep.subr.mxu0 0.0
  %1599 = vmatpush1.xpose.msra.mxu0 0.0
  %1600 = vmatprep.subr.mxu0 0.0
  %1601 = vmatpush1.xpose.msra.mxu0 0.0
  %1602 = vmatprep.subr.mxu0 0.0
  %1603 = vmatpush1.xpose.msra.mxu0 0.0
  %1604 = vmatprep.subr.mxu0 0.0
  %1605 = vmatpush1.xpose.msra.mxu0 0.0
  %1606 = vmatprep.subr.mxu0 0.0
  %1607 = vmatpush1.xpose.msra.mxu0 0.0
  %1608 = vmatprep.subr.mxu0 0.0
  %1609 = vmatpush1.xpose.msra.mxu0 0.0
  %1610 = vmatprep.subr.mxu0 0.0
  %1611 = vmatpush1.xpose.msra.mxu0 0.0
  %1612 = vmatprep.subr.mxu0 0.0
  %1613 = vmatpush1.xpose.msra.mxu0 0.0
  %1614 = vmatprep.mubr.f32.mxu0 0.0
  %1615 = vmatmul.mubr.f32.gmra.mrb[0].mxu0 %v1542
  %v1616 = vpop.f32.mrb[0].mxu0
  %v1617 = vadd.f32 0.0, %v1616
  %v1618 = vpop.f32.mrb[0].mxu0
  %1619 = vmatprep.mubr.f32.mxu0 0.0
  %1620 = vmatmul.mubr.f32.gmra.mrb[0].mxu0 %v1544
  %v1621 = vpop.f32.mrb[0].mxu0
  %v1622 = vadd.f32 0.0, %v1621
  %v1623 = vpop.f32.mrb[0].mxu0
  %1624 = vdwg.mxu0
  %v1625 = vmul.f32 %v1617, 0.35355338
  %v1626 = vmul.f32 %v1622, 0.35355338
  %v1627 = vsel %vm385, %v1625, -inf
  %1628 = vmax.xlane.f32.xlu0 %v1627
  %v1629 = vpop.xlane.xlu0 %1628
  %v1630 = vsel %vm385, %v1626, -inf
  %1631 = vmax.xlane.f32.xlu0 %v1630
  %v1632 = vpop.xlane.xlu0 %1631
  %v1633 = vsub.f32 %v1625, %v1629
  %v1634 = vsub.f32 %v1626, %v1632
  %v1635 = vmul.f32 %v1633, 1.442695
  %v1636 = vpow.pop %v1635
  %v1637 = vmul.f32 %v1634, 1.442695
  %v1638 = vpow.pop %v1637
  %v1639 = vsel %vm385, %v1636, 0.0
  %1640 = vadd.xlane.f32.xlu0 %v1639
  %v1641 = vpop.xlane.xlu0 %1640
  %v1642 = vsel %vm385, %v1638, 0.0
  %1643 = vadd.xlane.f32.xlu0 %v1642
  %v1644 = vpop.xlane.xlu0 %1643
  %v1645 = vrcp.pop %v1641
  %v1646 = vrcp.pop %v1644
  %v1647 = vmul.f32 %v1636, %v1645
  %v1648 = vmul.f32 %v1638, %v1646
  %1649 = vrot.lane.b32.xlu0 %v285, 48
  %v1650 = vpop.permute.xlu0 %1649
  %1651 = vrot.lane.b32.xlu0 %v290, 48
  %v1652 = vpop.permute.xlu0 %1651
  %v1656 = vsel %vm385, %v1647, 0
  %v1659 = vsel %vm385, %v1648, 0
  %1661 = vmatprep.subr.mxu0 0.0
  %1662 = vmatpush1.msra.mxu0 %v1650
  %1663 = vmatprep.subr.mxu0 0.0
  %1664 = vmatpush1.msra.mxu0 %v1652
  %1665 = vmatprep.subr.mxu0 0.0
  %1666 = vmatpush1.msra.mxu0 0.0
  %1667 = vmatprep.subr.mxu0 0.0
  %1668 = vmatpush1.msra.mxu0 0.0
  %1669 = vmatprep.subr.mxu0 0.0
  %1670 = vmatpush1.msra.mxu0 0.0
  %1671 = vmatprep.subr.mxu0 0.0
  %1672 = vmatpush1.msra.mxu0 0.0
  %1673 = vmatprep.subr.mxu0 0.0
  %1674 = vmatpush1.msra.mxu0 0.0
  %1675 = vmatprep.subr.mxu0 0.0
  %1676 = vmatpush1.msra.mxu0 0.0
  %1677 = vmatprep.subr.mxu0 0.0
  %1678 = vmatpush1.msra.mxu0 0.0
  %1679 = vmatprep.subr.mxu0 0.0
  %1680 = vmatpush1.msra.mxu0 0.0
  %1681 = vmatprep.subr.mxu0 0.0
  %1682 = vmatpush1.msra.mxu0 0.0
  %1683 = vmatprep.subr.mxu0 0.0
  %1684 = vmatpush1.msra.mxu0 0.0
  %1685 = vmatprep.subr.mxu0 0.0
  %1686 = vmatpush1.msra.mxu0 0.0
  %1687 = vmatprep.subr.mxu0 0.0
  %1688 = vmatpush1.msra.mxu0 0.0
  %1689 = vmatprep.subr.mxu0 0.0
  %1690 = vmatpush1.msra.mxu0 0.0
  %1691 = vmatprep.subr.mxu0 0.0
  %1692 = vmatpush1.msra.mxu0 0.0
  %1693 = vmatprep.subr.mxu0 0.0
  %1694 = vmatpush1.msra.mxu0 0.0
  %1695 = vmatprep.subr.mxu0 0.0
  %1696 = vmatpush1.msra.mxu0 0.0
  %1697 = vmatprep.subr.mxu0 0.0
  %1698 = vmatpush1.msra.mxu0 0.0
  %1699 = vmatprep.subr.mxu0 0.0
  %1700 = vmatpush1.msra.mxu0 0.0
  %1701 = vmatprep.subr.mxu0 0.0
  %1702 = vmatpush1.msra.mxu0 0.0
  %1703 = vmatprep.subr.mxu0 0.0
  %1704 = vmatpush1.msra.mxu0 0.0
  %1705 = vmatprep.subr.mxu0 0.0
  %1706 = vmatpush1.msra.mxu0 0.0
  %1707 = vmatprep.subr.mxu0 0.0
  %1708 = vmatpush1.msra.mxu0 0.0
  %1709 = vmatprep.subr.mxu0 0.0
  %1710 = vmatpush1.msra.mxu0 0.0
  %1711 = vmatprep.subr.mxu0 0.0
  %1712 = vmatpush1.msra.mxu0 0.0
  %1713 = vmatprep.subr.mxu0 0.0
  %1714 = vmatpush1.msra.mxu0 0.0
  %1715 = vmatprep.subr.mxu0 0.0
  %1716 = vmatpush1.msra.mxu0 0.0
  %1717 = vmatprep.subr.mxu0 0.0
  %1718 = vmatpush1.msra.mxu0 0.0
  %1719 = vmatprep.subr.mxu0 0.0
  %1720 = vmatpush1.msra.mxu0 0.0
  %1721 = vmatprep.subr.mxu0 0.0
  %1722 = vmatpush1.msra.mxu0 0.0
  %1723 = vmatprep.subr.mxu0 0.0
  %1724 = vmatpush1.msra.mxu0 0.0
  %1725 = vmatprep.mubr.f32.mxu0 0.0
  %1726 = vmatmul.mubr.f32.gmra.mrb[0].mxu0 %v1656
  %v1727 = vpop.f32.mrb[0].mxu0
  %v1728 = vadd.f32 0.0, %v1727
  %v1729 = vpop.f32.mrb[0].mxu0
  %1730 = vmatprep.mubr.f32.mxu0 0.0
  %1731 = vmatmul.mubr.f32.gmra.mrb[0].mxu0 %v1659
  %v1732 = vpop.f32.mrb[0].mxu0
  %v1733 = vadd.f32 0.0, %v1732
  %v1734 = vpop.f32.mrb[0].mxu0
  %1735 = vdwg.mxu0
  %1736 = vrot.lane.b32.xlu0 %v285, 104
  %v1737 = vpop.permute.xlu0 %1736
  %1738 = vrot.lane.b32.xlu0 %v290, 104
  %v1739 = vpop.permute.xlu0 %1738
  %1740 = vrot.lane.b32.xlu0 %v285, 72
  %v1741 = vpop.permute.xlu0 %1740
  %1742 = vrot.lane.b32.xlu0 %v290, 72
  %v1743 = vpop.permute.xlu0 %1742
  %v1744 = vsel %vm299, %v1737, 0
  %v1746 = vsel %vm299, %v1739, 0
  %v1748 = vsel %vm299, %v1741, 0
  %v1750 = vsel %vm299, %v1743, 0
  %1752 = vmatprep.subr.mxu0 0.0
  %1753 = vmatpush1.xpose.msra.mxu0 %v1748
  %1754 = vmatprep.subr.mxu0 0.0
  %1755 = vmatpush1.xpose.msra.mxu0 %v1750
  %1756 = vmatprep.subr.mxu0 0.0
  %1757 = vmatpush1.xpose.msra.mxu0 0.0
  %1758 = vmatprep.subr.mxu0 0.0
  %1759 = vmatpush1.xpose.msra.mxu0 0.0
  %1760 = vmatprep.subr.mxu0 0.0
  %1761 = vmatpush1.xpose.msra.mxu0 0.0
  %1762 = vmatprep.subr.mxu0 0.0
  %1763 = vmatpush1.xpose.msra.mxu0 0.0
  %1764 = vmatprep.subr.mxu0 0.0
  %1765 = vmatpush1.xpose.msra.mxu0 0.0
  %1766 = vmatprep.subr.mxu0 0.0
  %1767 = vmatpush1.xpose.msra.mxu0 0.0
  %1768 = vmatprep.subr.mxu0 0.0
  %1769 = vmatpush1.xpose.msra.mxu0 0.0
  %1770 = vmatprep.subr.mxu0 0.0
  %1771 = vmatpush1.xpose.msra.mxu0 0.0
  %1772 = vmatprep.subr.mxu0 0.0
  %1773 = vmatpush1.xpose.msra.mxu0 0.0
  %1774 = vmatprep.subr.mxu0 0.0
  %1775 = vmatpush1.xpose.msra.mxu0 0.0
  %1776 = vmatprep.subr.mxu0 0.0
  %1777 = vmatpush1.xpose.msra.mxu0 0.0
  %1778 = vmatprep.subr.mxu0 0.0
  %1779 = vmatpush1.xpose.msra.mxu0 0.0
  %1780 = vmatprep.subr.mxu0 0.0
  %1781 = vmatpush1.xpose.msra.mxu0 0.0
  %1782 = vmatprep.subr.mxu0 0.0
  %1783 = vmatpush1.xpose.msra.mxu0 0.0
  %1784 = vmatprep.subr.mxu0 0.0
  %1785 = vmatpush1.xpose.msra.mxu0 0.0
  %1786 = vmatprep.subr.mxu0 0.0
  %1787 = vmatpush1.xpose.msra.mxu0 0.0
  %1788 = vmatprep.subr.mxu0 0.0
  %1789 = vmatpush1.xpose.msra.mxu0 0.0
  %1790 = vmatprep.subr.mxu0 0.0
  %1791 = vmatpush1.xpose.msra.mxu0 0.0
  %1792 = vmatprep.subr.mxu0 0.0
  %1793 = vmatpush1.xpose.msra.mxu0 0.0
  %1794 = vmatprep.subr.mxu0 0.0
  %1795 = vmatpush1.xpose.msra.mxu0 0.0
  %1796 = vmatprep.subr.mxu0 0.0
  %1797 = vmatpush1.xpose.msra.mxu0 0.0
  %1798 = vmatprep.subr.mxu0 0.0
  %1799 = vmatpush1.xpose.msra.mxu0 0.0
  %1800 = vmatprep.subr.mxu0 0.0
  %1801 = vmatpush1.xpose.msra.mxu0 0.0
  %1802 = vmatprep.subr.mxu0 0.0
  %1803 = vmatpush1.xpose.msra.mxu0 0.0
  %1804 = vmatprep.subr.mxu0 0.0
  %1805 = vmatpush1.xpose.msra.mxu0 0.0
  %1806 = vmatprep.subr.mxu0 0.0
  %1807 = vmatpush1.xpose.msra.mxu0 0.0
  %1808 = vmatprep.subr.mxu0 0.0
  %1809 = vmatpush1.xpose.msra.mxu0 0.0
  %1810 = vmatprep.subr.mxu0 0.0
  %1811 = vmatpush1.xpose.msra.mxu0 0.0
  %1812 = vmatprep.subr.mxu0 0.0
  %1813 = vmatpush1.xpose.msra.mxu0 0.0
  %1814 = vmatprep.subr.mxu0 0.0
  %1815 = vmatpush1.xpose.msra.mxu0 0.0
  %1816 = vmatprep.mubr.f32.mxu0 0.0
  %1817 = vmatmul.mubr.f32.gmra.mrb[0].mxu0 %v1744
  %v1818 = vpop.f32.mrb[0].mxu0
  %v1819 = vadd.f32 0.0, %v1818
  %v1820 = vpop.f32.mrb[0].mxu0
  %1821 = vmatprep.mubr.f32.mxu0 0.0
  %1822 = vmatmul.mubr.f32.gmra.mrb[0].mxu0 %v1746
  %v1823 = vpop.f32.mrb[0].mxu0
  %v1824 = vadd.f32 0.0, %v1823
  %v1825 = vpop.f32.mrb[0].mxu0
  %1826 = vdwg.mxu0
  %v1827 = vmul.f32 %v1819, 0.35355338
  %v1828 = vmul.f32 %v1824, 0.35355338
  %v1829 = vsel %vm385, %v1827, -inf
  %1830 = vmax.xlane.f32.xlu0 %v1829
  %v1831 = vpop.xlane.xlu0 %1830
  %v1832 = vsel %vm385, %v1828, -inf
  %1833 = vmax.xlane.f32.xlu0 %v1832
  %v1834 = vpop.xlane.xlu0 %1833
  %v1835 = vsub.f32 %v1827, %v1831
  %v1836 = vsub.f32 %v1828, %v1834
  %v1837 = vmul.f32 %v1835, 1.442695
  %v1838 = vpow.pop %v1837
  %v1839 = vmul.f32 %v1836, 1.442695
  %v1840 = vpow.pop %v1839
  %v1841 = vsel %vm385, %v1838, 0.0
  %1842 = vadd.xlane.f32.xlu0 %v1841
  %v1843 = vpop.xlane.xlu0 %1842
  %v1844 = vsel %vm385, %v1840, 0.0
  %1845 = vadd.xlane.f32.xlu0 %v1844
  %v1846 = vpop.xlane.xlu0 %1845
  %v1847 = vrcp.pop %v1843
  %v1848 = vrcp.pop %v1846
  %v1849 = vmul.f32 %v1838, %v1847
  %v1850 = vmul.f32 %v1840, %v1848
  %1851 = vrot.lane.b32.xlu0 %v285, 40
  %v1852 = vpop.permute.xlu0 %1851
  %1853 = vrot.lane.b32.xlu0 %v290, 40
  %v1854 = vpop.permute.xlu0 %1853
  %v1858 = vsel %vm385, %v1849, 0
  %v1861 = vsel %vm385, %v1850, 0
  %1863 = vmatprep.subr.mxu0 0.0
  %1864 = vmatpush1.msra.mxu0 %v1852
  %1865 = vmatprep.subr.mxu0 0.0
  %1866 = vmatpush1.msra.mxu0 %v1854
  %1867 = vmatprep.subr.mxu0 0.0
  %1868 = vmatpush1.msra.mxu0 0.0
  %1869 = vmatprep.subr.mxu0 0.0
  %1870 = vmatpush1.msra.mxu0 0.0
  %1871 = vmatprep.subr.mxu0 0.0
  %1872 = vmatpush1.msra.mxu0 0.0
  %1873 = vmatprep.subr.mxu0 0.0
  %1874 = vmatpush1.msra.mxu0 0.0
  %1875 = vmatprep.subr.mxu0 0.0
  %1876 = vmatpush1.msra.mxu0 0.0
  %1877 = vmatprep.subr.mxu0 0.0
  %1878 = vmatpush1.msra.mxu0 0.0
  %1879 = vmatprep.subr.mxu0 0.0
  %1880 = vmatpush1.msra.mxu0 0.0
  %1881 = vmatprep.subr.mxu0 0.0
  %1882 = vmatpush1.msra.mxu0 0.0
  %1883 = vmatprep.subr.mxu0 0.0
  %1884 = vmatpush1.msra.mxu0 0.0
  %1885 = vmatprep.subr.mxu0 0.0
  %1886 = vmatpush1.msra.mxu0 0.0
  %1887 = vmatprep.subr.mxu0 0.0
  %1888 = vmatpush1.msra.mxu0 0.0
  %1889 = vmatprep.subr.mxu0 0.0
  %1890 = vmatpush1.msra.mxu0 0.0
  %1891 = vmatprep.subr.mxu0 0.0
  %1892 = vmatpush1.msra.mxu0 0.0
  %1893 = vmatprep.subr.mxu0 0.0
  %1894 = vmatpush1.msra.mxu0 0.0
  %1895 = vmatprep.subr.mxu0 0.0
  %1896 = vmatpush1.msra.mxu0 0.0
  %1897 = vmatprep.subr.mxu0 0.0
  %1898 = vmatpush1.msra.mxu0 0.0
  %1899 = vmatprep.subr.mxu0 0.0
  %1900 = vmatpush1.msra.mxu0 0.0
  %1901 = vmatprep.subr.mxu0 0.0
  %1902 = vmatpush1.msra.mxu0 0.0
  %1903 = vmatprep.subr.mxu0 0.0
  %1904 = vmatpush1.msra.mxu0 0.0
  %1905 = vmatprep.subr.mxu0 0.0
  %1906 = vmatpush1.msra.mxu0 0.0
  %1907 = vmatprep.subr.mxu0 0.0
  %1908 = vmatpush1.msra.mxu0 0.0
  %1909 = vmatprep.subr.mxu0 0.0
  %1910 = vmatpush1.msra.mxu0 0.0
  %1911 = vmatprep.subr.mxu0 0.0
  %1912 = vmatpush1.msra.mxu0 0.0
  %1913 = vmatprep.subr.mxu0 0.0
  %1914 = vmatpush1.msra.mxu0 0.0
  %1915 = vmatprep.subr.mxu0 0.0
  %1916 = vmatpush1.msra.mxu0 0.0
  %1917 = vmatprep.subr.mxu0 0.0
  %1918 = vmatpush1.msra.mxu0 0.0
  %1919 = vmatprep.subr.mxu0 0.0
  %1920 = vmatpush1.msra.mxu0 0.0
  %1921 = vmatprep.subr.mxu0 0.0
  %1922 = vmatpush1.msra.mxu0 0.0
  %1923 = vmatprep.subr.mxu0 0.0
  %1924 = vmatpush1.msra.mxu0 0.0
  %1925 = vmatprep.subr.mxu0 0.0
  %1926 = vmatpush1.msra.mxu0 0.0
  %1927 = vmatprep.mubr.f32.mxu0 0.0
  %1928 = vmatmul.mubr.f32.gmra.mrb[0].mxu0 %v1858
  %v1929 = vpop.f32.mrb[0].mxu0
  %v1930 = vadd.f32 0.0, %v1929
  %v1931 = vpop.f32.mrb[0].mxu0
  %1932 = vmatprep.mubr.f32.mxu0 0.0
  %1933 = vmatmul.mubr.f32.gmra.mrb[0].mxu0 %v1861
  %v1934 = vpop.f32.mrb[0].mxu0
  %v1935 = vadd.f32 0.0, %v1934
  %v1936 = vpop.f32.mrb[0].mxu0
  %1937 = vdwg.mxu0
  %1940 = vrot.lane.b32.xlu0 %v1526, 8
  %v1941 = vpop.permute.xlu0 %1940
  %1942 = vrot.lane.b32.xlu0 %v1531, 8
  %v1943 = vpop.permute.xlu0 %1942
  %1948 = vrot.lane.b32.xlu0 %v1728, 16
  %v1949 = vpop.permute.xlu0 %1948
  %1950 = vrot.lane.b32.xlu0 %v1733, 16
  %v1951 = vpop.permute.xlu0 %1950
  %1956 = vrot.lane.b32.xlu0 %v1930, 24
  %v1957 = vpop.permute.xlu0 %1956
  %1958 = vrot.lane.b32.xlu0 %v1935, 24
  %v1959 = vpop.permute.xlu0 %1958
  %v1962 = vsel %vm299, %v1324, %v1941
  %v1963 = vsel %vm299, %v1329, %v1943
  %v1964 = vsel %vm385, %v1962, %v1949
  %v1965 = vsel %vm385, %v1963, %v1951
  %v1966 = vsel %vm1129, %v1964, %v1957
  %v1967 = vsel %vm1129, %v1965, %v1959
  %v1968 = vld [vmem:[%s6] sm:$0xff]
  %v1969 = vld [vmem:[%s6 + $0x8] sm:$0xff]
  %v1970 = vld [vmem:[%s6 + $0x10] sm:$0xff]
  %v1971 = vld [vmem:[%s6 + $0x18] sm:$0xff]
  %v1972 = vld [vmem:[%s7] sm:$0x1]
  %v1974 = vlaneseq
  %v1975 = vshrl.u32 %v1974, 7
  %v1976 = vsub.s32 0, %v1975
  %v1977 = vrot.slane %v1972, %v1976
  %v1980 = vsel %vm195, %v1130, 0
  %v1983 = vsel %vm195, %v1131, 0
  %v1986 = vsel %vm195, %v1966, 0
  %v1989 = vsel %vm195, %v1967, 0
  %1991 = vmatprep.subr.mxu0 0.0
  %1992 = vmatpush1.msra.mxu0 %v1968
  %1993 = vmatprep.subr.mxu0 0.0
  %1994 = vmatpush1.msra.mxu0 %v1969
  %1995 = vmatprep.subr.mxu0 0.0
  %1996 = vmatpush1.msra.mxu0 %v1970
  %1997 = vmatprep.subr.mxu0 0.0
  %1998 = vmatpush1.msra.mxu0 %v1971
  %1999 = vmatprep.subr.mxu0 0.0
  %2000 = vmatpush1.msra.mxu0 0.0
  %2001 = vmatprep.subr.mxu0 0.0
  %2002 = vmatpush1.msra.mxu0 0.0
  %2003 = vmatprep.subr.mxu0 0.0
  %2004 = vmatpush1.msra.mxu0 0.0
  %2005 = vmatprep.subr.mxu0 0.0
  %2006 = vmatpush1.msra.mxu0 0.0
  %2007 = vmatprep.subr.mxu0 0.0
  %2008 = vmatpush1.msra.mxu0 0.0
  %2009 = vmatprep.subr.mxu0 0.0
  %2010 = vmatpush1.msra.mxu0 0.0
  %2011 = vmatprep.subr.mxu0 0.0
  %2012 = vmatpush1.msra.mxu0 0.0
  %2013 = vmatprep.subr.mxu0 0.0
  %2014 = vmatpush1.msra.mxu0 0.0
  %2015 = vmatprep.subr.mxu0 0.0
  %2016 = vmatpush1.msra.mxu0 0.0
  %2017 = vmatprep.subr.mxu0 0.0
  %2018 = vmatpush1.msra.mxu0 0.0
  %2019 = vmatprep.subr.mxu0 0.0
  %2020 = vmatpush1.msra.mxu0 0.0
  %2021 = vmatprep.subr.mxu0 0.0
  %2022 = vmatpush1.msra.mxu0 0.0
  %2023 = vmatprep.subr.mxu0 0.0
  %2024 = vmatpush1.msra.mxu0 0.0
  %2025 = vmatprep.subr.mxu0 0.0
  %2026 = vmatpush1.msra.mxu0 0.0
  %2027 = vmatprep.subr.mxu0 0.0
  %2028 = vmatpush1.msra.mxu0 0.0
  %2029 = vmatprep.subr.mxu0 0.0
  %2030 = vmatpush1.msra.mxu0 0.0
  %2031 = vmatprep.subr.mxu0 0.0
  %2032 = vmatpush1.msra.mxu0 0.0
  %2033 = vmatprep.subr.mxu0 0.0
  %2034 = vmatpush1.msra.mxu0 0.0
  %2035 = vmatprep.subr.mxu0 0.0
  %2036 = vmatpush1.msra.mxu0 0.0
  %2037 = vmatprep.subr.mxu0 0.0
  %2038 = vmatpush1.msra.mxu0 0.0
  %2039 = vmatprep.subr.mxu0 0.0
  %2040 = vmatpush1.msra.mxu0 0.0
  %2041 = vmatprep.subr.mxu0 0.0
  %2042 = vmatpush1.msra.mxu0 0.0
  %2043 = vmatprep.subr.mxu0 0.0
  %2044 = vmatpush1.msra.mxu0 0.0
  %2045 = vmatprep.subr.mxu0 0.0
  %2046 = vmatpush1.msra.mxu0 0.0
  %2047 = vmatprep.subr.mxu0 0.0
  %2048 = vmatpush1.msra.mxu0 0.0
  %2049 = vmatprep.subr.mxu0 0.0
  %2050 = vmatpush1.msra.mxu0 0.0
  %2051 = vmatprep.subr.mxu0 0.0
  %2052 = vmatpush1.msra.mxu0 0.0
  %2053 = vmatprep.subr.mxu0 0.0
  %2054 = vmatpush1.msra.mxu0 0.0
  %2055 = vmatprep.mubr.f32.mxu0 0.0
  %2056 = vmatmul.mubr.f32.gmra.mrb[0].mxu0 %v1980
  %v2057 = vpop.f32.mrb[0].mxu0
  %v2058 = vadd.f32 %v1977, %v2057
  %v2059 = vpop.f32.mrb[0].mxu0
  %2060 = vmatprep.mubr.f32.mxu0 0.0
  %2061 = vmatmul.mubr.f32.gmra.mrb[0].mxu0 %v1983
  %v2062 = vpop.f32.mrb[0].mxu0
  %v2063 = vadd.f32 %v1977, %v2062
  %v2064 = vpop.f32.mrb[0].mxu0
  %2065 = vmatprep.mubr.f32.mxu0 0.0
  %2066 = vmatmul.mubr.f32.gmra.mrb[0].mxu0 %v1986
  %v2067 = vpop.f32.mrb[0].mxu0
  %v2068 = vadd.f32 %v1977, %v2067
  %v2069 = vpop.f32.mrb[0].mxu0
  %2070 = vmatprep.mubr.f32.mxu0 0.0
  %2071 = vmatmul.mubr.f32.gmra.mrb[0].mxu0 %v1989
  %v2072 = vpop.f32.mrb[0].mxu0
  %v2073 = vadd.f32 %v1977, %v2072
  %v2074 = vpop.f32.mrb[0].mxu0
  %2075 = vdwg.mxu0
  %v2076 = vadd.f32 %v180, %v2058
  %v2077 = vadd.f32 %v181, %v2063
  %v2078 = vadd.f32 %v182, %v2068
  %v2079 = vadd.f32 %v183, %v2073
  %v2080 = vld [vmem:[%s8] sm:$0x1]
  %v2081 = vld [vmem:[%s9] sm:$0x1]
  %v2082 = vsel %vm195, %v2076, 0.0
  %2083 = vadd.xlane.f32.xlu0 %v2082
  %v2084 = vpop.xlane.xlu0 %2083
  %v2085 = vsel %vm195, %v2077, 0.0
  %2086 = vadd.xlane.f32.xlu0 %v2085
  %v2087 = vpop.xlane.xlu0 %2086
  %v2088 = vsel %vm195, %v2078, 0.0
  %2089 = vadd.xlane.f32.xlu0 %v2088
  %v2090 = vpop.xlane.xlu0 %2089
  %v2091 = vsel %vm195, %v2079, 0.0
  %2092 = vadd.xlane.f32.xlu0 %v2091
  %v2093 = vpop.xlane.xlu0 %2092
  %v2094 = vrcp.pop 32.0
  %v2095 = vmul.f32 %v2084, %v2094
  %v2096 = vmul.f32 %v2087, %v2094
  %v2097 = vmul.f32 %v2090, %v2094
  %v2098 = vmul.f32 %v2093, %v2094
  %v2099 = vsub.f32 %v2076, %v2095
  %v2100 = vsub.f32 %v2077, %v2096
  %v2101 = vsub.f32 %v2078, %v2097
  %v2102 = vsub.f32 %v2079, %v2098
  %v2103 = vmul.f32 %v2099, %v2099
  %v2104 = vmul.f32 %v2100, %v2100
  %v2105 = vmul.f32 %v2101, %v2101
  %v2106 = vmul.f32 %v2102, %v2102
  %v2107 = vsel %vm195, %v2103, 0.0
  %2108 = vadd.xlane.f32.xlu0 %v2107
  %v2109 = vpop.xlane.xlu0 %2108
  %v2110 = vsel %vm195, %v2104, 0.0
  %2111 = vadd.xlane.f32.xlu0 %v2110
  %v2112 = vpop.xlane.xlu0 %2111
  %v2113 = vsel %vm195, %v2105, 0.0
  %2114 = vadd.xlane.f32.xlu0 %v2113
  %v2115 = vpop.xlane.xlu0 %2114
  %v2116 = vsel %vm195, %v2106, 0.0
  %2117 = vadd.xlane.f32.xlu0 %v2116
  %v2118 = vpop.xlane.xlu0 %2117
  %v2119 = vmul.f32 %v2109, %v2094
  %v2120 = vmul.f32 %v2112, %v2094
  %v2121 = vmul.f32 %v2115, %v2094
  %v2122 = vmul.f32 %v2118, %v2094
  %v2123 = vadd.f32 %v2119, 1e-05
  %v2124 = vadd.f32 %v2120, 1e-05
  %v2125 = vadd.f32 %v2121, 1e-05
  %v2126 = vadd.f32 %v2122, 1e-05
  %v2127 = vrsqrt.pop %v2123
  %v2128 = vrsqrt.pop %v2124
  %v2129 = vrsqrt.pop %v2125
  %v2130 = vrsqrt.pop %v2126
  %v2131 = vmul.f32 %v2099, %v2127
  %v2132 = vmul.f32 %v2100, %v2128
  %v2133 = vmul.f32 %v2101, %v2129
  %v2134 = vmul.f32 %v2102, %v2130
  %v2136 = vlaneseq
  %v2137 = vshrl.u32 %v2136, 7
  %v2138 = vsub.s32 0, %v2137
  %v2139 = vrot.slane %v2080, %v2138
  %v2141 = vmul.f32 %v2131, %v2139
  %v2142 = vmul.f32 %v2132, %v2139
  %v2143 = vmul.f32 %v2133, %v2139
  %v2144 = vmul.f32 %v2134, %v2139
  %v2146 = vlaneseq
  %v2147 = vshrl.u32 %v2146, 7
  %v2148 = vsub.s32 0, %v2147
  %v2149 = vrot.slane %v2081, %v2148
  %v2151 = vadd.f32 %v2141, %v2149
  %v2152 = vadd.f32 %v2142, %v2149
  %v2153 = vadd.f32 %v2143, %v2149
  %v2154 = vadd.f32 %v2144, %v2149
  %v2155 = vld [vmem:[%s10] sm:$0xff]
  %v2156 = vld [vmem:[%s10 + $0x8] sm:$0xff]
  %v2157 = vld [vmem:[%s10 + $0x10] sm:$0xff]
  %v2158 = vld [vmem:[%s10 + $0x18] sm:$0xff]
  %v2159 = vld [vmem:[%s11] sm:$0x1]
  %v2161 = vlaneseq
  %v2162 = vshrl.u32 %v2161, 7
  %v2163 = vsub.s32 0, %v2162
  %v2164 = vrot.slane %v2159, %v2163
  %v2167 = vsel %vm195, %v2151, 0
  %v2170 = vsel %vm195, %v2152, 0
  %v2173 = vsel %vm195, %v2153, 0
  %v2176 = vsel %vm195, %v2154, 0
  %2178 = vmatprep.subr.mxu0 0.0
  %2179 = vmatpush1.msra.mxu0 %v2155
  %2180 = vmatprep.subr.mxu0 0.0
  %2181 = vmatpush1.msra.mxu0 %v2156
  %2182 = vmatprep.subr.mxu0 0.0
  %2183 = vmatpush1.msra.mxu0 %v2157
  %2184 = vmatprep.subr.mxu0 0.0
  %2185 = vmatpush1.msra.mxu0 %v2158
  %2186 = vmatprep.subr.mxu0 0.0
  %2187 = vmatpush1.msra.mxu0 0.0
  %2188 = vmatprep.subr.mxu0 0.0
  %2189 = vmatpush1.msra.mxu0 0.0
  %2190 = vmatprep.subr.mxu0 0.0
  %2191 = vmatpush1.msra.mxu0 0.0
  %2192 = vmatprep.subr.mxu0 0.0
  %2193 = vmatpush1.msra.mxu0 0.0
  %2194 = vmatprep.subr.mxu0 0.0
  %2195 = vmatpush1.msra.mxu0 0.0
  %2196 = vmatprep.subr.mxu0 0.0
  %2197 = vmatpush1.msra.mxu0 0.0
  %2198 = vmatprep.subr.mxu0 0.0
  %2199 = vmatpush1.msra.mxu0 0.0
  %2200 = vmatprep.subr.mxu0 0.0
  %2201 = vmatpush1.msra.mxu0 0.0
  %2202 = vmatprep.subr.mxu0 0.0
  %2203 = vmatpush1.msra.mxu0 0.0
  %2204 = vmatprep.subr.mxu0 0.0
  %2205 = vmatpush1.msra.mxu0 0.0
  %2206 = vmatprep.subr.mxu0 0.0
  %2207 = vmatpush1.msra.mxu0 0.0
  %2208 = vmatprep.subr.mxu0 0.0
  %2209 = vmatpush1.msra.mxu0 0.0
  %2210 = vmatprep.subr.mxu0 0.0
  %2211 = vmatpush1.msra.mxu0 0.0
  %2212 = vmatprep.subr.mxu0 0.0
  %2213 = vmatpush1.msra.mxu0 0.0
  %2214 = vmatprep.subr.mxu0 0.0
  %2215 = vmatpush1.msra.mxu0 0.0
  %2216 = vmatprep.subr.mxu0 0.0
  %2217 = vmatpush1.msra.mxu0 0.0
  %2218 = vmatprep.subr.mxu0 0.0
  %2219 = vmatpush1.msra.mxu0 0.0
  %2220 = vmatprep.subr.mxu0 0.0
  %2221 = vmatpush1.msra.mxu0 0.0
  %2222 = vmatprep.subr.mxu0 0.0
  %2223 = vmatpush1.msra.mxu0 0.0
  %2224 = vmatprep.subr.mxu0 0.0
  %2225 = vmatpush1.msra.mxu0 0.0
  %2226 = vmatprep.subr.mxu0 0.0
  %2227 = vmatpush1.msra.mxu0 0.0
  %2228 = vmatprep.subr.mxu0 0.0
  %2229 = vmatpush1.msra.mxu0 0.0
  %2230 = vmatprep.subr.mxu0 0.0
  %2231 = vmatpush1.msra.mxu0 0.0
  %2232 = vmatprep.subr.mxu0 0.0
  %2233 = vmatpush1.msra.mxu0 0.0
  %2234 = vmatprep.subr.mxu0 0.0
  %2235 = vmatpush1.msra.mxu0 0.0
  %2236 = vmatprep.subr.mxu0 0.0
  %2237 = vmatpush1.msra.mxu0 0.0
  %2238 = vmatprep.subr.mxu0 0.0
  %2239 = vmatpush1.msra.mxu0 0.0
  %2240 = vmatprep.subr.mxu0 0.0
  %2241 = vmatpush1.msra.mxu0 0.0
  %2242 = vmatprep.mubr.f32.mxu0 0.0
  %2243 = vmatmul.mubr.f32.gmra.mrb[0].mxu0 %v2167
  %v2244 = vpop.f32.mrb[0].mxu0
  %v2245 = vadd.f32 %v2164, %v2244
  %v2246 = vpop.f32.mrb[0].mxu0
  %2247 = vmatprep.mubr.f32.mxu0 0.0
  %2248 = vmatmul.mubr.f32.gmra.mrb[0].mxu0 %v2170
  %v2249 = vpop.f32.mrb[0].mxu0
  %v2250 = vadd.f32 %v2164, %v2249
  %v2251 = vpop.f32.mrb[0].mxu0
  %2252 = vmatprep.mubr.f32.mxu0 0.0
  %2253 = vmatmul.mubr.f32.gmra.mrb[0].mxu0 %v2173
  %v2254 = vpop.f32.mrb[0].mxu0
  %v2255 = vadd.f32 %v2164, %v2254
  %v2256 = vpop.f32.mrb[0].mxu0
  %2257 = vmatprep.mubr.f32.mxu0 0.0
  %2258 = vmatmul.mubr.f32.gmra.mrb[0].mxu0 %v2176
  %v2259 = vpop.f32.mrb[0].mxu0
  %v2260 = vadd.f32 %v2164, %v2259
  %v2261 = vpop.f32.mrb[0].mxu0
  %2262 = vdwg.mxu0
  %v2263 = vmax.f32 %v2245, 0.0
  %v2264 = vmax.f32 %v2250, 0.0
  %v2265 = vmax.f32 %v2255, 0.0
  %v2266 = vmax.f32 %v2260, 0.0
  %v2267 = vld [vmem:[%s12] sm:$0xff]
  %v2268 = vld [vmem:[%s12 + $0x8] sm:$0xff]
  %v2269 = vld [vmem:[%s12 + $0x10] sm:$0xff]
  %v2270 = vld [vmem:[%s12 + $0x18] sm:$0xff]
  %v2271 = vld [vmem:[%s12 + $0x20] sm:$0xff]
  %v2272 = vld [vmem:[%s12 + $0x28] sm:$0xff]
  %v2273 = vld [vmem:[%s12 + $0x30] sm:$0xff]
  %v2274 = vld [vmem:[%s12 + $0x38] sm:$0xff]
  %v2275 = vld [vmem:[%s13] sm:$0x1]
  %v2277 = vlaneseq
  %v2278 = vshrl.u32 %v2277, 7
  %v2279 = vsub.s32 0, %v2278
  %v2280 = vrot.slane %v2275, %v2279
  %v2283 = vsel %vm78, %v2263, 0
  %v2286 = vsel %vm78, %v2264, 0
  %v2289 = vsel %vm78, %v2265, 0
  %v2292 = vsel %vm78, %v2266, 0
  %2294 = vmatprep.subr.mxu0 0.0
  %2295 = vmatpush1.msra.mxu0 %v2267
  %2296 = vmatprep.subr.mxu0 0.0
  %2297 = vmatpush1.msra.mxu0 %v2268
  %2298 = vmatprep.subr.mxu0 0.0
  %2299 = vmatpush1.msra.mxu0 %v2269
  %2300 = vmatprep.subr.mxu0 0.0
  %2301 = vmatpush1.msra.mxu0 %v2270
  %2302 = vmatprep.subr.mxu0 0.0
  %2303 = vmatpush1.msra.mxu0 %v2271
  %2304 = vmatprep.subr.mxu0 0.0
  %2305 = vmatpush1.msra.mxu0 %v2272
  %2306 = vmatprep.subr.mxu0 0.0
  %2307 = vmatpush1.msra.mxu0 %v2273
  %2308 = vmatprep.subr.mxu0 0.0
  %2309 = vmatpush1.msra.mxu0 %v2274
  %2310 = vmatprep.subr.mxu0 0.0
  %2311 = vmatpush1.msra.mxu0 0.0
  %2312 = vmatprep.subr.mxu0 0.0
  %2313 = vmatpush1.msra.mxu0 0.0
  %2314 = vmatprep.subr.mxu0 0.0
  %2315 = vmatpush1.msra.mxu0 0.0
  %2316 = vmatprep.subr.mxu0 0.0
  %2317 = vmatpush1.msra.mxu0 0.0
  %2318 = vmatprep.subr.mxu0 0.0
  %2319 = vmatpush1.msra.mxu0 0.0
  %2320 = vmatprep.subr.mxu0 0.0
  %2321 = vmatpush1.msra.mxu0 0.0
  %2322 = vmatprep.subr.mxu0 0.0
  %2323 = vmatpush1.msra.mxu0 0.0
  %2324 = vmatprep.subr.mxu0 0.0
  %2325 = vmatpush1.msra.mxu0 0.0
  %2326 = vmatprep.subr.mxu0 0.0
  %2327 = vmatpush1.msra.mxu0 0.0
  %2328 = vmatprep.subr.mxu0 0.0
  %2329 = vmatpush1.msra.mxu0 0.0
  %2330 = vmatprep.subr.mxu0 0.0
  %2331 = vmatpush1.msra.mxu0 0.0
  %2332 = vmatprep.subr.mxu0 0.0
  %2333 = vmatpush1.msra.mxu0 0.0
  %2334 = vmatprep.subr.mxu0 0.0
  %2335 = vmatpush1.msra.mxu0 0.0
  %2336 = vmatprep.subr.mxu0 0.0
  %2337 = vmatpush1.msra.mxu0 0.0
  %2338 = vmatprep.subr.mxu0 0.0
  %2339 = vmatpush1.msra.mxu0 0.0
  %2340 = vmatprep.subr.mxu0 0.0
  %2341 = vmatpush1.msra.mxu0 0.0
  %2342 = vmatprep.subr.mxu0 0.0
  %2343 = vmatpush1.msra.mxu0 0.0
  %2344 = vmatprep.subr.mxu0 0.0
  %2345 = vmatpush1.msra.mxu0 0.0
  %2346 = vmatprep.subr.mxu0 0.0
  %2347 = vmatpush1.msra.mxu0 0.0
  %2348 = vmatprep.subr.mxu0 0.0
  %2349 = vmatpush1.msra.mxu0 0.0
  %2350 = vmatprep.subr.mxu0 0.0
  %2351 = vmatpush1.msra.mxu0 0.0
  %2352 = vmatprep.subr.mxu0 0.0
  %2353 = vmatpush1.msra.mxu0 0.0
  %2354 = vmatprep.subr.mxu0 0.0
  %2355 = vmatpush1.msra.mxu0 0.0
  %2356 = vmatprep.subr.mxu0 0.0
  %2357 = vmatpush1.msra.mxu0 0.0
  %2358 = vmatprep.mubr.f32.mxu0 0.0
  %2359 = vmatmul.mubr.f32.gmra.mrb[0].mxu0 %v2283
  %v2360 = vpop.f32.mrb[0].mxu0
  %v2361 = vadd.f32 %v2280, %v2360
  %v2362 = vpop.f32.mrb[0].mxu0
  %2363 = vmatprep.mubr.f32.mxu0 0.0
  %2364 = vmatmul.mubr.f32.gmra.mrb[0].mxu0 %v2286
  %v2365 = vpop.f32.mrb[0].mxu0
  %v2366 = vadd.f32 %v2280, %v2365
  %v2367 = vpop.f32.mrb[0].mxu0
  %2368 = vmatprep.mubr.f32.mxu0 0.0
  %2369 = vmatmul.mubr.f32.gmra.mrb[0].mxu0 %v2289
  %v2370 = vpop.f32.mrb[0].mxu0
  %v2371 = vadd.f32 %v2280, %v2370
  %v2372 = vpop.f32.mrb[0].mxu0
  %2373 = vmatprep.mubr.f32.mxu0 0.0
  %2374 = vmatmul.mubr.f32.gmra.mrb[0].mxu0 %v2292
  %v2375 = vpop.f32.mrb[0].mxu0
  %v2376 = vadd.f32 %v2280, %v2375
  %v2377 = vpop.f32.mrb[0].mxu0
  %2378 = vdwg.mxu0
  %v2379 = vadd.f32 %v2151, %v2361
  %v2380 = vadd.f32 %v2152, %v2366
  %v2381 = vadd.f32 %v2153, %v2371
  %v2382 = vadd.f32 %v2154, %v2376
  %v2383 = vld [vmem:[%s14] sm:$0x1]
  %v2384 = vld [vmem:[%s15] sm:$0x1]
  %v2385 = vsel %vm195, %v2379, 0.0
  %2386 = vadd.xlane.f32.xlu0 %v2385
  %v2387 = vpop.xlane.xlu0 %2386
  %v2388 = vsel %vm195, %v2380, 0.0
  %2389 = vadd.xlane.f32.xlu0 %v2388
  %v2390 = vpop.xlane.xlu0 %2389
  %v2391 = vsel %vm195, %v2381, 0.0
  %2392 = vadd.xlane.f32.xlu0 %v2391
  %v2393 = vpop.xlane.xlu0 %2392
  %v2394 = vsel %vm195, %v2382, 0.0
  %2395 = vadd.xlane.f32.xlu0 %v2394
  %v2396 = vpop.xlane.xlu0 %2395
  %v2397 = vmul.f32 %v2387, %v2094
  %v2398 = vmul.f32 %v2390, %v2094
  %v2399 = vmul.f32 %v2393, %v2094
  %v2400 = vmul.f32 %v2396, %v2094
  %v2401 = vsub.f32 %v2379, %v2397
  %v2402 = vsub.f32 %v2380, %v2398
  %v2403 = vsub.f32 %v2381, %v2399
  %v2404 = vsub.f32 %v2382, %v2400
  %v2405 = vmul.f32 %v2401, %v2401
  %v2406 = vmul.f32 %v2402, %v2402
  %v2407 = vmul.f32 %v2403, %v2403
  %v2408 = vmul.f32 %v2404, %v2404
  %v2409 = vsel %vm195, %v2405, 0.0
  %2410 = vadd.xlane.f32.xlu0 %v2409
  %v2411 = vpop.xlane.xlu0 %2410
  %v2412 = vsel %vm195, %v2406, 0.0
  %2413 = vadd.xlane.f32.xlu0 %v2412
  %v2414 = vpop.xlane.xlu0 %2413
  %v2415 = vsel %vm195, %v2407, 0.0
  %2416 = vadd.xlane.f32.xlu0 %v2415
  %v2417 = vpop.xlane.xlu0 %2416
  %v2418 = vsel %vm195, %v2408, 0.0
  %2419 = vadd.xlane.f32.xlu0 %v2418
  %v2420 = vpop.xlane.xlu0 %2419
  %v2421 = vmul.f32 %v2411, %v2094
  %v2422 = vmul.f32 %v2414, %v2094
  %v2423 = vmul.f32 %v2417, %v2094
  %v2424 = vmul.f32 %v2420, %v2094
  %v2425 = vadd.f32 %v2421, 1e-05
  %v2426 = vadd.f32 %v2422, 1e-05
  %v2427 = vadd.f32 %v2423, 1e-05
  %v2428 = vadd.f32 %v2424, 1e-05
  %v2429 = vrsqrt.pop %v2425
  %v2430 = vrsqrt.pop %v2426
  %v2431 = vrsqrt.pop %v2427
  %v2432 = vrsqrt.pop %v2428
  %v2433 = vmul.f32 %v2401, %v2429
  %v2434 = vmul.f32 %v2402, %v2430
  %v2435 = vmul.f32 %v2403, %v2431
  %v2436 = vmul.f32 %v2404, %v2432
  %v2438 = vlaneseq
  %v2439 = vshrl.u32 %v2438, 7
  %v2440 = vsub.s32 0, %v2439
  %v2441 = vrot.slane %v2383, %v2440
  %v2443 = vmul.f32 %v2433, %v2441
  %v2444 = vmul.f32 %v2434, %v2441
  %v2445 = vmul.f32 %v2435, %v2441
  %v2446 = vmul.f32 %v2436, %v2441
  %v2448 = vlaneseq
  %v2449 = vshrl.u32 %v2448, 7
  %v2450 = vsub.s32 0, %v2449
  %v2451 = vrot.slane %v2384, %v2450
  %v2453 = vadd.f32 %v2443, %v2451
  %v2454 = vadd.f32 %v2444, %v2451
  %v2455 = vadd.f32 %v2445, %v2451
  %v2456 = vadd.f32 %v2446, %v2451
  %v2457 = vld [vmem:[%s16] sm:$0x1]
  %v2458 = vld [vmem:[%s17] sm:$0x1]
  %v2459 = vsel %vm195, %v2453, 0.0
  %2460 = vadd.xlane.f32.xlu0 %v2459
  %v2461 = vpop.xlane.xlu0 %2460
  %v2462 = vsel %vm195, %v2454, 0.0
  %2463 = vadd.xlane.f32.xlu0 %v2462
  %v2464 = vpop.xlane.xlu0 %2463
  %v2465 = vsel %vm195, %v2455, 0.0
  %2466 = vadd.xlane.f32.xlu0 %v2465
  %v2467 = vpop.xlane.xlu0 %2466
  %v2468 = vsel %vm195, %v2456, 0.0
  %2469 = vadd.xlane.f32.xlu0 %v2468
  %v2470 = vpop.xlane.xlu0 %2469
  %v2471 = vmul.f32 %v2461, %v2094
  %v2472 = vmul.f32 %v2464, %v2094
  %v2473 = vmul.f32 %v2467, %v2094
  %v2474 = vmul.f32 %v2470, %v2094
  %v2475 = vsub.f32 %v2453, %v2471
  %v2476 = vsub.f32 %v2454, %v2472
  %v2477 = vsub.f32 %v2455, %v2473
  %v2478 = vsub.f32 %v2456, %v2474
  %v2479 = vmul.f32 %v2475, %v2475
  %v2480 = vmul.f32 %v2476, %v2476
  %v2481 = vmul.f32 %v2477, %v2477
  %v2482 = vmul.f32 %v2478, %v2478
  %v2483 = vsel %vm195, %v2479, 0.0
  %2484 = vadd.xlane.f32.xlu0 %v2483
  %v2485 = vpop.xlane.xlu0 %2484
  %v2486 = vsel %vm195, %v2480, 0.0
  %2487 = vadd.xlane.f32.xlu0 %v2486
  %v2488 = vpop.xlane.xlu0 %2487
  %v2489 = vsel %vm195, %v2481, 0.0
  %2490 = vadd.xlane.f32.xlu0 %v2489
  %v2491 = vpop.xlane.xlu0 %2490
  %v2492 = vsel %vm195, %v2482, 0.0
  %2493 = vadd.xlane.f32.xlu0 %v2492
  %v2494 = vpop.xlane.xlu0 %2493
  %v2495 = vmul.f32 %v2485, %v2094
  %v2496 = vmul.f32 %v2488, %v2094
  %v2497 = vmul.f32 %v2491, %v2094
  %v2498 = vmul.f32 %v2494, %v2094
  %v2499 = vadd.f32 %v2495, 1e-05
  %v2500 = vadd.f32 %v2496, 1e-05
  %v2501 = vadd.f32 %v2497, 1e-05
  %v2502 = vadd.f32 %v2498, 1e-05
  %v2503 = vrsqrt.pop %v2499
  %v2504 = vrsqrt.pop %v2500
  %v2505 = vrsqrt.pop %v2501
  %v2506 = vrsqrt.pop %v2502
  %v2507 = vmul.f32 %v2475, %v2503
  %v2508 = vmul.f32 %v2476, %v2504
  %v2509 = vmul.f32 %v2477, %v2505
  %v2510 = vmul.f32 %v2478, %v2506
  %v2512 = vlaneseq
  %v2513 = vshrl.u32 %v2512, 7
  %v2514 = vsub.s32 0, %v2513
  %v2515 = vrot.slane %v2457, %v2514
  %v2517 = vmul.f32 %v2507, %v2515
  %v2518 = vmul.f32 %v2508, %v2515
  %v2519 = vmul.f32 %v2509, %v2515
  %v2520 = vmul.f32 %v2510, %v2515
  %v2522 = vlaneseq
  %v2523 = vshrl.u32 %v2522, 7
  %v2524 = vsub.s32 0, %v2523
  %v2525 = vrot.slane %v2458, %v2524
  %v2527 = vadd.f32 %v2517, %v2525
  %v2528 = vadd.f32 %v2518, %v2525
  %v2529 = vadd.f32 %v2519, %v2525
  %v2530 = vadd.f32 %v2520, %v2525
  %2531 = vst.msk [vmem:[%s18] sm:$0xff] %vm195, %v2527
  %2532 = vst.msk [vmem:[%s18 + $0x8] sm:$0xff] %vm195, %v2528
  %2533 = vst.msk [vmem:[%s18 + $0x10] sm:$0xff] %vm195, %v2529
  %2534 = vst.msk [vmem:[%s18 + $0x18] sm:$0xff] %vm195, %v2530
  // Predicated region
  $region74: #{encoder_decoder_forward.2} parent=0 // pred_check
    _
  $region75: #{encoder_decoder_forward.2} parent=0 // pred_check_branch
    %2536 = sbr.rel (0) target = $region77
  $region76: #{encoder_decoder_forward.2} parent=0 // pred_region
    _
  $region77: #{encoder_decoder_forward.2} parent=0 // pred_fallthru
    _
  // Predicated region
  $region78: #{encoder_decoder_forward.2} parent=0 // pred_check
    _
  $region79: #{encoder_decoder_forward.2} parent=0 // pred_check_branch
    %2538 = sbr.rel (0) target = $region81
  $region80: #{encoder_decoder_forward.2} parent=0 // pred_region
    _
  $region81: #{encoder_decoder_forward.2} parent=0 // pred_fallthru
    _

</llo_original>
